<compile_context>
chip_gen: v7x
topology: tpu7x:2x2x1
jax: 0.10.0
libtpu: 0.0.40
codegen_flags: <defaults>
</compile_context>

<pallas_src>
import jax
import jax.numpy as jnp
from jax.experimental import pallas as pl
from jax.experimental.pallas import tpu as pltpu

# ---- small, BERT-shaped config ---------------------------------------------
HIDDEN = 128           # hidden_size
NUM_HEADS = 2          # num_attention_heads
HEAD_DIM = HIDDEN // NUM_HEADS
INTERMEDIATE = 256     # intermediate_size
NUM_LAYERS = 2         # num_hidden_layers
VOCAB = 100            # vocab_size
MAX_POS = 128          # max_position_embeddings
TYPE_VOCAB = 2         # type_vocab_size
NUM_LABELS = 2         # config.num_labels
LN_EPS = 1e-12         # BERT layer_norm_eps

B_BLOCK = 1            # batch rows per grid step ("parallel" axis -> v7x 2nd TC)


def _round_up(x, m):
    return ((x + m - 1) // m) * m


VOCAB_PAD = _round_up(VOCAB, 128)
POS_PAD = _round_up(MAX_POS, 128)
TYPE_PAD = _round_up(TYPE_VOCAB, 128)
EMB_ROWS = VOCAB_PAD + POS_PAD + TYPE_PAD      # 384
OFF_POS = VOCAB_PAD
OFF_TYPE = VOCAB_PAD + POS_PAD
LOGIT_PAD = _round_up(NUM_LABELS, 128)         # lane-dense logits output


# ---- in-kernel helpers -------------------------------------------------------
def _layer_norm(x, gamma, beta):
    # f32 statistics (v5e has no bf16 VPU/EUP path)
    mu = jnp.mean(x, axis=-1, keepdims=True)
    var = jnp.mean((x - mu) ** 2, axis=-1, keepdims=True)
    return (x - mu) * jax.lax.rsqrt(var + LN_EPS) * gamma + beta


# ---- fused forward kernel ----------------------------------------------------
def fused_bert_kernel(
        widx_ref, pidx_ref, tidx_ref, maskb_ref,
        emb_ref, eg_ref, eb_ref,
        wqkv_ref, bqkv_ref, wao_ref, bao_ref, g1_ref, b1_ref,
        wi_ref, bi_ref, wo_ref, bo_ref, g2_ref, b2_ref,
        wp_ref, bp_ref, wc_ref, bc_ref,
        logits_ref,
        h_scr):
    BS, H = h_scr.shape
    Bb = maskb_ref.shape[1]                       # batch rows in this block
    S = maskb_ref.shape[2]
    layer = pl.program_id(1)
    last = pl.num_programs(1) - 1

    # ---- layer step 0 (per batch block): fused multi-hot embedding + LN ------
    @pl.when(layer == 0)
    def _():
        rows = emb_ref.shape[0]
        iota = jax.lax.broadcasted_iota(jnp.int32, (BS, rows), 1)
        # word / pos / type ids arrive pre-offset into disjoint row ranges of
        # the concatenated table -> one K=rows matmul instead of three.
        mh = ((iota == widx_ref[0]).astype(jnp.float32)
              + (iota == pidx_ref[0]).astype(jnp.float32)
              + (iota == tidx_ref[0]).astype(jnp.float32))
        # TODO(synk): at real vocab sizes replace the one-hot matmul with a
        # scalar-prefetched DMA row gather (PrefetchScalarGridSpec / pl.Element).
        emb = jnp.dot(mh.astype(jnp.bfloat16), emb_ref[...],
                      preferred_element_type=jnp.float32)
        h_scr[...] = _layer_norm(emb, eg_ref[...], eb_ref[...])

    # ---- encoder layer `layer` ------------------------------------------------
    x2d = h_scr[...]                              # (BS, H) f32 residual
    x_bf = x2d.astype(jnp.bfloat16)

    # fused QKV projection; softmax scale already folded into wq/bq at pack time
    qkv = jnp.dot(x_bf, wqkv_ref[0],
                  preferred_element_type=jnp.float32) + bqkv_ref[0]
    q3 = qkv[:, 0:H].reshape(Bb, S, H)            # 128-lane-aligned slices
    k3 = qkv[:, H:2 * H].reshape(Bb, S, H)
    v3 = qkv[:, 2 * H:3 * H].reshape(Bb, S, H)

    # Fold heads into the einsum batch axis using lane masks (no 64-lane vreg
    # slicing, full K=128 contractions).  Masked q zeroes cross-head terms in
    # the score contraction; masked v makes per-head contexts land lane-placed
    # so a single K=128 output projection suffices.
    lane = jax.lax.broadcasted_iota(jnp.int32, (1, 1, H), 2)
    mask_bias = maskb_ref[0]                      # (Bb, S) additive key bias
    q_parts, k_parts, v_parts, b_parts = [], [], [], []
    for h in range(NUM_HEADS):
        hm = ((lane >= h * HEAD_DIM) &
              (lane < (h + 1) * HEAD_DIM)).astype(jnp.float32)
        q_parts.append(q3 * hm)
        k_parts.append(k3)
        v_parts.append(v3 * hm)
        b_parts.append(mask_bias)
    qh = jnp.concatenate(q_parts, axis=0).astype(jnp.bfloat16)   # (NH*Bb, S, H)
    kh = jnp.concatenate(k_parts, axis=0).astype(jnp.bfloat16)
    vh = jnp.concatenate(v_parts, axis=0).astype(jnp.bfloat16)
    bias = jnp.concatenate(b_parts, axis=0)[:, None, :]          # (NH*Bb, 1, S)

    scores = jnp.einsum('bqd,bkd->bqk', qh, kh,
                        preferred_element_type=jnp.float32) + bias
    m = jnp.max(scores, axis=-1, keepdims=True)
    e = jnp.exp(scores - m)
    inv = pl.reciprocal(jnp.sum(e, axis=-1, keepdims=True), approx=True)
    p = (e * inv).astype(jnp.bfloat16)
    ctx = jnp.einsum('bqk,bkd->bqd', p, vh,
                     preferred_element_type=jnp.float32)         # head-lane-placed
    ctx_full = ctx[0:Bb]
    for h in range(1, NUM_HEADS):
        ctx_full = ctx_full + ctx[h * Bb:(h + 1) * Bb]           # (Bb, S, H)
    ctx2d = ctx_full.reshape(BS, H).astype(jnp.bfloat16)

    attn_out = jnp.dot(ctx2d, wao_ref[0],
                       preferred_element_type=jnp.float32) + bao_ref[0]
    h1 = _layer_norm(attn_out + x2d, g1_ref[0], b1_ref[0])

    # feed-forward
    inter = jnp.dot(h1.astype(jnp.bfloat16), wi_ref[0],
                    preferred_element_type=jnp.float32) + bi_ref[0]
    # TODO(synk): HF BERT uses exact erf-GELU; tanh-approximate GELU used here.
    inter = jax.nn.gelu(inter, approximate=True)
    ff = jnp.dot(inter.astype(jnp.bfloat16), wo_ref[0],
                 preferred_element_type=jnp.float32) + bo_ref[0]
    h2 = _layer_norm(ff + h1, g2_ref[0], b2_ref[0])
    h_scr[...] = h2

    # ---- last layer step: BertPooler (tanh on [CLS]) + classifier -------------
    @pl.when(layer == last)
    def _():
        cls = h2.reshape(Bb, S, H)[:, 0, :]                      # (Bb, H)
        pooled = jnp.tanh(
            jnp.dot(cls.astype(jnp.bfloat16), wp_ref[...],
                    preferred_element_type=jnp.float32) + bp_ref[...])
        # dropout is identity at inference; classifier (lane-padded to 128):
        logits_ref[0] = jnp.dot(pooled.astype(jnp.bfloat16), wc_ref[...],
                                preferred_element_type=jnp.float32) + bc_ref[...]


# ---- parameter init (deterministic, synthetic) -------------------------------
def init_params(key):
    keys = jax.random.split(key, 8 + NUM_LAYERS)

    def w(k, shape, scale=0.02):
        return (scale * jax.random.normal(k, shape)).astype(jnp.float32)

    params = {
        'word_emb': w(keys[0], (VOCAB, HIDDEN)),
        'pos_emb':  w(keys[1], (MAX_POS, HIDDEN)),
        'type_emb': w(keys[2], (TYPE_VOCAB, HIDDEN)),
        'emb_ln_g': jnp.ones((1, HIDDEN), jnp.float32),
        'emb_ln_b': jnp.zeros((1, HIDDEN), jnp.float32),
        'wp': w(keys[3], (HIDDEN, HIDDEN)),            # pooler dense ([in,out])
        'bp': jnp.zeros((1, HIDDEN), jnp.float32),
        'wc': w(keys[4], (HIDDEN, NUM_LABELS)),        # classifier ([in,out])
        'bc': jnp.zeros((1, NUM_LABELS), jnp.float32),
        'layers': [],
    }
    for li in range(NUM_LAYERS):
        lk = jax.random.split(keys[8 + li], 6)
        params['layers'].append({
            'wq': w(lk[0], (HIDDEN, HIDDEN)), 'bq': jnp.zeros((1, HIDDEN), jnp.float32),
            'wk': w(lk[1], (HIDDEN, HIDDEN)), 'bk': jnp.zeros((1, HIDDEN), jnp.float32),
            'wv': w(lk[2], (HIDDEN, HIDDEN)), 'bv': jnp.zeros((1, HIDDEN), jnp.float32),
            'wao': w(lk[3], (HIDDEN, HIDDEN)), 'bao': jnp.zeros((1, HIDDEN), jnp.float32),
            'ln1_g': jnp.ones((1, HIDDEN), jnp.float32),
            'ln1_b': jnp.zeros((1, HIDDEN), jnp.float32),
            'wi': w(lk[4], (HIDDEN, INTERMEDIATE)),
            'bi': jnp.zeros((1, INTERMEDIATE), jnp.float32),
            'wo': w(lk[5], (INTERMEDIATE, HIDDEN)),
            'bo': jnp.zeros((1, HIDDEN), jnp.float32),
            'ln2_g': jnp.ones((1, HIDDEN), jnp.float32),
            'ln2_b': jnp.zeros((1, HIDDEN), jnp.float32),
        })
    return params


def _pad_to(x, n, axis=0):
    pad = n - x.shape[axis]
    if pad <= 0:
        return x
    pad_shape = list(x.shape)
    pad_shape[axis] = pad
    return jnp.concatenate([x, jnp.zeros(pad_shape, x.dtype)], axis=axis)


def pack_params(params):
    """Fuse QKV, fold softmax scale into wq/bq, stack per-layer weights on L,
    concatenate+pad embedding tables, pad classifier to 128 lanes, bf16 weights."""
    stk = lambda n: jnp.stack([lp[n] for lp in params['layers']])
    bf = lambda x: x.astype(jnp.bfloat16)
    scale = 1.0 / (HEAD_DIM ** 0.5)                 # exact in bf16 (power of two)

    emb = jnp.concatenate([_pad_to(params['word_emb'], VOCAB_PAD),
                           _pad_to(params['pos_emb'], POS_PAD),
                           _pad_to(params['type_emb'], TYPE_PAD)], axis=0)
    wqkv = jnp.stack([jnp.concatenate([lp['wq'] * scale, lp['wk'], lp['wv']], axis=1)
                      for lp in params['layers']])              # (L, H, 3H)
    bqkv = jnp.stack([jnp.concatenate([lp['bq'] * scale, lp['bk'], lp['bv']], axis=1)
                      for lp in params['layers']])              # (L, 1, 3H)
    return {
        'emb': bf(emb),
        'eg': params['emb_ln_g'], 'eb': params['emb_ln_b'],
        'wqkv': bf(wqkv), 'bqkv': bqkv,
        'wao': bf(stk('wao')), 'bao': stk('bao'),
        'g1': stk('ln1_g'), 'b1': stk('ln1_b'),
        'wi': bf(stk('wi')), 'bi': stk('bi'),
        'wo': bf(stk('wo')), 'bo': stk('bo'),
        'g2': stk('ln2_g'), 'b2': stk('ln2_b'),
        'wp': bf(params['wp']), 'bp': params['bp'],
        'wc': bf(_pad_to(params['wc'], LOGIT_PAD, axis=1)),
        'bc': _pad_to(params['bc'], LOGIT_PAD, axis=1),
    }


# ---- forward pass ------------------------------------------------------------
def classification_forward(packed, input_ids, attention_mask, token_type_ids=None):
    B, S = input_ids.shape
    assert B % B_BLOCK == 0 and S <= MAX_POS
    nb = B // B_BLOCK
    bs = B_BLOCK * S

    if token_type_ids is None:
        token_type_ids = jnp.zeros((B, S), jnp.int32)
    position_ids = jnp.broadcast_to(jnp.arange(S, dtype=jnp.int32)[None, :], (B, S))

    # ids pre-offset into the concatenated embedding table's row ranges
    widx = input_ids.astype(jnp.int32).reshape(nb, bs, 1)
    pidx = (position_ids + OFF_POS).reshape(nb, bs, 1)
    tidx = (token_type_ids.astype(jnp.int32) + OFF_TYPE).reshape(nb, bs, 1)
    # extended attention mask: (1 - mask) * -10000  (additive bias over keys)
    mask_bias = ((1.0 - attention_mask.astype(jnp.float32)) * -10000.0
                 ).reshape(nb, B_BLOCK, S)

    batch_args = [widx, pidx, tidx, mask_bias]
    const_args = [packed['emb'], packed['eg'], packed['eb']]
    layer_args = [packed[k] for k in ('wqkv', 'bqkv', 'wao', 'bao', 'g1', 'b1',
                                      'wi', 'bi', 'wo', 'bo', 'g2', 'b2')]
    tail_args = [packed['wp'], packed['bp'], packed['wc'], packed['bc']]
    args = batch_args + const_args + layer_args + tail_args
    L = packed['wqkv'].shape[0]

    def batch_spec(a):
        return pl.BlockSpec((1,) + a.shape[1:],
                            lambda b, l, nd=a.ndim - 1: (b,) + (0,) * nd)

    def const_spec(a):
        return pl.BlockSpec(a.shape, lambda b, l, nd=a.ndim: (0,) * nd)

    def layer_spec(a):
        return pl.BlockSpec((1,) + a.shape[1:],
                            lambda b, l, nd=a.ndim - 1: (l,) + (0,) * nd)

    in_specs = ([batch_spec(a) for a in batch_args]
                + [const_spec(a) for a in const_args]
                + [layer_spec(a) for a in layer_args]
                + [const_spec(a) for a in tail_args])

    grid_spec = pltpu.PrefetchScalarGridSpec(
        num_scalar_prefetch=0,
        grid=(nb, L),                               # (parallel batch, layer stream)
        in_specs=in_specs,
        out_specs=pl.BlockSpec((1, B_BLOCK, LOGIT_PAD), lambda b, l: (b, 0, 0)),
        scratch_shapes=[pltpu.VMEM((bs, HIDDEN), jnp.float32)],   # resident hidden
    )
    # TODO(synk): at real BERT sizes (H>=768, S=512) tile B*S and the FFN
    # intermediate dim, and set pltpu.CompilerParams(vmem_limit_bytes=...) so
    # double-buffered layer weights + activations fit v7x's 64 MiB VMEM.
    logits_pad = pl.pallas_call(
        fused_bert_kernel,
        out_shape=jax.ShapeDtypeStruct((nb, B_BLOCK, LOGIT_PAD), jnp.float32),
        grid_spec=grid_spec,
        compiler_params=pltpu.CompilerParams(
            dimension_semantics=("parallel", "arbitrary")),
    )(*args)
    return logits_pad.reshape(B, LOGIT_PAD)[:, :NUM_LABELS]


# ---- demo --------------------------------------------------------------------
if __name__ == "__main__":
    key = jax.random.PRNGKey(0)
    pkey, dkey = jax.random.split(key)
    params = init_params(pkey)
    packed = pack_params(params)

    B, S = 2, 8
    input_ids = jax.random.randint(dkey, (B, S), 0, VOCAB, dtype=jnp.int32)
    attention_mask = jnp.ones((B, S), jnp.int32)
    attention_mask = attention_mask.at[0, -2:].set(0)   # exercise masking

    fwd = jax.jit(classification_forward)
    logits = fwd(packed, input_ids, attention_mask)
    logits = jax.block_until_ready(logits)

    assert logits.shape == (B, NUM_LABELS), logits.shape
    assert bool(jnp.all(jnp.isfinite(logits)))
    print("KERNEL_OK")
</pallas_src>

<mosaic_0001>
module attributes {stable_mosaic.version = 11 : i64} {
  func.func @fused_bert_kernel(%arg0: i32, %arg1: i32, %arg2: memref<1x8x1xi32, #tpu.memory_space<vmem>>, %arg3: memref<1x8x1xi32, #tpu.memory_space<vmem>>, %arg4: memref<1x8x1xi32, #tpu.memory_space<vmem>>, %arg5: memref<1x1x8xf32, #tpu.memory_space<vmem>>, %arg6: memref<384x128xbf16, #tpu.memory_space<vmem>>, %arg7: memref<1x128xf32, #tpu.memory_space<vmem>>, %arg8: memref<1x128xf32, #tpu.memory_space<vmem>>, %arg9: memref<1x128x384xbf16, #tpu.memory_space<vmem>>, %arg10: memref<1x1x384xf32, #tpu.memory_space<vmem>>, %arg11: memref<1x128x128xbf16, #tpu.memory_space<vmem>>, %arg12: memref<1x1x128xf32, #tpu.memory_space<vmem>>, %arg13: memref<1x1x128xf32, #tpu.memory_space<vmem>>, %arg14: memref<1x1x128xf32, #tpu.memory_space<vmem>>, %arg15: memref<1x128x256xbf16, #tpu.memory_space<vmem>>, %arg16: memref<1x1x256xf32, #tpu.memory_space<vmem>>, %arg17: memref<1x256x128xbf16, #tpu.memory_space<vmem>>, %arg18: memref<1x1x128xf32, #tpu.memory_space<vmem>>, %arg19: memref<1x1x128xf32, #tpu.memory_space<vmem>>, %arg20: memref<1x1x128xf32, #tpu.memory_space<vmem>>, %arg21: memref<128x128xbf16, #tpu.memory_space<vmem>>, %arg22: memref<1x128xf32, #tpu.memory_space<vmem>>, %arg23: memref<128x128xbf16, #tpu.memory_space<vmem>>, %arg24: memref<1x128xf32, #tpu.memory_space<vmem>>, %arg25: memref<1x1x128xf32, #tpu.memory_space<vmem>>, %arg26: memref<8x128xf32, #tpu.memory_space<vmem>>) attributes {dimension_semantics = [#tpu.dimension_semantics<parallel>, #tpu.dimension_semantics<arbitrary>], iteration_bounds = array<i64: 2, 2>, scalar_prefetch = 0 : i64, scratch_operands = 1 : i64, tpu.core_type = #tpu.core_type<tc>, window_params = [{transform_indices = @transform_0, window_bounds = array<i64: 1, 8, 1>}, {transform_indices = @transform_1, window_bounds = array<i64: 1, 8, 1>}, {transform_indices = @transform_2, window_bounds = array<i64: 1, 8, 1>}, {transform_indices = @transform_3, window_bounds = array<i64: 1, 1, 8>}, {pipeline_mode = #tpu.pipeline_mode<synchronous>, transform_indices = @transform_4, window_bounds = array<i64: 384, 128>}, {pipeline_mode = #tpu.pipeline_mode<synchronous>, transform_indices = @transform_5, window_bounds = array<i64: 1, 128>}, {pipeline_mode = #tpu.pipeline_mode<synchronous>, transform_indices = @transform_6, window_bounds = array<i64: 1, 128>}, {transform_indices = @transform_7, window_bounds = array<i64: 1, 128, 384>}, {transform_indices = @transform_8, window_bounds = array<i64: 1, 1, 384>}, {transform_indices = @transform_9, window_bounds = array<i64: 1, 128, 128>}, {transform_indices = @transform_10, window_bounds = array<i64: 1, 1, 128>}, {transform_indices = @transform_11, window_bounds = array<i64: 1, 1, 128>}, {transform_indices = @transform_12, window_bounds = array<i64: 1, 1, 128>}, {transform_indices = @transform_13, window_bounds = array<i64: 1, 128, 256>}, {transform_indices = @transform_14, window_bounds = array<i64: 1, 1, 256>}, {transform_indices = @transform_15, window_bounds = array<i64: 1, 256, 128>}, {transform_indices = @transform_16, window_bounds = array<i64: 1, 1, 128>}, {transform_indices = @transform_17, window_bounds = array<i64: 1, 1, 128>}, {transform_indices = @transform_18, window_bounds = array<i64: 1, 1, 128>}, {pipeline_mode = #tpu.pipeline_mode<synchronous>, transform_indices = @transform_19, window_bounds = array<i64: 128, 128>}, {pipeline_mode = #tpu.pipeline_mode<synchronous>, transform_indices = @transform_20, window_bounds = array<i64: 1, 128>}, {pipeline_mode = #tpu.pipeline_mode<synchronous>, transform_indices = @transform_21, window_bounds = array<i64: 128, 128>}, {pipeline_mode = #tpu.pipeline_mode<synchronous>, transform_indices = @transform_22, window_bounds = array<i64: 1, 128>}, {transform_indices = @transform_23, window_bounds = array<i64: 1, 1, 128>}]} {
    %c0_i32 = arith.constant 0 : i32
    %0 = arith.cmpi eq, %arg1, %c0_i32 : i32
    %1 = arith.extui %0 : i1 to i32
    %c0_i32_0 = arith.constant 0 : i32
    %2 = arith.cmpi ne, %1, %c0_i32_0 : i32
    scf.if %2 {
      %165 = tpu.iota {dimensions = array<i32: 1>} : vector<8x384xi32>
      %c0_67 = arith.constant 0 : index
      %c0_68 = arith.constant 0 : index
      %c0_69 = arith.constant 0 : index
      %166 = vector.load %arg2[%c0_67, %c0_68, %c0_69] : memref<1x8x1xi32, #tpu.memory_space<vmem>>, vector<1x8x1xi32>
      %167 = vector.shape_cast %166 : vector<1x8x1xi32> to vector<8x1xi32>
      %168 = vector.broadcast %167 : vector<8x1xi32> to vector<8x384xi32>
      %169 = arith.cmpi eq, %165, %168 : vector<8x384xi32>
      %170 = arith.extui %169 : vector<8x384xi1> to vector<8x384xi32>
      %171 = arith.sitofp %170 : vector<8x384xi32> to vector<8x384xf32>
      %c0_70 = arith.constant 0 : index
      %c0_71 = arith.constant 0 : index
      %c0_72 = arith.constant 0 : index
      %172 = vector.load %arg3[%c0_70, %c0_71, %c0_72] : memref<1x8x1xi32, #tpu.memory_space<vmem>>, vector<1x8x1xi32>
      %173 = vector.shape_cast %172 : vector<1x8x1xi32> to vector<8x1xi32>
      %174 = vector.broadcast %173 : vector<8x1xi32> to vector<8x384xi32>
      %175 = arith.cmpi eq, %165, %174 : vector<8x384xi32>
      %176 = arith.extui %175 : vector<8x384xi1> to vector<8x384xi32>
      %177 = arith.sitofp %176 : vector<8x384xi32> to vector<8x384xf32>
      %178 = arith.addf %171, %177 : vector<8x384xf32>
      %c0_73 = arith.constant 0 : index
      %c0_74 = arith.constant 0 : index
      %c0_75 = arith.constant 0 : index
      %179 = vector.load %arg4[%c0_73, %c0_74, %c0_75] : memref<1x8x1xi32, #tpu.memory_space<vmem>>, vector<1x8x1xi32>
      %180 = vector.shape_cast %179 : vector<1x8x1xi32> to vector<8x1xi32>
      %181 = vector.broadcast %180 : vector<8x1xi32> to vector<8x384xi32>
      %182 = arith.cmpi eq, %165, %181 : vector<8x384xi32>
      %183 = arith.extui %182 : vector<8x384xi1> to vector<8x384xi32>
      %184 = arith.sitofp %183 : vector<8x384xi32> to vector<8x384xf32>
      %185 = arith.addf %178, %184 : vector<8x384xf32>
      %186 = arith.truncf %185 : vector<8x384xf32> to vector<8x384xbf16>
      %c0_76 = arith.constant 0 : index
      %c0_77 = arith.constant 0 : index
      %187 = vector.load %arg6[%c0_76, %c0_77] : memref<384x128xbf16, #tpu.memory_space<vmem>>, vector<384x128xbf16>
      %cst_78 = arith.constant dense<0.000000e+00> : vector<8x128xf32>
      %188 = tpu.matmul %186, %187, %cst_78 {dimension_numbers = #tpu.dot_dimension_numbers<[1], [0], [0], [1], [0, 0, 1, 1], [], []>} : vector<8x384xbf16>, vector<384x128xbf16>, vector<8x128xf32> -> vector<8x128xf32>
      %c0_79 = arith.constant 0 : index
      %c0_80 = arith.constant 0 : index
      %189 = vector.load %arg7[%c0_79, %c0_80] : memref<1x128xf32, #tpu.memory_space<vmem>>, vector<1x128xf32>
      %c0_81 = arith.constant 0 : index
      %c0_82 = arith.constant 0 : index
      %190 = vector.load %arg8[%c0_81, %c0_82] : memref<1x128xf32, #tpu.memory_space<vmem>>, vector<1x128xf32>
      %cst_83 = arith.constant dense<0.000000e+00> : vector<8xf32>
      %191 = vector.multi_reduction <add>, %188, %cst_83 [1] : vector<8x128xf32> to vector<8xf32>
      %192 = vector.shape_cast %191 : vector<8xf32> to vector<8x1xf32>
      %cst_84 = arith.constant 1.280000e+02 : f32
      %193 = vector.broadcast %cst_84 : f32 to vector<8x1xf32>
      %194 = arith.divf %192, %193 : vector<8x1xf32>
      %195 = vector.broadcast %194 : vector<8x1xf32> to vector<8x128xf32>
      %196 = arith.subf %188, %195 : vector<8x128xf32>
      %197 = arith.mulf %196, %196 : vector<8x128xf32>
      %cst_85 = arith.constant dense<0.000000e+00> : vector<8xf32>
      %198 = vector.multi_reduction <add>, %197, %cst_85 [1] : vector<8x128xf32> to vector<8xf32>
      %199 = vector.shape_cast %198 : vector<8xf32> to vector<8x1xf32>
      %cst_86 = arith.constant 1.280000e+02 : f32
      %200 = vector.broadcast %cst_86 : f32 to vector<8x1xf32>
      %201 = arith.divf %199, %200 : vector<8x1xf32>
      %202 = vector.broadcast %194 : vector<8x1xf32> to vector<8x128xf32>
      %203 = arith.subf %188, %202 : vector<8x128xf32>
      %cst_87 = arith.constant 9.99999996E-13 : f32
      %204 = vector.broadcast %cst_87 : f32 to vector<8x1xf32>
      %205 = arith.addf %201, %204 : vector<8x1xf32>
      %206 = math.rsqrt %205 : vector<8x1xf32>
      %207 = vector.broadcast %206 : vector<8x1xf32> to vector<8x128xf32>
      %208 = arith.mulf %203, %207 : vector<8x128xf32>
      %209 = vector.broadcast %189 : vector<1x128xf32> to vector<8x128xf32>
      %210 = arith.mulf %208, %209 : vector<8x128xf32>
      %211 = vector.broadcast %190 : vector<1x128xf32> to vector<8x128xf32>
      %212 = arith.addf %210, %211 : vector<8x128xf32>
      %c0_88 = arith.constant 0 : index
      %c0_89 = arith.constant 0 : index
      %213 = vector.load %arg26[%c0_88, %c0_89] : memref<8x128xf32, #tpu.memory_space<vmem>>, vector<8x128xf32>
      tpu.vector_store %arg26[%c0_88, %c0_89], %212 {strides = array<i32>} : memref<8x128xf32, #tpu.memory_space<vmem>>, vector<8x128xf32>,
    } else {
    }
    %c0 = arith.constant 0 : index
    %c0_1 = arith.constant 0 : index
    %3 = vector.load %arg26[%c0, %c0_1] : memref<8x128xf32, #tpu.memory_space<vmem>>, vector<8x128xf32>
    %4 = arith.truncf %3 : vector<8x128xf32> to vector<8x128xbf16>
    %c0_2 = arith.constant 0 : index
    %c0_3 = arith.constant 0 : index
    %c0_4 = arith.constant 0 : index
    %5 = vector.load %arg9[%c0_2, %c0_3, %c0_4] : memref<1x128x384xbf16, #tpu.memory_space<vmem>>, vector<1x128x384xbf16>
    %6 = vector.shape_cast %5 : vector<1x128x384xbf16> to vector<128x384xbf16>
    %cst = arith.constant dense<0.000000e+00> : vector<8x384xf32>
    %7 = tpu.matmul %4, %6, %cst {dimension_numbers = #tpu.dot_dimension_numbers<[1], [0], [0], [1], [0, 0, 1, 1], [], []>} : vector<8x128xbf16>, vector<128x384xbf16>, vector<8x384xf32> -> vector<8x384xf32>
    %c0_5 = arith.constant 0 : index
    %c0_6 = arith.constant 0 : index
    %c0_7 = arith.constant 0 : index
    %8 = vector.load %arg10[%c0_5, %c0_6, %c0_7] : memref<1x1x384xf32, #tpu.memory_space<vmem>>, vector<1x1x384xf32>
    %9 = vector.shape_cast %8 : vector<1x1x384xf32> to vector<1x384xf32>
    %10 = vector.broadcast %9 : vector<1x384xf32> to vector<8x384xf32>
    %11 = arith.addf %7, %10 : vector<8x384xf32>
    %12 = vector.extract_strided_slice %11 {offsets = [0, 0], sizes = [8, 128], strides = [1, 1]} : vector<8x384xf32> to vector<8x128xf32>
    %13 = vector.shape_cast %12 : vector<8x128xf32> to vector<1x8x128xf32>
    %14 = vector.extract_strided_slice %11 {offsets = [0, 128], sizes = [8, 128], strides = [1, 1]} : vector<8x384xf32> to vector<8x128xf32>
    %15 = vector.shape_cast %14 : vector<8x128xf32> to vector<1x8x128xf32>
    %16 = vector.extract_strided_slice %11 {offsets = [0, 256], sizes = [8, 128], strides = [1, 1]} : vector<8x384xf32> to vector<8x128xf32>
    %17 = vector.shape_cast %16 : vector<8x128xf32> to vector<1x8x128xf32>
    %18 = tpu.iota {dimensions = array<i32: 2>} : vector<1x1x128xi32>
    %c0_8 = arith.constant 0 : index
    %c0_9 = arith.constant 0 : index
    %c0_10 = arith.constant 0 : index
    %19 = vector.load %arg5[%c0_8, %c0_9, %c0_10] : memref<1x1x8xf32, #tpu.memory_space<vmem>>, vector<1x1x8xf32>
    %20 = vector.shape_cast %19 : vector<1x1x8xf32> to vector<1x8xf32>
    %c0_i32_11 = arith.constant 0 : i32
    %21 = vector.broadcast %c0_i32_11 : i32 to vector<1x1x128xi32>
    %22 = arith.cmpi sge, %18, %21 : vector<1x1x128xi32>
    %c64_i32 = arith.constant 64 : i32
    %23 = vector.broadcast %c64_i32 : i32 to vector<1x1x128xi32>
    %24 = arith.cmpi slt, %18, %23 : vector<1x1x128xi32>
    %25 = arith.andi %22, %24 : vector<1x1x128xi1>
    %26 = arith.extui %25 : vector<1x1x128xi1> to vector<1x1x128xi32>
    %27 = arith.sitofp %26 : vector<1x1x128xi32> to vector<1x1x128xf32>
    %28 = vector.broadcast %27 : vector<1x1x128xf32> to vector<1x8x128xf32>
    %29 = arith.mulf %13, %28 : vector<1x8x128xf32>
    %30 = vector.broadcast %27 : vector<1x1x128xf32> to vector<1x8x128xf32>
    %31 = arith.mulf %17, %30 : vector<1x8x128xf32>
    %c64_i32_12 = arith.constant 64 : i32
    %32 = vector.broadcast %c64_i32_12 : i32 to vector<1x1x128xi32>
    %33 = arith.cmpi sge, %18, %32 : vector<1x1x128xi32>
    %c128_i32 = arith.constant 128 : i32
    %34 = vector.broadcast %c128_i32 : i32 to vector<1x1x128xi32>
    %35 = arith.cmpi slt, %18, %34 : vector<1x1x128xi32>
    %36 = arith.andi %33, %35 : vector<1x1x128xi1>
    %37 = arith.extui %36 : vector<1x1x128xi1> to vector<1x1x128xi32>
    %38 = arith.sitofp %37 : vector<1x1x128xi32> to vector<1x1x128xf32>
    %39 = vector.broadcast %38 : vector<1x1x128xf32> to vector<1x8x128xf32>
    %40 = arith.mulf %13, %39 : vector<1x8x128xf32>
    %41 = vector.broadcast %38 : vector<1x1x128xf32> to vector<1x8x128xf32>
    %42 = arith.mulf %17, %41 : vector<1x8x128xf32>
    %43 = tpu.concatenate %29, %40 in 0 : vector<1x8x128xf32>, vector<1x8x128xf32> -> vector<2x8x128xf32>
    %44 = arith.truncf %43 : vector<2x8x128xf32> to vector<2x8x128xbf16>
    %45 = tpu.concatenate %15, %15 in 0 : vector<1x8x128xf32>, vector<1x8x128xf32> -> vector<2x8x128xf32>
    %46 = arith.truncf %45 : vector<2x8x128xf32> to vector<2x8x128xbf16>
    %47 = tpu.concatenate %31, %42 in 0 : vector<1x8x128xf32>, vector<1x8x128xf32> -> vector<2x8x128xf32>
    %48 = arith.truncf %47 : vector<2x8x128xf32> to vector<2x8x128xbf16>
    %49 = tpu.concatenate %20, %20 in 0 : vector<1x8xf32>, vector<1x8xf32> -> vector<2x8xf32>
    %50 = vector.shape_cast %49 : vector<2x8xf32> to vector<2x1x8xf32>
    "tpu.trace_start"() <{level = 10 : i32, message = "bqd,bkd->bqk"}> : () -> ()
    %cst_13 = arith.constant dense<0.000000e+00> : vector<2x8x8xf32>
    %51 = tpu.matmul %44, %46, %cst_13 {dimension_numbers = #tpu.dot_dimension_numbers<[2], [2], [1], [1], [0, 0, 0, 1, 1, 1], [0], [0]>} : vector<2x8x128xbf16>, vector<2x8x128xbf16>, vector<2x8x8xf32> -> vector<2x8x8xf32>
    "tpu.trace_stop"() : () -> ()
    %52 = vector.broadcast %50 : vector<2x1x8xf32> to vector<2x8x8xf32>
    %53 = arith.addf %51, %52 : vector<2x8x8xf32>
    %cst_14 = arith.constant dense<0xFF800000> : vector<2x8xf32>
    %54 = vector.multi_reduction <maximumf>, %53, %cst_14 [2] : vector<2x8x8xf32> to vector<2x8xf32>
    %55 = vector.shape_cast %54 : vector<2x8xf32> to vector<2x8x1xf32>
    %56 = vector.broadcast %55 : vector<2x8x1xf32> to vector<2x8x8xf32>
    %57 = arith.subf %53, %56 : vector<2x8x8xf32>
    %58 = math.exp %57 : vector<2x8x8xf32>
    %cst_15 = arith.constant dense<0.000000e+00> : vector<2x8xf32>
    %59 = vector.multi_reduction <add>, %58, %cst_15 [2] : vector<2x8x8xf32> to vector<2x8xf32>
    %60 = vector.shape_cast %59 : vector<2x8xf32> to vector<2x8x1xf32>
    %61 = tpu.reciprocal %60 {approx = true} : vector<2x8x1xf32> -> vector<2x8x1xf32>
    %62 = vector.broadcast %61 : vector<2x8x1xf32> to vector<2x8x8xf32>
    %63 = arith.mulf %58, %62 : vector<2x8x8xf32>
    %64 = arith.truncf %63 : vector<2x8x8xf32> to vector<2x8x8xbf16>
    "tpu.trace_start"() <{level = 10 : i32, message = "bqk,bkd->bqd"}> : () -> ()
    %cst_16 = arith.constant dense<0.000000e+00> : vector<2x8x128xf32>
    %65 = tpu.matmul %64, %48, %cst_16 {dimension_numbers = #tpu.dot_dimension_numbers<[2], [1], [1], [2], [0, 0, 0, 1, 1, 2], [0], [0]>} : vector<2x8x8xbf16>, vector<2x8x128xbf16>, vector<2x8x128xf32> -> vector<2x8x128xf32>
    "tpu.trace_stop"() : () -> ()
    %66 = vector.extract_strided_slice %65 {offsets = [0, 0, 0], sizes = [1, 8, 128], strides = [1, 1, 1]} : vector<2x8x128xf32> to vector<1x8x128xf32>
    %67 = vector.extract_strided_slice %65 {offsets = [1, 0, 0], sizes = [1, 8, 128], strides = [1, 1, 1]} : vector<2x8x128xf32> to vector<1x8x128xf32>
    %68 = arith.addf %66, %67 : vector<1x8x128xf32>
    %69 = vector.shape_cast %68 : vector<1x8x128xf32> to vector<8x128xf32>
    %70 = arith.truncf %69 : vector<8x128xf32> to vector<8x128xbf16>
    %c0_17 = arith.constant 0 : index
    %c0_18 = arith.constant 0 : index
    %c0_19 = arith.constant 0 : index
    %71 = vector.load %arg11[%c0_17, %c0_18, %c0_19] : memref<1x128x128xbf16, #tpu.memory_space<vmem>>, vector<1x128x128xbf16>
    %72 = vector.shape_cast %71 : vector<1x128x128xbf16> to vector<128x128xbf16>
    %cst_20 = arith.constant dense<0.000000e+00> : vector<8x128xf32>
    %73 = tpu.matmul %70, %72, %cst_20 {dimension_numbers = #tpu.dot_dimension_numbers<[1], [0], [0], [1], [0, 0, 1, 1], [], []>} : vector<8x128xbf16>, vector<128x128xbf16>, vector<8x128xf32> -> vector<8x128xf32>
    %c0_21 = arith.constant 0 : index
    %c0_22 = arith.constant 0 : index
    %c0_23 = arith.constant 0 : index
    %74 = vector.load %arg12[%c0_21, %c0_22, %c0_23] : memref<1x1x128xf32, #tpu.memory_space<vmem>>, vector<1x1x128xf32>
    %75 = vector.shape_cast %74 : vector<1x1x128xf32> to vector<1x128xf32>
    %76 = vector.broadcast %75 : vector<1x128xf32> to vector<8x128xf32>
    %77 = arith.addf %73, %76 : vector<8x128xf32>
    %78 = arith.addf %77, %3 : vector<8x128xf32>
    %c0_24 = arith.constant 0 : index
    %c0_25 = arith.constant 0 : index
    %c0_26 = arith.constant 0 : index
    %79 = vector.load %arg13[%c0_24, %c0_25, %c0_26] : memref<1x1x128xf32, #tpu.memory_space<vmem>>, vector<1x1x128xf32>
    %80 = vector.shape_cast %79 : vector<1x1x128xf32> to vector<1x128xf32>
    %c0_27 = arith.constant 0 : index
    %c0_28 = arith.constant 0 : index
    %c0_29 = arith.constant 0 : index
    %81 = vector.load %arg14[%c0_27, %c0_28, %c0_29] : memref<1x1x128xf32, #tpu.memory_space<vmem>>, vector<1x1x128xf32>
    %82 = vector.shape_cast %81 : vector<1x1x128xf32> to vector<1x128xf32>
    %cst_30 = arith.constant dense<0.000000e+00> : vector<8xf32>
    %83 = vector.multi_reduction <add>, %78, %cst_30 [1] : vector<8x128xf32> to vector<8xf32>
    %84 = vector.shape_cast %83 : vector<8xf32> to vector<8x1xf32>
    %cst_31 = arith.constant 1.280000e+02 : f32
    %85 = vector.broadcast %cst_31 : f32 to vector<8x1xf32>
    %86 = arith.divf %84, %85 : vector<8x1xf32>
    %87 = vector.broadcast %86 : vector<8x1xf32> to vector<8x128xf32>
    %88 = arith.subf %78, %87 : vector<8x128xf32>
    %89 = arith.mulf %88, %88 : vector<8x128xf32>
    %cst_32 = arith.constant dense<0.000000e+00> : vector<8xf32>
    %90 = vector.multi_reduction <add>, %89, %cst_32 [1] : vector<8x128xf32> to vector<8xf32>
    %91 = vector.shape_cast %90 : vector<8xf32> to vector<8x1xf32>
    %cst_33 = arith.constant 1.280000e+02 : f32
    %92 = vector.broadcast %cst_33 : f32 to vector<8x1xf32>
    %93 = arith.divf %91, %92 : vector<8x1xf32>
    %94 = vector.broadcast %86 : vector<8x1xf32> to vector<8x128xf32>
    %95 = arith.subf %78, %94 : vector<8x128xf32>
    %cst_34 = arith.constant 9.99999996E-13 : f32
    %96 = vector.broadcast %cst_34 : f32 to vector<8x1xf32>
    %97 = arith.addf %93, %96 : vector<8x1xf32>
    %98 = math.rsqrt %97 : vector<8x1xf32>
    %99 = vector.broadcast %98 : vector<8x1xf32> to vector<8x128xf32>
    %100 = arith.mulf %95, %99 : vector<8x128xf32>
    %101 = vector.broadcast %80 : vector<1x128xf32> to vector<8x128xf32>
    %102 = arith.mulf %100, %101 : vector<8x128xf32>
    %103 = vector.broadcast %82 : vector<1x128xf32> to vector<8x128xf32>
    %104 = arith.addf %102, %103 : vector<8x128xf32>
    %105 = arith.truncf %104 : vector<8x128xf32> to vector<8x128xbf16>
    %c0_35 = arith.constant 0 : index
    %c0_36 = arith.constant 0 : index
    %c0_37 = arith.constant 0 : index
    %106 = vector.load %arg15[%c0_35, %c0_36, %c0_37] : memref<1x128x256xbf16, #tpu.memory_space<vmem>>, vector<1x128x256xbf16>
    %107 = vector.shape_cast %106 : vector<1x128x256xbf16> to vector<128x256xbf16>
    %cst_38 = arith.constant dense<0.000000e+00> : vector<8x256xf32>
    %108 = tpu.matmul %105, %107, %cst_38 {dimension_numbers = #tpu.dot_dimension_numbers<[1], [0], [0], [1], [0, 0, 1, 1], [], []>} : vector<8x128xbf16>, vector<128x256xbf16>, vector<8x256xf32> -> vector<8x256xf32>
    %c0_39 = arith.constant 0 : index
    %c0_40 = arith.constant 0 : index
    %c0_41 = arith.constant 0 : index
    %109 = vector.load %arg16[%c0_39, %c0_40, %c0_41] : memref<1x1x256xf32, #tpu.memory_space<vmem>>, vector<1x1x256xf32>
    %110 = vector.shape_cast %109 : vector<1x1x256xf32> to vector<1x256xf32>
    %111 = vector.broadcast %110 : vector<1x256xf32> to vector<8x256xf32>
    %112 = arith.addf %108, %111 : vector<8x256xf32>
    %113 = arith.mulf %112, %112 : vector<8x256xf32>
    %114 = arith.mulf %112, %113 : vector<8x256xf32>
    %cst_42 = arith.constant 4.471500e-02 : f32
    %115 = vector.broadcast %cst_42 : f32 to vector<8x256xf32>
    %116 = arith.mulf %115, %114 : vector<8x256xf32>
    %117 = arith.addf %112, %116 : vector<8x256xf32>
    %cst_43 = arith.constant 0.797884583 : f32
    %118 = vector.broadcast %cst_43 : f32 to vector<8x256xf32>
    %119 = arith.mulf %118, %117 : vector<8x256xf32>
    %120 = math.tanh %119 : vector<8x256xf32>
    %cst_44 = arith.constant 1.000000e+00 : f32
    %121 = vector.broadcast %cst_44 : f32 to vector<8x256xf32>
    %122 = arith.addf %121, %120 : vector<8x256xf32>
    %cst_45 = arith.constant 5.000000e-01 : f32
    %123 = vector.broadcast %cst_45 : f32 to vector<8x256xf32>
    %124 = arith.mulf %123, %122 : vector<8x256xf32>
    %125 = arith.mulf %112, %124 : vector<8x256xf32>
    %126 = arith.truncf %125 : vector<8x256xf32> to vector<8x256xbf16>
    %c0_46 = arith.constant 0 : index
    %c0_47 = arith.constant 0 : index
    %c0_48 = arith.constant 0 : index
    %127 = vector.load %arg17[%c0_46, %c0_47, %c0_48] : memref<1x256x128xbf16, #tpu.memory_space<vmem>>, vector<1x256x128xbf16>
    %128 = vector.shape_cast %127 : vector<1x256x128xbf16> to vector<256x128xbf16>
    %cst_49 = arith.constant dense<0.000000e+00> : vector<8x128xf32>
    %129 = tpu.matmul %126, %128, %cst_49 {dimension_numbers = #tpu.dot_dimension_numbers<[1], [0], [0], [1], [0, 0, 1, 1], [], []>} : vector<8x256xbf16>, vector<256x128xbf16>, vector<8x128xf32> -> vector<8x128xf32>
    %c0_50 = arith.constant 0 : index
    %c0_51 = arith.constant 0 : index
    %c0_52 = arith.constant 0 : index
    %130 = vector.load %arg18[%c0_50, %c0_51, %c0_52] : memref<1x1x128xf32, #tpu.memory_space<vmem>>, vector<1x1x128xf32>
    %131 = vector.shape_cast %130 : vector<1x1x128xf32> to vector<1x128xf32>
    %132 = vector.broadcast %131 : vector<1x128xf32> to vector<8x128xf32>
    %133 = arith.addf %129, %132 : vector<8x128xf32>
    %134 = arith.addf %133, %104 : vector<8x128xf32>
    %c0_53 = arith.constant 0 : index
    %c0_54 = arith.constant 0 : index
    %c0_55 = arith.constant 0 : index
    %135 = vector.load %arg19[%c0_53, %c0_54, %c0_55] : memref<1x1x128xf32, #tpu.memory_space<vmem>>, vector<1x1x128xf32>
    %136 = vector.shape_cast %135 : vector<1x1x128xf32> to vector<1x128xf32>
    %c0_56 = arith.constant 0 : index
    %c0_57 = arith.constant 0 : index
    %c0_58 = arith.constant 0 : index
    %137 = vector.load %arg20[%c0_56, %c0_57, %c0_58] : memref<1x1x128xf32, #tpu.memory_space<vmem>>, vector<1x1x128xf32>
    %138 = vector.shape_cast %137 : vector<1x1x128xf32> to vector<1x128xf32>
    %cst_59 = arith.constant dense<0.000000e+00> : vector<8xf32>
    %139 = vector.multi_reduction <add>, %134, %cst_59 [1] : vector<8x128xf32> to vector<8xf32>
    %140 = vector.shape_cast %139 : vector<8xf32> to vector<8x1xf32>
    %cst_60 = arith.constant 1.280000e+02 : f32
    %141 = vector.broadcast %cst_60 : f32 to vector<8x1xf32>
    %142 = arith.divf %140, %141 : vector<8x1xf32>
    %143 = vector.broadcast %142 : vector<8x1xf32> to vector<8x128xf32>
    %144 = arith.subf %134, %143 : vector<8x128xf32>
    %145 = arith.mulf %144, %144 : vector<8x128xf32>
    %cst_61 = arith.constant dense<0.000000e+00> : vector<8xf32>
    %146 = vector.multi_reduction <add>, %145, %cst_61 [1] : vector<8x128xf32> to vector<8xf32>
    %147 = vector.shape_cast %146 : vector<8xf32> to vector<8x1xf32>
    %cst_62 = arith.constant 1.280000e+02 : f32
    %148 = vector.broadcast %cst_62 : f32 to vector<8x1xf32>
    %149 = arith.divf %147, %148 : vector<8x1xf32>
    %150 = vector.broadcast %142 : vector<8x1xf32> to vector<8x128xf32>
    %151 = arith.subf %134, %150 : vector<8x128xf32>
    %cst_63 = arith.constant 9.99999996E-13 : f32
    %152 = vector.broadcast %cst_63 : f32 to vector<8x1xf32>
    %153 = arith.addf %149, %152 : vector<8x1xf32>
    %154 = math.rsqrt %153 : vector<8x1xf32>
    %155 = vector.broadcast %154 : vector<8x1xf32> to vector<8x128xf32>
    %156 = arith.mulf %151, %155 : vector<8x128xf32>
    %157 = vector.broadcast %136 : vector<1x128xf32> to vector<8x128xf32>
    %158 = arith.mulf %156, %157 : vector<8x128xf32>
    %159 = vector.broadcast %138 : vector<1x128xf32> to vector<8x128xf32>
    %160 = arith.addf %158, %159 : vector<8x128xf32>
    %c0_64 = arith.constant 0 : index
    %c0_65 = arith.constant 0 : index
    %161 = vector.load %arg26[%c0_64, %c0_65] : memref<8x128xf32, #tpu.memory_space<vmem>>, vector<8x128xf32>
    tpu.vector_store %arg26[%c0_64, %c0_65], %160 {strides = array<i32>} : memref<8x128xf32, #tpu.memory_space<vmem>>, vector<8x128xf32>,
    %c1_i32 = arith.constant 1 : i32
    %162 = arith.cmpi eq, %arg1, %c1_i32 : i32
    %163 = arith.extui %162 : i1 to i32
    %c0_i32_66 = arith.constant 0 : i32
    %164 = arith.cmpi ne, %163, %c0_i32_66 : i32
    scf.if %164 {
      %165 = vector.shape_cast %160 : vector<8x128xf32> to vector<1x8x128xf32>
      %166 = vector.extract_strided_slice %165 {offsets = [0, 0, 0], sizes = [1, 1, 128], strides = [1, 1, 1]} : vector<1x8x128xf32> to vector<1x1x128xf32>
      %167 = vector.shape_cast %166 : vector<1x1x128xf32> to vector<1x128xf32>
      %168 = arith.truncf %167 : vector<1x128xf32> to vector<1x128xbf16>
      %c0_67 = arith.constant 0 : index
      %c0_68 = arith.constant 0 : index
      %169 = vector.load %arg21[%c0_67, %c0_68] : memref<128x128xbf16, #tpu.memory_space<vmem>>, vector<128x128xbf16>
      %cst_69 = arith.constant dense<0.000000e+00> : vector<1x128xf32>
      %170 = tpu.matmul %168, %169, %cst_69 {dimension_numbers = #tpu.dot_dimension_numbers<[1], [0], [0], [1], [0, 0, 1, 1], [], []>} : vector<1x128xbf16>, vector<128x128xbf16>, vector<1x128xf32> -> vector<1x128xf32>
      %c0_70 = arith.constant 0 : index
      %c0_71 = arith.constant 0 : index
      %171 = vector.load %arg22[%c0_70, %c0_71] : memref<1x128xf32, #tpu.memory_space<vmem>>, vector<1x128xf32>
      %172 = arith.addf %170, %171 : vector<1x128xf32>
      %173 = math.tanh %172 : vector<1x128xf32>
      %174 = arith.truncf %173 : vector<1x128xf32> to vector<1x128xbf16>
      %c0_72 = arith.constant 0 : index
      %c0_73 = arith.constant 0 : index
      %175 = vector.load %arg23[%c0_72, %c0_73] : memref<128x128xbf16, #tpu.memory_space<vmem>>, vector<128x128xbf16>
      %cst_74 = arith.constant dense<0.000000e+00> : vector<1x128xf32>
      %176 = tpu.matmul %174, %175, %cst_74 {dimension_numbers = #tpu.dot_dimension_numbers<[1], [0], [0], [1], [0, 0, 1, 1], [], []>} : vector<1x128xbf16>, vector<128x128xbf16>, vector<1x128xf32> -> vector<1x128xf32>
      %c0_75 = arith.constant 0 : index
      %c0_76 = arith.constant 0 : index
      %177 = vector.load %arg24[%c0_75, %c0_76] : memref<1x128xf32, #tpu.memory_space<vmem>>, vector<1x128xf32>
      %178 = arith.addf %176, %177 : vector<1x128xf32>
      %c0_77 = arith.constant 0 : index
      %c0_78 = arith.constant 0 : index
      %c0_79 = arith.constant 0 : index
      %179 = vector.load %arg25[%c0_77, %c0_78, %c0_79] : memref<1x1x128xf32, #tpu.memory_space<vmem>>, vector<1x1x128xf32>
      %180 = vector.shape_cast %179 : vector<1x1x128xf32> to vector<1x128xf32>
      %181 = vector.shape_cast %178 : vector<1x128xf32> to vector<1x1x128xf32>
      tpu.vector_store %arg25[%c0_77, %c0_78, %c0_79], %181 {strides = array<i32>} : memref<1x1x128xf32, #tpu.memory_space<vmem>>, vector<1x1x128xf32>,
    } else {
    }
    return
  }
  func.func @transform_0(%arg0: i32, %arg1: i32) -> (i32, i32, i32) {
    %c0_i32 = arith.constant 0 : i32
    %c0_i32_0 = arith.constant 0 : i32
    %c0_i32_1 = arith.constant 0 : i32
    return %arg0, %c0_i32, %c0_i32_0 : i32, i32, i32
  }
  func.func @transform_1(%arg0: i32, %arg1: i32) -> (i32, i32, i32) {
    %c0_i32 = arith.constant 0 : i32
    %c0_i32_0 = arith.constant 0 : i32
    %c0_i32_1 = arith.constant 0 : i32
    return %arg0, %c0_i32, %c0_i32_0 : i32, i32, i32
  }
  func.func @transform_2(%arg0: i32, %arg1: i32) -> (i32, i32, i32) {
    %c0_i32 = arith.constant 0 : i32
    %c0_i32_0 = arith.constant 0 : i32
    %c0_i32_1 = arith.constant 0 : i32
    return %arg0, %c0_i32, %c0_i32_0 : i32, i32, i32
  }
  func.func @transform_3(%arg0: i32, %arg1: i32) -> (i32, i32, i32) {
    %c0_i32 = arith.constant 0 : i32
    %c0_i32_0 = arith.constant 0 : i32
    %c0_i32_1 = arith.constant 0 : i32
    return %arg0, %c0_i32, %c0_i32_0 : i32, i32, i32
  }
  func.func @transform_4(%arg0: i32, %arg1: i32) -> (i32, i32) {
    %c0_i32 = arith.constant 0 : i32
    %c0_i32_0 = arith.constant 0 : i32
    %c0_i32_1 = arith.constant 0 : i32
    return %c0_i32, %c0_i32_0 : i32, i32
  }
  func.func @transform_5(%arg0: i32, %arg1: i32) -> (i32, i32) {
    %c0_i32 = arith.constant 0 : i32
    %c0_i32_0 = arith.constant 0 : i32
    %c0_i32_1 = arith.constant 0 : i32
    return %c0_i32, %c0_i32_0 : i32, i32
  }
  func.func @transform_6(%arg0: i32, %arg1: i32) -> (i32, i32) {
    %c0_i32 = arith.constant 0 : i32
    %c0_i32_0 = arith.constant 0 : i32
    %c0_i32_1 = arith.constant 0 : i32
    return %c0_i32, %c0_i32_0 : i32, i32
  }
  func.func @transform_7(%arg0: i32, %arg1: i32) -> (i32, i32, i32) {
    %c0_i32 = arith.constant 0 : i32
    %c0_i32_0 = arith.constant 0 : i32
    %c0_i32_1 = arith.constant 0 : i32
    return %arg1, %c0_i32, %c0_i32_0 : i32, i32, i32
  }
  func.func @transform_8(%arg0: i32, %arg1: i32) -> (i32, i32, i32) {
    %c0_i32 = arith.constant 0 : i32
    %c0_i32_0 = arith.constant 0 : i32
    %c0_i32_1 = arith.constant 0 : i32
    return %arg1, %c0_i32, %c0_i32_0 : i32, i32, i32
  }
  func.func @transform_9(%arg0: i32, %arg1: i32) -> (i32, i32, i32) {
    %c0_i32 = arith.constant 0 : i32
    %c0_i32_0 = arith.constant 0 : i32
    %c0_i32_1 = arith.constant 0 : i32
    return %arg1, %c0_i32, %c0_i32_0 : i32, i32, i32
  }
  func.func @transform_10(%arg0: i32, %arg1: i32) -> (i32, i32, i32) {
    %c0_i32 = arith.constant 0 : i32
    %c0_i32_0 = arith.constant 0 : i32
    %c0_i32_1 = arith.constant 0 : i32
    return %arg1, %c0_i32, %c0_i32_0 : i32, i32, i32
  }
  func.func @transform_11(%arg0: i32, %arg1: i32) -> (i32, i32, i32) {
    %c0_i32 = arith.constant 0 : i32
    %c0_i32_0 = arith.constant 0 : i32
    %c0_i32_1 = arith.constant 0 : i32
    return %arg1, %c0_i32, %c0_i32_0 : i32, i32, i32
  }
  func.func @transform_12(%arg0: i32, %arg1: i32) -> (i32, i32, i32) {
    %c0_i32 = arith.constant 0 : i32
    %c0_i32_0 = arith.constant 0 : i32
    %c0_i32_1 = arith.constant 0 : i32
    return %arg1, %c0_i32, %c0_i32_0 : i32, i32, i32
  }
  func.func @transform_13(%arg0: i32, %arg1: i32) -> (i32, i32, i32) {
    %c0_i32 = arith.constant 0 : i32
    %c0_i32_0 = arith.constant 0 : i32
    %c0_i32_1 = arith.constant 0 : i32
    return %arg1, %c0_i32, %c0_i32_0 : i32, i32, i32
  }
  func.func @transform_14(%arg0: i32, %arg1: i32) -> (i32, i32, i32) {
    %c0_i32 = arith.constant 0 : i32
    %c0_i32_0 = arith.constant 0 : i32
    %c0_i32_1 = arith.constant 0 : i32
    return %arg1, %c0_i32, %c0_i32_0 : i32, i32, i32
  }
  func.func @transform_15(%arg0: i32, %arg1: i32) -> (i32, i32, i32) {
    %c0_i32 = arith.constant 0 : i32
    %c0_i32_0 = arith.constant 0 : i32
    %c0_i32_1 = arith.constant 0 : i32
    return %arg1, %c0_i32, %c0_i32_0 : i32, i32, i32
  }
  func.func @transform_16(%arg0: i32, %arg1: i32) -> (i32, i32, i32) {
    %c0_i32 = arith.constant 0 : i32
    %c0_i32_0 = arith.constant 0 : i32
    %c0_i32_1 = arith.constant 0 : i32
    return %arg1, %c0_i32, %c0_i32_0 : i32, i32, i32
  }
  func.func @transform_17(%arg0: i32, %arg1: i32) -> (i32, i32, i32) {
    %c0_i32 = arith.constant 0 : i32
    %c0_i32_0 = arith.constant 0 : i32
    %c0_i32_1 = arith.constant 0 : i32
    return %arg1, %c0_i32, %c0_i32_0 : i32, i32, i32
  }
  func.func @transform_18(%arg0: i32, %arg1: i32) -> (i32, i32, i32) {
    %c0_i32 = arith.constant 0 : i32
    %c0_i32_0 = arith.constant 0 : i32
    %c0_i32_1 = arith.constant 0 : i32
    return %arg1, %c0_i32, %c0_i32_0 : i32, i32, i32
  }
  func.func @transform_19(%arg0: i32, %arg1: i32) -> (i32, i32) {
    %c0_i32 = arith.constant 0 : i32
    %c0_i32_0 = arith.constant 0 : i32
    %c0_i32_1 = arith.constant 0 : i32
    return %c0_i32, %c0_i32_0 : i32, i32
  }
  func.func @transform_20(%arg0: i32, %arg1: i32) -> (i32, i32) {
    %c0_i32 = arith.constant 0 : i32
    %c0_i32_0 = arith.constant 0 : i32
    %c0_i32_1 = arith.constant 0 : i32
    return %c0_i32, %c0_i32_0 : i32, i32
  }
  func.func @transform_21(%arg0: i32, %arg1: i32) -> (i32, i32) {
    %c0_i32 = arith.constant 0 : i32
    %c0_i32_0 = arith.constant 0 : i32
    %c0_i32_1 = arith.constant 0 : i32
    return %c0_i32, %c0_i32_0 : i32, i32
  }
  func.func @transform_22(%arg0: i32, %arg1: i32) -> (i32, i32) {
    %c0_i32 = arith.constant 0 : i32
    %c0_i32_0 = arith.constant 0 : i32
    %c0_i32_1 = arith.constant 0 : i32
    return %c0_i32, %c0_i32_0 : i32, i32
  }
  func.func @transform_23(%arg0: i32, %arg1: i32) -> (i32, i32, i32) {
    %c0_i32 = arith.constant 0 : i32
    %c0_i32_0 = arith.constant 0 : i32
    %c0_i32_1 = arith.constant 0 : i32
    return %arg0, %c0_i32, %c0_i32_0 : i32, i32, i32
  }
}

</mosaic_0001>

<llo_original>
// kernel: classification_forward.1
$region0: #{classification_forward.1}
  #allocation0 [shape = 'u32[]', space=smem, size = 0x4, offset = 0x4, fixed_abs, tag = 'smem constant byte address 0x4 - core index']
  #allocation1 [shape = 'u32[144,128]{1,0:T(1,128)}', space=vmem, size = 0x12000, scoped, tag = 'internal scratch']
  #allocation2 [shape = 'f32[8,128]{1,0:T(8,128)}', space=vmem, size = 0x1000, scoped, tag = 'scratch operand']
  %s0 = inlined_call_operand.vmem [shape: s32[2,8,1], index: 0, kind: input, shape index: {}]
  %s1 = inlined_call_operand.vmem [shape: s32[2,8,1], index: 1, kind: input, shape index: {}]
  %s2 = inlined_call_operand.vmem [shape: s32[2,8,1], index: 2, kind: input, shape index: {}]
  %s3 = inlined_call_operand.vmem [shape: f32[2,1,8], index: 3, kind: input, shape index: {}]
  %s4 = inlined_call_operand.hbm [shape: bf16[384,128], index: 4, kind: input, shape index: {}]
  %s5 = inlined_call_operand.vmem [shape: f32[1,128], index: 5, kind: input, shape index: {}]
  %s6 = inlined_call_operand.vmem [shape: f32[1,128], index: 6, kind: input, shape index: {}]
  %s7 = inlined_call_operand.hbm [shape: bf16[2,128,384], index: 7, kind: input, shape index: {}]
  %s8 = inlined_call_operand.vmem [shape: f32[2,1,384], index: 8, kind: input, shape index: {}]
  %s9 = inlined_call_operand.hbm [shape: bf16[2,128,128], index: 9, kind: input, shape index: {}]
  %s10 = inlined_call_operand.vmem [shape: f32[2,1,128], index: 10, kind: input, shape index: {}]
  %s11 = inlined_call_operand.vmem [shape: f32[2,1,128], index: 11, kind: input, shape index: {}]
  %s12 = inlined_call_operand.vmem [shape: f32[2,1,128], index: 12, kind: input, shape index: {}]
  %s13 = inlined_call_operand.hbm [shape: bf16[2,128,256], index: 13, kind: input, shape index: {}]
  %s14 = inlined_call_operand.vmem [shape: f32[2,1,256], index: 14, kind: input, shape index: {}]
  %s15 = inlined_call_operand.hbm [shape: bf16[2,256,128], index: 15, kind: input, shape index: {}]
  %s16 = inlined_call_operand.vmem [shape: f32[2,1,128], index: 16, kind: input, shape index: {}]
  %s17 = inlined_call_operand.vmem [shape: f32[2,1,128], index: 17, kind: input, shape index: {}]
  %s18 = inlined_call_operand.vmem [shape: f32[2,1,128], index: 18, kind: input, shape index: {}]
  %s19 = inlined_call_operand.vmem [shape: bf16[128,128], index: 19, kind: input, shape index: {}]
  %s20 = inlined_call_operand.vmem [shape: f32[1,128], index: 20, kind: input, shape index: {}]
  %s21 = inlined_call_operand.hbm [shape: bf16[128,128], index: 21, kind: input, shape index: {}]
  %s22 = inlined_call_operand.vmem [shape: f32[1,128], index: 22, kind: input, shape index: {}]
  %s23 = inlined_call_operand.hbm [shape: f32[2,1,128], index: 23, kind: output, shape index: {}]
  %s24 = sld [smem:[#allocation0]]
  $region157: #{classification_forward.1} parent=0
    _
  %s26 = ssub.s32 1, %s24
  %s27 = scalar_select 0, %s26, %s24
  $region1: #{classification_forward.1} parent=0
    #allocation3 [shape = 'u8[98304]{0}', space=vmem, size = 0x18000, scoped, tag = 'input window, operand 4, single buffered']
    #allocation4 [shape = 's32[2]{0}', space=sflag, size = 0x8, scoped, tag = 'scoped memory for classification_forward.1']
    #allocation5 [shape = 's32[2]{0}', space=sflag, size = 0x8, scoped, tag = 'scoped memory for classification_forward.1']
    #allocation6 [shape = 'u8[196608]{0}', space=vmem, size = 0x30000, scoped, tag = 'input window, operand 7']
    #allocation7 [shape = 's32[2]{0}', space=sflag, size = 0x8, scoped, tag = 'scoped memory for classification_forward.1']
    #allocation8 [shape = 'u8[65536]{0}', space=vmem, size = 0x10000, scoped, tag = 'input window, operand 9']
    #allocation9 [shape = 'u8[131072]{0}', space=vmem, size = 0x20000, scoped, tag = 'input window, operand 13']
    #allocation10 [shape = 's32[2]{0}', space=sflag, size = 0x8, scoped, tag = 'scoped memory for classification_forward.1']
    #allocation11 [shape = 'u8[131072]{0}', space=vmem, size = 0x20000, scoped, tag = 'input window, operand 15']
    #allocation12 [shape = 'u8[32768]{0}', space=vmem, size = 0x8000, scoped, tag = 'input window, operand 21, single buffered']
    #allocation13 [shape = 's32[1]{0}', space=sflag, size = 0x4, scoped, tag = 'scoped memory for classification_forward.1']
    #allocation14 [shape = 'u8[1024]{0}', space=vmem, size = 0x400, scoped, tag = 'output window, operand 0']
    %28 = vsyncpa [#allocation4], 0
    %29 = vsyncpa [#allocation7], 0
    %s30 = scalar_lea.sflag [#allocation7], 1
    %31 = vsyncpa %s30, 0
    %32 = vsyncpa [#allocation10], 0
    %s33 = scalar_lea.sflag [#allocation10], 1
    %34 = vsyncpa %s33, 0
    %35 = vsyncpa [#allocation13], 0
    %36 = vsyncpa [#allocation5], 0
    %s37 = scalar_lea.sflag [#allocation5], 1
    %38 = vsyncpa %s37, 0
    loop: start=0, step=1, limit=6
    $region2: #{classification_forward.1} parent=1 // loop_pre_header
      _
    $region3: #{classification_forward.1} parent=1 // loop_header
      %s40 = sphi 0, %s44
      %p41 = scmp.ge.s32.totalorder %s40, 6
      %s47 = sphi 0, %s59
      %s48 = sphi 0, %s55
      %s49 = sphi 0, %s47
      %s50 = sphi 0, %s48
      %s51 = sphi 0, %s49
      %s52 = sphi 0, %s50
      %s62 = sphi 0, %s64
      %s65 = sphi 0, %s62
      %s66 = sphi 0, %s65
      %s82 = sphi 0, %s66
      %s88 = sphi 0, %s90
      %s91 = sphi 0, %s88
      %s92 = sphi 0, %s91
      %s108 = sphi 0, %s92
      %s114 = sphi 0, %s116
      %s117 = sphi 0, %s114
      %s118 = sphi 0, %s117
      %s134 = sphi 0, %s118
      %s140 = sphi 0, %s142
      %s143 = sphi 0, %s140
      %s144 = sphi 0, %s143
      %s160 = sphi 0, %s144
      %s164 = sphi 0, %s164
      %s166 = sphi 0, %s164
      %s167 = sphi 0, %s166
      %s181 = sphi 0, %s167
      %s185 = sphi 0, %s185
      %s187 = sphi 0, %s185
      %s188 = sphi 0, %s187
      %s202 = sphi 0, %s188
      %s206 = sphi 0, %s206
      %s208 = sphi 0, %s206
      %s209 = sphi 0, %s208
      %s223 = sphi 0, %s209
      %s229 = sphi 0, %s231
      %s232 = sphi 0, %s229
      %s233 = sphi 0, %s232
      %s249 = sphi 0, %s233
      %s255 = sphi 0, %s257
      %s258 = sphi 0, %s255
      %s259 = sphi 0, %s258
      %s275 = sphi 0, %s259
      %s281 = sphi 0, %s283
      %s284 = sphi 0, %s281
      %s285 = sphi 0, %s284
      %s301 = sphi 0, %s285
      %s307 = sphi 0, %s309
      %s310 = sphi 0, %s307
      %s311 = sphi 0, %s310
      %s327 = sphi 0, %s311
      %s333 = sphi 0, %s335
      %s336 = sphi 0, %s333
      %s337 = sphi 0, %s336
      %s353 = sphi 0, %s337
      %s359 = sphi 0, %s361
      %s362 = sphi 0, %s359
      %s363 = sphi 0, %s362
      %s379 = sphi 0, %s363
      %s385 = sphi 0, %s387
      %s388 = sphi 0, %s385
      %s389 = sphi 0, %s388
      %s405 = sphi 0, %s389
      %s411 = sphi 0, %s413
      %s414 = sphi 0, %s411
      %s415 = sphi 0, %s414
      %s431 = sphi 0, %s415
      %s437 = sphi 0, %s439
      %s440 = sphi 0, %s437
      %s441 = sphi 0, %s440
      %s457 = sphi 0, %s441
      %s463 = sphi 0, %s465
      %s466 = sphi 0, %s463
      %s467 = sphi 0, %s466
      %s483 = sphi 0, %s467
      %s489 = sphi 0, %s491
      %s492 = sphi 0, %s489
      %s493 = sphi 0, %s492
      %s509 = sphi 0, %s493
      %s515 = sphi 0, %s517
      %s518 = sphi 0, %s515
      %s519 = sphi 0, %s518
      %s535 = sphi 0, %s519
      %s539 = sphi 0, %s539
      %s541 = sphi 0, %s539
      %s542 = sphi 0, %s541
      %s556 = sphi 0, %s542
      %s560 = sphi 0, %s560
      %s562 = sphi 0, %s560
      %s563 = sphi 0, %s562
      %s577 = sphi 0, %s563
      %s581 = sphi 0, %s581
      %s583 = sphi 0, %s581
      %s584 = sphi 0, %s583
      %s598 = sphi 0, %s584
      %s602 = sphi 0, %s602
      %s604 = sphi 0, %s602
      %s605 = sphi 0, %s604
      %s619 = sphi 0, %s605
      %s625 = sphi 0, %s627
      %s628 = sphi 0, %s625
      %s629 = sphi 0, %s628
      %s645 = sphi 0, %s629
    $region4: #{classification_forward.1} parent=1 // loop_header_branch
      %43 = sbr.rel (%p41) target = $region8
    $region5: #{classification_forward.1} parent=1 // loop_body
      %s45 = ssub.s32 %s40, 1
      %s46 = ssub.s32 %s40, 2
      %s53 = sadd.s32 1, %s48
      %p54 = scmp.ge.s32.totalorder %s53, 2
      %s55 = scalar_select %p54, 0, %s53
      %s56 = sadd.s32 1, %s47
      %s57 = scalar_select %p54, %s56, %s47
      %p58 = scmp.ge.s32.totalorder %s57, 2
      %s59 = scalar_select %p58, 0, %s57
      %s60 = ssub.s32 %s47, %s59
      %p61 = scmp.eq.s32.totalorder %s60, 0
      %s63 = sadd.s32 %s62, 1
      %s64 = scalar_select %p61, %s62, %s63
      %p67 = pneg %p61
      %p68 = scmp.eq.s32.totalorder %s40, 3
      %p69 = por %p67, %p68
      %p70 = scmp.ne.s32.totalorder %s62, %s65
      %p71 = scmp.eq.s32.totalorder %s40, 0
      %p72 = por %p70, %p71
      %p73 = scmp.ne.s32.totalorder %s62, %s65
      %p74 = scmp.eq.s32.totalorder %s45, 3
      %p75 = por %p73, %p74
      %p76 = scmp.ne.s32.totalorder %s65, %s66
      %p77 = scmp.eq.s32.totalorder %s45, 0
      %p78 = por %p76, %p77
      %p79 = scmp.ne.s32.totalorder %s65, %s66
      %p80 = scmp.eq.s32.totalorder %s46, 3
      %p81 = por %p79, %p80
      %p83 = scmp.ne.s32.totalorder %s66, %s82
      %p84 = scmp.eq.s32.totalorder %s46, 0
      %p85 = por %p83, %p84
      %s86 = ssub.s32 %s47, %s59
      %p87 = scmp.eq.s32.totalorder %s86, 0
      %s89 = sadd.s32 %s88, 1
      %s90 = scalar_select %p87, %s88, %s89
      %p93 = pneg %p87
      %p94 = scmp.eq.s32.totalorder %s40, 3
      %p95 = por %p93, %p94
      %p96 = scmp.ne.s32.totalorder %s88, %s91
      %p97 = scmp.eq.s32.totalorder %s40, 0
      %p98 = por %p96, %p97
      %p99 = scmp.ne.s32.totalorder %s88, %s91
      %p100 = scmp.eq.s32.totalorder %s45, 3
      %p101 = por %p99, %p100
      %p102 = scmp.ne.s32.totalorder %s91, %s92
      %p103 = scmp.eq.s32.totalorder %s45, 0
      %p104 = por %p102, %p103
      %p105 = scmp.ne.s32.totalorder %s91, %s92
      %p106 = scmp.eq.s32.totalorder %s46, 3
      %p107 = por %p105, %p106
      %p109 = scmp.ne.s32.totalorder %s92, %s108
      %p110 = scmp.eq.s32.totalorder %s46, 0
      %p111 = por %p109, %p110
      %s112 = ssub.s32 %s47, %s59
      %p113 = scmp.eq.s32.totalorder %s112, 0
      %s115 = sadd.s32 %s114, 1
      %s116 = scalar_select %p113, %s114, %s115
      %p119 = pneg %p113
      %p120 = scmp.eq.s32.totalorder %s40, 3
      %p121 = por %p119, %p120
      %p122 = scmp.ne.s32.totalorder %s114, %s117
      %p123 = scmp.eq.s32.totalorder %s40, 0
      %p124 = por %p122, %p123
      %p125 = scmp.ne.s32.totalorder %s114, %s117
      %p126 = scmp.eq.s32.totalorder %s45, 3
      %p127 = por %p125, %p126
      %p128 = scmp.ne.s32.totalorder %s117, %s118
      %p129 = scmp.eq.s32.totalorder %s45, 0
      %p130 = por %p128, %p129
      %p131 = scmp.ne.s32.totalorder %s117, %s118
      %p132 = scmp.eq.s32.totalorder %s46, 3
      %p133 = por %p131, %p132
      %p135 = scmp.ne.s32.totalorder %s118, %s134
      %p136 = scmp.eq.s32.totalorder %s46, 0
      %p137 = por %p135, %p136
      %s138 = ssub.s32 %s47, %s59
      %p139 = scmp.eq.s32.totalorder %s138, 0
      %s141 = sadd.s32 %s140, 1
      %s142 = scalar_select %p139, %s140, %s141
      %p145 = pneg %p139
      %p146 = scmp.eq.s32.totalorder %s40, 3
      %p147 = por %p145, %p146
      %p148 = scmp.ne.s32.totalorder %s140, %s143
      %p149 = scmp.eq.s32.totalorder %s40, 0
      %p150 = por %p148, %p149
      %p151 = scmp.ne.s32.totalorder %s140, %s143
      %p152 = scmp.eq.s32.totalorder %s45, 3
      %p153 = por %p151, %p152
      %p154 = scmp.ne.s32.totalorder %s143, %s144
      %p155 = scmp.eq.s32.totalorder %s45, 0
      %p156 = por %p154, %p155
      %p157 = scmp.ne.s32.totalorder %s143, %s144
      %p158 = scmp.eq.s32.totalorder %s46, 3
      %p159 = por %p157, %p158
      %p161 = scmp.ne.s32.totalorder %s144, %s160
      %p162 = scmp.eq.s32.totalorder %s46, 0
      %p163 = por %p161, %p162
      %s165 = sadd.s32 %s164, 1
      %p168 = scmp.eq.s32.totalorder %s40, 3
      %p169 = scmp.ne.s32.totalorder %s164, %s166
      %p170 = scmp.eq.s32.totalorder %s40, 0
      %p171 = por %p169, %p170
      %p172 = scmp.ne.s32.totalorder %s164, %s166
      %p173 = scmp.eq.s32.totalorder %s45, 3
      %p174 = por %p172, %p173
      %p175 = scmp.ne.s32.totalorder %s166, %s167
      %p176 = scmp.eq.s32.totalorder %s45, 0
      %p177 = por %p175, %p176
      %p178 = scmp.ne.s32.totalorder %s166, %s167
      %p179 = scmp.eq.s32.totalorder %s46, 3
      %p180 = por %p178, %p179
      %p182 = scmp.ne.s32.totalorder %s167, %s181
      %p183 = scmp.eq.s32.totalorder %s46, 0
      %p184 = por %p182, %p183
      %s186 = sadd.s32 %s185, 1
      %p189 = scmp.eq.s32.totalorder %s40, 3
      %p190 = scmp.ne.s32.totalorder %s185, %s187
      %p191 = scmp.eq.s32.totalorder %s40, 0
      %p192 = por %p190, %p191
      %p193 = scmp.ne.s32.totalorder %s185, %s187
      %p194 = scmp.eq.s32.totalorder %s45, 3
      %p195 = por %p193, %p194
      %p196 = scmp.ne.s32.totalorder %s187, %s188
      %p197 = scmp.eq.s32.totalorder %s45, 0
      %p198 = por %p196, %p197
      %p199 = scmp.ne.s32.totalorder %s187, %s188
      %p200 = scmp.eq.s32.totalorder %s46, 3
      %p201 = por %p199, %p200
      %p203 = scmp.ne.s32.totalorder %s188, %s202
      %p204 = scmp.eq.s32.totalorder %s46, 0
      %p205 = por %p203, %p204
      %s207 = sadd.s32 %s206, 1
      %p210 = scmp.eq.s32.totalorder %s40, 3
      %p211 = scmp.ne.s32.totalorder %s206, %s208
      %p212 = scmp.eq.s32.totalorder %s40, 0
      %p213 = por %p211, %p212
      %p214 = scmp.ne.s32.totalorder %s206, %s208
      %p215 = scmp.eq.s32.totalorder %s45, 3
      %p216 = por %p214, %p215
      %p217 = scmp.ne.s32.totalorder %s208, %s209
      %p218 = scmp.eq.s32.totalorder %s45, 0
      %p219 = por %p217, %p218
      %p220 = scmp.ne.s32.totalorder %s208, %s209
      %p221 = scmp.eq.s32.totalorder %s46, 3
      %p222 = por %p220, %p221
      %p224 = scmp.ne.s32.totalorder %s209, %s223
      %p225 = scmp.eq.s32.totalorder %s46, 0
      %p226 = por %p224, %p225
      %s227 = ssub.s32 %s48, %s55
      %p228 = scmp.eq.s32.totalorder %s227, 0
      %s230 = sadd.s32 %s229, 1
      %s231 = scalar_select %p228, %s229, %s230
      %p234 = pneg %p228
      %p235 = scmp.eq.s32.totalorder %s40, 3
      %p236 = por %p234, %p235
      %p237 = scmp.ne.s32.totalorder %s229, %s232
      %p238 = scmp.eq.s32.totalorder %s40, 0
      %p239 = por %p237, %p238
      %p240 = scmp.ne.s32.totalorder %s229, %s232
      %p241 = scmp.eq.s32.totalorder %s45, 3
      %p242 = por %p240, %p241
      %p243 = scmp.ne.s32.totalorder %s232, %s233
      %p244 = scmp.eq.s32.totalorder %s45, 0
      %p245 = por %p243, %p244
      %p246 = scmp.ne.s32.totalorder %s232, %s233
      %p247 = scmp.eq.s32.totalorder %s46, 3
      %p248 = por %p246, %p247
      %p250 = scmp.ne.s32.totalorder %s233, %s249
      %p251 = scmp.eq.s32.totalorder %s46, 0
      %p252 = por %p250, %p251
      %s253 = ssub.s32 %s48, %s55
      %p254 = scmp.eq.s32.totalorder %s253, 0
      %s256 = sadd.s32 %s255, 1
      %s257 = scalar_select %p254, %s255, %s256
      %p260 = pneg %p254
      %p261 = scmp.eq.s32.totalorder %s40, 3
      %p262 = por %p260, %p261
      %p263 = scmp.ne.s32.totalorder %s255, %s258
      %p264 = scmp.eq.s32.totalorder %s40, 0
      %p265 = por %p263, %p264
      %p266 = scmp.ne.s32.totalorder %s255, %s258
      %p267 = scmp.eq.s32.totalorder %s45, 3
      %p268 = por %p266, %p267
      %p269 = scmp.ne.s32.totalorder %s258, %s259
      %p270 = scmp.eq.s32.totalorder %s45, 0
      %p271 = por %p269, %p270
      %p272 = scmp.ne.s32.totalorder %s258, %s259
      %p273 = scmp.eq.s32.totalorder %s46, 3
      %p274 = por %p272, %p273
      %p276 = scmp.ne.s32.totalorder %s259, %s275
      %p277 = scmp.eq.s32.totalorder %s46, 0
      %p278 = por %p276, %p277
      %s279 = ssub.s32 %s48, %s55
      %p280 = scmp.eq.s32.totalorder %s279, 0
      %s282 = sadd.s32 %s281, 1
      %s283 = scalar_select %p280, %s281, %s282
      %p286 = pneg %p280
      %p287 = scmp.eq.s32.totalorder %s40, 3
      %p288 = por %p286, %p287
      %p289 = scmp.ne.s32.totalorder %s281, %s284
      %p290 = scmp.eq.s32.totalorder %s40, 0
      %p291 = por %p289, %p290
      %p292 = scmp.ne.s32.totalorder %s281, %s284
      %p293 = scmp.eq.s32.totalorder %s45, 3
      %p294 = por %p292, %p293
      %p295 = scmp.ne.s32.totalorder %s284, %s285
      %p296 = scmp.eq.s32.totalorder %s45, 0
      %p297 = por %p295, %p296
      %p298 = scmp.ne.s32.totalorder %s284, %s285
      %p299 = scmp.eq.s32.totalorder %s46, 3
      %p300 = por %p298, %p299
      %p302 = scmp.ne.s32.totalorder %s285, %s301
      %p303 = scmp.eq.s32.totalorder %s46, 0
      %p304 = por %p302, %p303
      %s305 = ssub.s32 %s48, %s55
      %p306 = scmp.eq.s32.totalorder %s305, 0
      %s308 = sadd.s32 %s307, 1
      %s309 = scalar_select %p306, %s307, %s308
      %p312 = pneg %p306
      %p313 = scmp.eq.s32.totalorder %s40, 3
      %p314 = por %p312, %p313
      %p315 = scmp.ne.s32.totalorder %s307, %s310
      %p316 = scmp.eq.s32.totalorder %s40, 0
      %p317 = por %p315, %p316
      %p318 = scmp.ne.s32.totalorder %s307, %s310
      %p319 = scmp.eq.s32.totalorder %s45, 3
      %p320 = por %p318, %p319
      %p321 = scmp.ne.s32.totalorder %s310, %s311
      %p322 = scmp.eq.s32.totalorder %s45, 0
      %p323 = por %p321, %p322
      %p324 = scmp.ne.s32.totalorder %s310, %s311
      %p325 = scmp.eq.s32.totalorder %s46, 3
      %p326 = por %p324, %p325
      %p328 = scmp.ne.s32.totalorder %s311, %s327
      %p329 = scmp.eq.s32.totalorder %s46, 0
      %p330 = por %p328, %p329
      %s331 = ssub.s32 %s48, %s55
      %p332 = scmp.eq.s32.totalorder %s331, 0
      %s334 = sadd.s32 %s333, 1
      %s335 = scalar_select %p332, %s333, %s334
      %p338 = pneg %p332
      %p339 = scmp.eq.s32.totalorder %s40, 3
      %p340 = por %p338, %p339
      %p341 = scmp.ne.s32.totalorder %s333, %s336
      %p342 = scmp.eq.s32.totalorder %s40, 0
      %p343 = por %p341, %p342
      %p344 = scmp.ne.s32.totalorder %s333, %s336
      %p345 = scmp.eq.s32.totalorder %s45, 3
      %p346 = por %p344, %p345
      %p347 = scmp.ne.s32.totalorder %s336, %s337
      %p348 = scmp.eq.s32.totalorder %s45, 0
      %p349 = por %p347, %p348
      %p350 = scmp.ne.s32.totalorder %s336, %s337
      %p351 = scmp.eq.s32.totalorder %s46, 3
      %p352 = por %p350, %p351
      %p354 = scmp.ne.s32.totalorder %s337, %s353
      %p355 = scmp.eq.s32.totalorder %s46, 0
      %p356 = por %p354, %p355
      %s357 = ssub.s32 %s48, %s55
      %p358 = scmp.eq.s32.totalorder %s357, 0
      %s360 = sadd.s32 %s359, 1
      %s361 = scalar_select %p358, %s359, %s360
      %p364 = pneg %p358
      %p365 = scmp.eq.s32.totalorder %s40, 3
      %p366 = por %p364, %p365
      %p367 = scmp.ne.s32.totalorder %s359, %s362
      %p368 = scmp.eq.s32.totalorder %s40, 0
      %p369 = por %p367, %p368
      %p370 = scmp.ne.s32.totalorder %s359, %s362
      %p371 = scmp.eq.s32.totalorder %s45, 3
      %p372 = por %p370, %p371
      %p373 = scmp.ne.s32.totalorder %s362, %s363
      %p374 = scmp.eq.s32.totalorder %s45, 0
      %p375 = por %p373, %p374
      %p376 = scmp.ne.s32.totalorder %s362, %s363
      %p377 = scmp.eq.s32.totalorder %s46, 3
      %p378 = por %p376, %p377
      %p380 = scmp.ne.s32.totalorder %s363, %s379
      %p381 = scmp.eq.s32.totalorder %s46, 0
      %p382 = por %p380, %p381
      %s383 = ssub.s32 %s48, %s55
      %p384 = scmp.eq.s32.totalorder %s383, 0
      %s386 = sadd.s32 %s385, 1
      %s387 = scalar_select %p384, %s385, %s386
      %p390 = pneg %p384
      %p391 = scmp.eq.s32.totalorder %s40, 3
      %p392 = por %p390, %p391
      %p393 = scmp.ne.s32.totalorder %s385, %s388
      %p394 = scmp.eq.s32.totalorder %s40, 0
      %p395 = por %p393, %p394
      %p396 = scmp.ne.s32.totalorder %s385, %s388
      %p397 = scmp.eq.s32.totalorder %s45, 3
      %p398 = por %p396, %p397
      %p399 = scmp.ne.s32.totalorder %s388, %s389
      %p400 = scmp.eq.s32.totalorder %s45, 0
      %p401 = por %p399, %p400
      %p402 = scmp.ne.s32.totalorder %s388, %s389
      %p403 = scmp.eq.s32.totalorder %s46, 3
      %p404 = por %p402, %p403
      %p406 = scmp.ne.s32.totalorder %s389, %s405
      %p407 = scmp.eq.s32.totalorder %s46, 0
      %p408 = por %p406, %p407
      %s409 = ssub.s32 %s48, %s55
      %p410 = scmp.eq.s32.totalorder %s409, 0
      %s412 = sadd.s32 %s411, 1
      %s413 = scalar_select %p410, %s411, %s412
      %p416 = pneg %p410
      %p417 = scmp.eq.s32.totalorder %s40, 3
      %p418 = por %p416, %p417
      %p419 = scmp.ne.s32.totalorder %s411, %s414
      %p420 = scmp.eq.s32.totalorder %s40, 0
      %p421 = por %p419, %p420
      %p422 = scmp.ne.s32.totalorder %s411, %s414
      %p423 = scmp.eq.s32.totalorder %s45, 3
      %p424 = por %p422, %p423
      %p425 = scmp.ne.s32.totalorder %s414, %s415
      %p426 = scmp.eq.s32.totalorder %s45, 0
      %p427 = por %p425, %p426
      %p428 = scmp.ne.s32.totalorder %s414, %s415
      %p429 = scmp.eq.s32.totalorder %s46, 3
      %p430 = por %p428, %p429
      %p432 = scmp.ne.s32.totalorder %s415, %s431
      %p433 = scmp.eq.s32.totalorder %s46, 0
      %p434 = por %p432, %p433
      %s435 = ssub.s32 %s48, %s55
      %p436 = scmp.eq.s32.totalorder %s435, 0
      %s438 = sadd.s32 %s437, 1
      %s439 = scalar_select %p436, %s437, %s438
      %p442 = pneg %p436
      %p443 = scmp.eq.s32.totalorder %s40, 3
      %p444 = por %p442, %p443
      %p445 = scmp.ne.s32.totalorder %s437, %s440
      %p446 = scmp.eq.s32.totalorder %s40, 0
      %p447 = por %p445, %p446
      %p448 = scmp.ne.s32.totalorder %s437, %s440
      %p449 = scmp.eq.s32.totalorder %s45, 3
      %p450 = por %p448, %p449
      %p451 = scmp.ne.s32.totalorder %s440, %s441
      %p452 = scmp.eq.s32.totalorder %s45, 0
      %p453 = por %p451, %p452
      %p454 = scmp.ne.s32.totalorder %s440, %s441
      %p455 = scmp.eq.s32.totalorder %s46, 3
      %p456 = por %p454, %p455
      %p458 = scmp.ne.s32.totalorder %s441, %s457
      %p459 = scmp.eq.s32.totalorder %s46, 0
      %p460 = por %p458, %p459
      %s461 = ssub.s32 %s48, %s55
      %p462 = scmp.eq.s32.totalorder %s461, 0
      %s464 = sadd.s32 %s463, 1
      %s465 = scalar_select %p462, %s463, %s464
      %p468 = pneg %p462
      %p469 = scmp.eq.s32.totalorder %s40, 3
      %p470 = por %p468, %p469
      %p471 = scmp.ne.s32.totalorder %s463, %s466
      %p472 = scmp.eq.s32.totalorder %s40, 0
      %p473 = por %p471, %p472
      %p474 = scmp.ne.s32.totalorder %s463, %s466
      %p475 = scmp.eq.s32.totalorder %s45, 3
      %p476 = por %p474, %p475
      %p477 = scmp.ne.s32.totalorder %s466, %s467
      %p478 = scmp.eq.s32.totalorder %s45, 0
      %p479 = por %p477, %p478
      %p480 = scmp.ne.s32.totalorder %s466, %s467
      %p481 = scmp.eq.s32.totalorder %s46, 3
      %p482 = por %p480, %p481
      %p484 = scmp.ne.s32.totalorder %s467, %s483
      %p485 = scmp.eq.s32.totalorder %s46, 0
      %p486 = por %p484, %p485
      %s487 = ssub.s32 %s48, %s55
      %p488 = scmp.eq.s32.totalorder %s487, 0
      %s490 = sadd.s32 %s489, 1
      %s491 = scalar_select %p488, %s489, %s490
      %p494 = pneg %p488
      %p495 = scmp.eq.s32.totalorder %s40, 3
      %p496 = por %p494, %p495
      %p497 = scmp.ne.s32.totalorder %s489, %s492
      %p498 = scmp.eq.s32.totalorder %s40, 0
      %p499 = por %p497, %p498
      %p500 = scmp.ne.s32.totalorder %s489, %s492
      %p501 = scmp.eq.s32.totalorder %s45, 3
      %p502 = por %p500, %p501
      %p503 = scmp.ne.s32.totalorder %s492, %s493
      %p504 = scmp.eq.s32.totalorder %s45, 0
      %p505 = por %p503, %p504
      %p506 = scmp.ne.s32.totalorder %s492, %s493
      %p507 = scmp.eq.s32.totalorder %s46, 3
      %p508 = por %p506, %p507
      %p510 = scmp.ne.s32.totalorder %s493, %s509
      %p511 = scmp.eq.s32.totalorder %s46, 0
      %p512 = por %p510, %p511
      %s513 = ssub.s32 %s48, %s55
      %p514 = scmp.eq.s32.totalorder %s513, 0
      %s516 = sadd.s32 %s515, 1
      %s517 = scalar_select %p514, %s515, %s516
      %p520 = pneg %p514
      %p521 = scmp.eq.s32.totalorder %s40, 3
      %p522 = por %p520, %p521
      %p523 = scmp.ne.s32.totalorder %s515, %s518
      %p524 = scmp.eq.s32.totalorder %s40, 0
      %p525 = por %p523, %p524
      %p526 = scmp.ne.s32.totalorder %s515, %s518
      %p527 = scmp.eq.s32.totalorder %s45, 3
      %p528 = por %p526, %p527
      %p529 = scmp.ne.s32.totalorder %s518, %s519
      %p530 = scmp.eq.s32.totalorder %s45, 0
      %p531 = por %p529, %p530
      %p532 = scmp.ne.s32.totalorder %s518, %s519
      %p533 = scmp.eq.s32.totalorder %s46, 3
      %p534 = por %p532, %p533
      %p536 = scmp.ne.s32.totalorder %s519, %s535
      %p537 = scmp.eq.s32.totalorder %s46, 0
      %p538 = por %p536, %p537
      %s540 = sadd.s32 %s539, 1
      %p543 = scmp.eq.s32.totalorder %s40, 3
      %p544 = scmp.ne.s32.totalorder %s539, %s541
      %p545 = scmp.eq.s32.totalorder %s40, 0
      %p546 = por %p544, %p545
      %p547 = scmp.ne.s32.totalorder %s539, %s541
      %p548 = scmp.eq.s32.totalorder %s45, 3
      %p549 = por %p547, %p548
      %p550 = scmp.ne.s32.totalorder %s541, %s542
      %p551 = scmp.eq.s32.totalorder %s45, 0
      %p552 = por %p550, %p551
      %p553 = scmp.ne.s32.totalorder %s541, %s542
      %p554 = scmp.eq.s32.totalorder %s46, 3
      %p555 = por %p553, %p554
      %p557 = scmp.ne.s32.totalorder %s542, %s556
      %p558 = scmp.eq.s32.totalorder %s46, 0
      %p559 = por %p557, %p558
      %s561 = sadd.s32 %s560, 1
      %p564 = scmp.eq.s32.totalorder %s40, 3
      %p565 = scmp.ne.s32.totalorder %s560, %s562
      %p566 = scmp.eq.s32.totalorder %s40, 0
      %p567 = por %p565, %p566
      %p568 = scmp.ne.s32.totalorder %s560, %s562
      %p569 = scmp.eq.s32.totalorder %s45, 3
      %p570 = por %p568, %p569
      %p571 = scmp.ne.s32.totalorder %s562, %s563
      %p572 = scmp.eq.s32.totalorder %s45, 0
      %p573 = por %p571, %p572
      %p574 = scmp.ne.s32.totalorder %s562, %s563
      %p575 = scmp.eq.s32.totalorder %s46, 3
      %p576 = por %p574, %p575
      %p578 = scmp.ne.s32.totalorder %s563, %s577
      %p579 = scmp.eq.s32.totalorder %s46, 0
      %p580 = por %p578, %p579
      %s582 = sadd.s32 %s581, 1
      %p585 = scmp.eq.s32.totalorder %s40, 3
      %p586 = scmp.ne.s32.totalorder %s581, %s583
      %p587 = scmp.eq.s32.totalorder %s40, 0
      %p588 = por %p586, %p587
      %p589 = scmp.ne.s32.totalorder %s581, %s583
      %p590 = scmp.eq.s32.totalorder %s45, 3
      %p591 = por %p589, %p590
      %p592 = scmp.ne.s32.totalorder %s583, %s584
      %p593 = scmp.eq.s32.totalorder %s45, 0
      %p594 = por %p592, %p593
      %p595 = scmp.ne.s32.totalorder %s583, %s584
      %p596 = scmp.eq.s32.totalorder %s46, 3
      %p597 = por %p595, %p596
      %p599 = scmp.ne.s32.totalorder %s584, %s598
      %p600 = scmp.eq.s32.totalorder %s46, 0
      %p601 = por %p599, %p600
      %s603 = sadd.s32 %s602, 1
      %p606 = scmp.eq.s32.totalorder %s40, 3
      %p607 = scmp.ne.s32.totalorder %s602, %s604
      %p608 = scmp.eq.s32.totalorder %s40, 0
      %p609 = por %p607, %p608
      %p610 = scmp.ne.s32.totalorder %s602, %s604
      %p611 = scmp.eq.s32.totalorder %s45, 3
      %p612 = por %p610, %p611
      %p613 = scmp.ne.s32.totalorder %s604, %s605
      %p614 = scmp.eq.s32.totalorder %s45, 0
      %p615 = por %p613, %p614
      %p616 = scmp.ne.s32.totalorder %s604, %s605
      %p617 = scmp.eq.s32.totalorder %s46, 3
      %p618 = por %p616, %p617
      %p620 = scmp.ne.s32.totalorder %s605, %s619
      %p621 = scmp.eq.s32.totalorder %s46, 0
      %p622 = por %p620, %p621
      %s623 = ssub.s32 %s47, %s59
      %p624 = scmp.eq.s32.totalorder %s623, 0
      %s626 = sadd.s32 %s625, 1
      %s627 = scalar_select %p624, %s625, %s626
      %p630 = pneg %p624
      %p631 = scmp.eq.s32.totalorder %s40, 3
      %p632 = por %p630, %p631
      %p633 = scmp.ne.s32.totalorder %s625, %s628
      %p634 = scmp.eq.s32.totalorder %s40, 0
      %p635 = por %p633, %p634
      %p636 = scmp.ne.s32.totalorder %s625, %s628
      %p637 = scmp.eq.s32.totalorder %s45, 3
      %p638 = por %p636, %p637
      %p639 = scmp.ne.s32.totalorder %s628, %s629
      %p640 = scmp.eq.s32.totalorder %s45, 0
      %p641 = por %p639, %p640
      %p642 = scmp.ne.s32.totalorder %s628, %s629
      %p643 = scmp.eq.s32.totalorder %s46, 3
      %p644 = por %p642, %p643
      %p646 = scmp.ne.s32.totalorder %s629, %s645
      %p647 = scmp.eq.s32.totalorder %s46, 0
      %p648 = por %p646, %p647
      %p649 = scmp.le.s32.totalorder 1, %s40
      %p650 = scmp.lt.s32.totalorder %s40, 5
      %p651 = pnand %p649, %p650
      %p652 = pneg %p651
      // Predicated region
      $region9: #{classification_forward.1} parent=5 // pred_check
        _
      $region10: #{classification_forward.1} parent=5 // pred_check_branch
        %654 = sbr.rel (%p651) target = $region12
      $region11: #{classification_forward.1} parent=5 // pred_region
        %s655 = ssub.s32 %s40, 1
        // Predicated region
        $region13: #{classification_forward.1} parent=11 // pred_check
          %p656 = pneg %p177
        $region14: #{classification_forward.1} parent=11 // pred_check_branch
          %658 = sbr.rel (%p656) target = $region16
        $region15: #{classification_forward.1} parent=11 // pred_region
          %s660 = ssub.s32 3072, 3072
          %661 = vsyncadd [#allocation4], %s660
          %s662 = sshll.u32 [#allocation3], 4
          %s663 = int_to_ptr.vmem [resolvable:$true] %s662
          %668 = dma.hbm_to_vmem [thread:$0]  %s4, 3072, %s663, [#allocation4], 64, 64, 4
        $region16: #{classification_forward.1} parent=11 // pred_fallthru
          _
        // Predicated region
        $region17: #{classification_forward.1} parent=11 // pred_check
          %p669 = pneg %p198
        $region18: #{classification_forward.1} parent=11 // pred_check_branch
          %671 = sbr.rel (%p669) target = $region20
        $region19: #{classification_forward.1} parent=11 // pred_region
          _
        $region20: #{classification_forward.1} parent=11 // pred_fallthru
          _
        // Predicated region
        $region21: #{classification_forward.1} parent=11 // pred_check
          %p672 = pneg %p219
        $region22: #{classification_forward.1} parent=11 // pred_check_branch
          %674 = sbr.rel (%p672) target = $region24
        $region23: #{classification_forward.1} parent=11 // pred_region
          _
        $region24: #{classification_forward.1} parent=11 // pred_fallthru
          _
        // Predicated region
        $region25: #{classification_forward.1} parent=11 // pred_check
          %p675 = pneg %p552
        $region26: #{classification_forward.1} parent=11 // pred_check_branch
          %677 = sbr.rel (%p675) target = $region28
        $region27: #{classification_forward.1} parent=11 // pred_region
          _
        $region28: #{classification_forward.1} parent=11 // pred_fallthru
          _
        // Predicated region
        $region29: #{classification_forward.1} parent=11 // pred_check
          %p678 = pneg %p573
        $region30: #{classification_forward.1} parent=11 // pred_check_branch
          %680 = sbr.rel (%p678) target = $region32
        $region31: #{classification_forward.1} parent=11 // pred_region
          _
        $region32: #{classification_forward.1} parent=11 // pred_fallthru
          _
        // Predicated region
        $region33: #{classification_forward.1} parent=11 // pred_check
          %p681 = pneg %p594
        $region34: #{classification_forward.1} parent=11 // pred_check_branch
          %683 = sbr.rel (%p681) target = $region36
        $region35: #{classification_forward.1} parent=11 // pred_region
          %s685 = ssub.s32 1024, 1024
          %686 = vsyncadd [#allocation13], %s685
          %s687 = sshll.u32 [#allocation12], 4
          %s688 = int_to_ptr.vmem [resolvable:$true] %s687
          %693 = dma.hbm_to_vmem [thread:$0]  %s21, 1024, %s688, [#allocation13], 64, 64, 4
        $region36: #{classification_forward.1} parent=11 // pred_fallthru
          _
        // Predicated region
        $region37: #{classification_forward.1} parent=11 // pred_check
          %p694 = pneg %p615
        $region38: #{classification_forward.1} parent=11 // pred_check_branch
          %696 = sbr.rel (%p694) target = $region40
        $region39: #{classification_forward.1} parent=11 // pred_region
          _
        $region40: #{classification_forward.1} parent=11 // pred_fallthru
          _
      $region12: #{classification_forward.1} parent=5 // pred_fallthru
        _
      %p697 = scmp.lt.s32.totalorder %s40, 4
      // Predicated region
      $region41: #{classification_forward.1} parent=5 // pred_check
        %p698 = pneg %p697
      $region42: #{classification_forward.1} parent=5 // pred_check_branch
        %700 = sbr.rel (%p698) target = $region44
      $region43: #{classification_forward.1} parent=5 // pred_region
        // Predicated region
        $region45: #{classification_forward.1} parent=43 // pred_check
          %p701 = pneg %p72
        $region46: #{classification_forward.1} parent=43 // pred_check_branch
          %703 = sbr.rel (%p701) target = $region48
        $region47: #{classification_forward.1} parent=43 // pred_region
          %p704 = scmp.lt.s32.totalorder %s47, 1
          %s705 = scalar_select %p704, %s47, 1
          %s706 = smul.addr %s705, 8
          %s707 = scalar_lea.vmem %s0, %s706
        $region48: #{classification_forward.1} parent=43 // pred_fallthru
          _
        // Predicated region
        $region49: #{classification_forward.1} parent=43 // pred_check
          %p708 = pneg %p98
        $region50: #{classification_forward.1} parent=43 // pred_check_branch
          %710 = sbr.rel (%p708) target = $region52
        $region51: #{classification_forward.1} parent=43 // pred_region
          %p711 = scmp.lt.s32.totalorder %s47, 1
          %s712 = scalar_select %p711, %s47, 1
          %s713 = smul.addr %s712, 8
          %s714 = scalar_lea.vmem %s1, %s713
        $region52: #{classification_forward.1} parent=43 // pred_fallthru
          _
        // Predicated region
        $region53: #{classification_forward.1} parent=43 // pred_check
          %p715 = pneg %p124
        $region54: #{classification_forward.1} parent=43 // pred_check_branch
          %717 = sbr.rel (%p715) target = $region56
        $region55: #{classification_forward.1} parent=43 // pred_region
          %p718 = scmp.lt.s32.totalorder %s47, 1
          %s719 = scalar_select %p718, %s47, 1
          %s720 = smul.addr %s719, 8
          %s721 = scalar_lea.vmem %s2, %s720
        $region56: #{classification_forward.1} parent=43 // pred_fallthru
          _
        // Predicated region
        $region57: #{classification_forward.1} parent=43 // pred_check
          %p722 = pneg %p150
        $region58: #{classification_forward.1} parent=43 // pred_check_branch
          %724 = sbr.rel (%p722) target = $region60
        $region59: #{classification_forward.1} parent=43 // pred_region
          %p725 = scmp.lt.s32.totalorder %s47, 1
          %s726 = scalar_select %p725, %s47, 1
          %s727 = scalar_lea.vmem %s3, %s726
        $region60: #{classification_forward.1} parent=43 // pred_fallthru
          _
        // Predicated region
        $region61: #{classification_forward.1} parent=43 // pred_check
          %p728 = pneg %p239
        $region62: #{classification_forward.1} parent=43 // pred_check_branch
          %730 = sbr.rel (%p728) target = $region64
        $region63: #{classification_forward.1} parent=43 // pred_region
          %s731 = sand.u32 %s40, 1
          %s732 = scalar_lea.sflag [#allocation7], %s731
          %s733 = sand.u32 %s229, 1
          %s734 = smul.addr %s733, 192
          %s735 = scalar_lea.vmem [#allocation6], %s734
          %s737 = ssub.s32 3072, 3072
          %738 = vsyncadd %s732, %s737
          %s739 = smul.addr %s48, 48
          %s740 = smul.addr %s739, 64
          %s741 = scalar_lea.hbm %s7, %s740
          %s742 = sshll.u32 %s735, 4
          %s743 = int_to_ptr.vmem [resolvable:$true] %s742
          %748 = dma.hbm_to_vmem [thread:$0]  %s741, 3072, %s743, %s732, 192, 192, 12
        $region64: #{classification_forward.1} parent=43 // pred_fallthru
          _
        // Predicated region
        $region65: #{classification_forward.1} parent=43 // pred_check
          %p749 = pneg %p265
        $region66: #{classification_forward.1} parent=43 // pred_check_branch
          %751 = sbr.rel (%p749) target = $region68
        $region67: #{classification_forward.1} parent=43 // pred_region
          %p752 = scmp.lt.s32.totalorder %s48, 1
          %s753 = scalar_select %p752, %s48, 1
          %s754 = smul.addr %s753, 3
          %s755 = scalar_lea.vmem %s8, %s754
        $region68: #{classification_forward.1} parent=43 // pred_fallthru
          _
        // Predicated region
        $region69: #{classification_forward.1} parent=43 // pred_check
          %p756 = pneg %p291
        $region70: #{classification_forward.1} parent=43 // pred_check_branch
          %758 = sbr.rel (%p756) target = $region72
        $region71: #{classification_forward.1} parent=43 // pred_region
          %s759 = sand.u32 %s40, 1
          %s760 = scalar_lea.sflag [#allocation7], %s759
          %s761 = sand.u32 %s281, 1
          %s762 = smul.addr %s761, 64
          %s763 = scalar_lea.vmem [#allocation8], %s762
          %s765 = ssub.s32 1024, 1024
          %766 = vsyncadd %s760, %s765
          %s767 = smul.addr %s48, 16
          %s768 = smul.addr %s767, 64
          %s769 = scalar_lea.hbm %s9, %s768
          %s770 = sshll.u32 %s763, 4
          %s771 = int_to_ptr.vmem [resolvable:$true] %s770
          %776 = dma.hbm_to_vmem [thread:$0]  %s769, 1024, %s771, %s760, 64, 64, 4
        $region72: #{classification_forward.1} parent=43 // pred_fallthru
          _
        // Predicated region
        $region73: #{classification_forward.1} parent=43 // pred_check
          %p777 = pneg %p317
        $region74: #{classification_forward.1} parent=43 // pred_check_branch
          %779 = sbr.rel (%p777) target = $region76
        $region75: #{classification_forward.1} parent=43 // pred_region
          %p780 = scmp.lt.s32.totalorder %s48, 1
          %s781 = scalar_select %p780, %s48, 1
          %s782 = scalar_lea.vmem %s10, %s781
        $region76: #{classification_forward.1} parent=43 // pred_fallthru
          _
        // Predicated region
        $region77: #{classification_forward.1} parent=43 // pred_check
          %p783 = pneg %p343
        $region78: #{classification_forward.1} parent=43 // pred_check_branch
          %785 = sbr.rel (%p783) target = $region80
        $region79: #{classification_forward.1} parent=43 // pred_region
          %p786 = scmp.lt.s32.totalorder %s48, 1
          %s787 = scalar_select %p786, %s48, 1
          %s788 = scalar_lea.vmem %s11, %s787
        $region80: #{classification_forward.1} parent=43 // pred_fallthru
          _
        // Predicated region
        $region81: #{classification_forward.1} parent=43 // pred_check
          %p789 = pneg %p369
        $region82: #{classification_forward.1} parent=43 // pred_check_branch
          %791 = sbr.rel (%p789) target = $region84
        $region83: #{classification_forward.1} parent=43 // pred_region
          %p792 = scmp.lt.s32.totalorder %s48, 1
          %s793 = scalar_select %p792, %s48, 1
          %s794 = scalar_lea.vmem %s12, %s793
        $region84: #{classification_forward.1} parent=43 // pred_fallthru
          _
        // Predicated region
        $region85: #{classification_forward.1} parent=43 // pred_check
          %p795 = pneg %p395
        $region86: #{classification_forward.1} parent=43 // pred_check_branch
          %797 = sbr.rel (%p795) target = $region88
        $region87: #{classification_forward.1} parent=43 // pred_region
          %s798 = sand.u32 %s40, 1
          %s799 = scalar_lea.sflag [#allocation10], %s798
          %s800 = sand.u32 %s385, 1
          %s801 = smul.addr %s800, 128
          %s802 = scalar_lea.vmem [#allocation9], %s801
          %s804 = ssub.s32 2048, 2048
          %805 = vsyncadd %s799, %s804
          %s806 = smul.addr %s48, 32
          %s807 = smul.addr %s806, 64
          %s808 = scalar_lea.hbm %s13, %s807
          %s809 = sshll.u32 %s802, 4
          %s810 = int_to_ptr.vmem [resolvable:$true] %s809
          %815 = dma.hbm_to_vmem [thread:$0]  %s808, 2048, %s810, %s799, 128, 128, 8
        $region88: #{classification_forward.1} parent=43 // pred_fallthru
          _
        // Predicated region
        $region89: #{classification_forward.1} parent=43 // pred_check
          %p816 = pneg %p421
        $region90: #{classification_forward.1} parent=43 // pred_check_branch
          %818 = sbr.rel (%p816) target = $region92
        $region91: #{classification_forward.1} parent=43 // pred_region
          %p819 = scmp.lt.s32.totalorder %s48, 1
          %s820 = scalar_select %p819, %s48, 1
          %s821 = smul.addr %s820, 2
          %s822 = scalar_lea.vmem %s14, %s821
        $region92: #{classification_forward.1} parent=43 // pred_fallthru
          _
        // Predicated region
        $region93: #{classification_forward.1} parent=43 // pred_check
          %p823 = pneg %p447
        $region94: #{classification_forward.1} parent=43 // pred_check_branch
          %825 = sbr.rel (%p823) target = $region96
        $region95: #{classification_forward.1} parent=43 // pred_region
          %s826 = sand.u32 %s40, 1
          %s827 = scalar_lea.sflag [#allocation10], %s826
          %s828 = sand.u32 %s437, 1
          %s829 = smul.addr %s828, 128
          %s830 = scalar_lea.vmem [#allocation11], %s829
          %s832 = ssub.s32 2048, 2048
          %833 = vsyncadd %s827, %s832
          %s834 = smul.addr %s48, 32
          %s835 = smul.addr %s834, 64
          %s836 = scalar_lea.hbm %s15, %s835
          %s837 = sshll.u32 %s830, 4
          %s838 = int_to_ptr.vmem [resolvable:$true] %s837
          %843 = dma.hbm_to_vmem [thread:$0]  %s836, 2048, %s838, %s827, 64, 64, 4
        $region96: #{classification_forward.1} parent=43 // pred_fallthru
          _
        // Predicated region
        $region97: #{classification_forward.1} parent=43 // pred_check
          %p844 = pneg %p473
        $region98: #{classification_forward.1} parent=43 // pred_check_branch
          %846 = sbr.rel (%p844) target = $region100
        $region99: #{classification_forward.1} parent=43 // pred_region
          %p847 = scmp.lt.s32.totalorder %s48, 1
          %s848 = scalar_select %p847, %s48, 1
          %s849 = scalar_lea.vmem %s16, %s848
        $region100: #{classification_forward.1} parent=43 // pred_fallthru
          _
        // Predicated region
        $region101: #{classification_forward.1} parent=43 // pred_check
          %p850 = pneg %p499
        $region102: #{classification_forward.1} parent=43 // pred_check_branch
          %852 = sbr.rel (%p850) target = $region104
        $region103: #{classification_forward.1} parent=43 // pred_region
          %p853 = scmp.lt.s32.totalorder %s48, 1
          %s854 = scalar_select %p853, %s48, 1
          %s855 = scalar_lea.vmem %s17, %s854
        $region104: #{classification_forward.1} parent=43 // pred_fallthru
          _
        // Predicated region
        $region105: #{classification_forward.1} parent=43 // pred_check
          %p856 = pneg %p525
        $region106: #{classification_forward.1} parent=43 // pred_check_branch
          %858 = sbr.rel (%p856) target = $region108
        $region107: #{classification_forward.1} parent=43 // pred_region
          %p859 = scmp.lt.s32.totalorder %s48, 1
          %s860 = scalar_select %p859, %s48, 1
          %s861 = scalar_lea.vmem %s18, %s860
        $region108: #{classification_forward.1} parent=43 // pred_fallthru
          _
      $region44: #{classification_forward.1} parent=5 // pred_fallthru
        _
      %p862 = scmp.le.s32.totalorder 1, %s40
      %p863 = scmp.lt.s32.totalorder %s40, 5
      %p864 = pnand %p862, %p863
      %p865 = pneg %p864
      // Predicated region
      $region109: #{classification_forward.1} parent=5 // pred_check
        _
      $region110: #{classification_forward.1} parent=5 // pred_check_branch
        %867 = sbr.rel (%p864) target = $region112
      $region111: #{classification_forward.1} parent=5 // pred_region
        %s868 = ssub.s32 %s40, 1
        // Predicated region
        $region113: #{classification_forward.1} parent=111 // pred_check
          %p869 = pneg %p177
        $region114: #{classification_forward.1} parent=111 // pred_check_branch
          %871 = sbr.rel (%p869) target = $region116
        $region115: #{classification_forward.1} parent=111 // pred_region
          %872 = dma.done [#allocation4], 3072
        $region116: #{classification_forward.1} parent=111 // pred_fallthru
          _
        %s873 = sand.u32 %s45, 1
        %s874 = scalar_lea.sflag [#allocation7], %s873
        %s875 = sand.u32 %s232, 1
        %s876 = smul.addr %s875, 192
        %s877 = scalar_lea.vmem [#allocation6], %s876
        // Predicated region
        $region117: #{classification_forward.1} parent=111 // pred_check
          %p878 = pneg %p245
        $region118: #{classification_forward.1} parent=111 // pred_check_branch
          %880 = sbr.rel (%p878) target = $region120
        $region119: #{classification_forward.1} parent=111 // pred_region
          %881 = dma.done %s874, 3072
        $region120: #{classification_forward.1} parent=111 // pred_fallthru
          _
        %s882 = sand.u32 %s45, 1
        %s883 = scalar_lea.sflag [#allocation7], %s882
        %s884 = sand.u32 %s284, 1
        %s885 = smul.addr %s884, 64
        %s886 = scalar_lea.vmem [#allocation8], %s885
        // Predicated region
        $region121: #{classification_forward.1} parent=111 // pred_check
          %p887 = pneg %p297
        $region122: #{classification_forward.1} parent=111 // pred_check_branch
          %889 = sbr.rel (%p887) target = $region124
        $region123: #{classification_forward.1} parent=111 // pred_region
          %890 = dma.done %s883, 1024
        $region124: #{classification_forward.1} parent=111 // pred_fallthru
          _
        %s891 = sand.u32 %s45, 1
        %s892 = scalar_lea.sflag [#allocation10], %s891
        %s893 = sand.u32 %s388, 1
        %s894 = smul.addr %s893, 128
        %s895 = scalar_lea.vmem [#allocation9], %s894
        // Predicated region
        $region125: #{classification_forward.1} parent=111 // pred_check
          %p896 = pneg %p401
        $region126: #{classification_forward.1} parent=111 // pred_check_branch
          %898 = sbr.rel (%p896) target = $region128
        $region127: #{classification_forward.1} parent=111 // pred_region
          %899 = dma.done %s892, 2048
        $region128: #{classification_forward.1} parent=111 // pred_fallthru
          _
        %s900 = sand.u32 %s45, 1
        %s901 = scalar_lea.sflag [#allocation10], %s900
        %s902 = sand.u32 %s440, 1
        %s903 = smul.addr %s902, 128
        %s904 = scalar_lea.vmem [#allocation11], %s903
        // Predicated region
        $region129: #{classification_forward.1} parent=111 // pred_check
          %p905 = pneg %p453
        $region130: #{classification_forward.1} parent=111 // pred_check_branch
          %907 = sbr.rel (%p905) target = $region132
        $region131: #{classification_forward.1} parent=111 // pred_region
          %908 = dma.done %s901, 2048
        $region132: #{classification_forward.1} parent=111 // pred_fallthru
          _
        // Predicated region
        $region133: #{classification_forward.1} parent=111 // pred_check
          %p909 = pneg %p594
        $region134: #{classification_forward.1} parent=111 // pred_check_branch
          %911 = sbr.rel (%p909) target = $region136
        $region135: #{classification_forward.1} parent=111 // pred_region
          %912 = dma.done [#allocation13], 1024
        $region136: #{classification_forward.1} parent=111 // pred_fallthru
          _
        %p913 = scmp.lt.s32.totalorder %s49, 1
        %s914 = scalar_select %p913, %s49, 1
        %s915 = smul.addr %s914, 8
        %s916 = scalar_lea.vmem %s0, %s915
        %p917 = pneg %p78
        %p918 = pneg %p75
        %p919 = scmp.lt.s32.totalorder %s49, 1
        %s920 = scalar_select %p919, %s49, 1
        %s921 = smul.addr %s920, 8
        %s922 = scalar_lea.vmem %s1, %s921
        %p923 = pneg %p104
        %p924 = pneg %p101
        %p925 = scmp.lt.s32.totalorder %s49, 1
        %s926 = scalar_select %p925, %s49, 1
        %s927 = smul.addr %s926, 8
        %s928 = scalar_lea.vmem %s2, %s927
        %p929 = pneg %p130
        %p930 = pneg %p127
        %p931 = scmp.lt.s32.totalorder %s49, 1
        %s932 = scalar_select %p931, %s49, 1
        %s933 = scalar_lea.vmem %s3, %s932
        %p934 = pneg %p156
        %p935 = pneg %p153
        %p936 = pneg %p177
        %p937 = pneg %p174
        %p938 = pneg %p198
        %p939 = pneg %p195
        %p940 = pneg %p219
        %p941 = pneg %p216
        %s942 = sand.u32 %s45, 1
        %s943 = scalar_lea.sflag [#allocation7], %s942
        %s944 = sand.u32 %s232, 1
        %s945 = smul.addr %s944, 192
        %s946 = scalar_lea.vmem [#allocation6], %s945
        %p947 = pneg %p245
        %p948 = pneg %p242
        %p949 = scmp.lt.s32.totalorder %s50, 1
        %s950 = scalar_select %p949, %s50, 1
        %s951 = smul.addr %s950, 3
        %s952 = scalar_lea.vmem %s8, %s951
        %p953 = pneg %p271
        %p954 = pneg %p268
        %s955 = sand.u32 %s45, 1
        %s956 = scalar_lea.sflag [#allocation7], %s955
        %s957 = sand.u32 %s284, 1
        %s958 = smul.addr %s957, 64
        %s959 = scalar_lea.vmem [#allocation8], %s958
        %p960 = pneg %p297
        %p961 = pneg %p294
        %p962 = scmp.lt.s32.totalorder %s50, 1
        %s963 = scalar_select %p962, %s50, 1
        %s964 = scalar_lea.vmem %s10, %s963
        %p965 = pneg %p323
        %p966 = pneg %p320
        %p967 = scmp.lt.s32.totalorder %s50, 1
        %s968 = scalar_select %p967, %s50, 1
        %s969 = scalar_lea.vmem %s11, %s968
        %p970 = pneg %p349
        %p971 = pneg %p346
        %p972 = scmp.lt.s32.totalorder %s50, 1
        %s973 = scalar_select %p972, %s50, 1
        %s974 = scalar_lea.vmem %s12, %s973
        %p975 = pneg %p375
        %p976 = pneg %p372
        %s977 = sand.u32 %s45, 1
        %s978 = scalar_lea.sflag [#allocation10], %s977
        %s979 = sand.u32 %s388, 1
        %s980 = smul.addr %s979, 128
        %s981 = scalar_lea.vmem [#allocation9], %s980
        %p982 = pneg %p401
        %p983 = pneg %p398
        %p984 = scmp.lt.s32.totalorder %s50, 1
        %s985 = scalar_select %p984, %s50, 1
        %s986 = smul.addr %s985, 2
        %s987 = scalar_lea.vmem %s14, %s986
        %p988 = pneg %p427
        %p989 = pneg %p424
        %s990 = sand.u32 %s45, 1
        %s991 = scalar_lea.sflag [#allocation10], %s990
        %s992 = sand.u32 %s440, 1
        %s993 = smul.addr %s992, 128
        %s994 = scalar_lea.vmem [#allocation11], %s993
        %p995 = pneg %p453
        %p996 = pneg %p450
        %p997 = scmp.lt.s32.totalorder %s50, 1
        %s998 = scalar_select %p997, %s50, 1
        %s999 = scalar_lea.vmem %s16, %s998
        %p1000 = pneg %p479
        %p1001 = pneg %p476
        %p1002 = scmp.lt.s32.totalorder %s50, 1
        %s1003 = scalar_select %p1002, %s50, 1
        %s1004 = scalar_lea.vmem %s17, %s1003
        %p1005 = pneg %p505
        %p1006 = pneg %p502
        %p1007 = scmp.lt.s32.totalorder %s50, 1
        %s1008 = scalar_select %p1007, %s50, 1
        %s1009 = scalar_lea.vmem %s18, %s1008
        %p1010 = pneg %p531
        %p1011 = pneg %p528
        %p1012 = pneg %p552
        %p1013 = pneg %p549
        %p1014 = pneg %p573
        %p1015 = pneg %p570
        %p1016 = pneg %p594
        %p1017 = pneg %p591
        %p1018 = pneg %p615
        %p1019 = pneg %p612
        %p1020 = pneg %p641
        %p1021 = pneg %p638
        %s1022 = sand.u32 %s628, 1
        %s1023 = scalar_lea.sflag [#allocation5], %s1022
        %s1024 = sand.u32 %s628, 1
        %s1025 = scalar_lea.vmem [#allocation14], %s1024
        %p1026 = scmp.lt.s32.totalorder %s49, 1
        %s1027 = scalar_select %p1026, %s49, 1
        %s1028 = smul.addr %s1027, 8
        %s1029 = scalar_lea.vmem %s0, %s1028
        %p1030 = scmp.lt.s32.totalorder %s49, 1
        %s1031 = scalar_select %p1030, %s49, 1
        %s1032 = smul.addr %s1031, 8
        %s1033 = scalar_lea.vmem %s1, %s1032
        %p1034 = scmp.lt.s32.totalorder %s49, 1
        %s1035 = scalar_select %p1034, %s49, 1
        %s1036 = smul.addr %s1035, 8
        %s1037 = scalar_lea.vmem %s2, %s1036
        %p1038 = scmp.lt.s32.totalorder %s49, 1
        %s1039 = scalar_select %p1038, %s49, 1
        %s1040 = scalar_lea.vmem %s3, %s1039
        %p1041 = scmp.lt.s32.totalorder %s50, 1
        %s1042 = scalar_select %p1041, %s50, 1
        %s1043 = smul.addr %s1042, 3
        %s1044 = scalar_lea.vmem %s8, %s1043
        %p1045 = scmp.lt.s32.totalorder %s50, 1
        %s1046 = scalar_select %p1045, %s50, 1
        %s1047 = scalar_lea.vmem %s10, %s1046
        %p1048 = scmp.lt.s32.totalorder %s50, 1
        %s1049 = scalar_select %p1048, %s50, 1
        %s1050 = scalar_lea.vmem %s11, %s1049
        %p1051 = scmp.lt.s32.totalorder %s50, 1
        %s1052 = scalar_select %p1051, %s50, 1
        %s1053 = scalar_lea.vmem %s12, %s1052
        %p1054 = scmp.lt.s32.totalorder %s50, 1
        %s1055 = scalar_select %p1054, %s50, 1
        %s1056 = smul.addr %s1055, 2
        %s1057 = scalar_lea.vmem %s14, %s1056
        %p1058 = scmp.lt.s32.totalorder %s50, 1
        %s1059 = scalar_select %p1058, %s50, 1
        %s1060 = scalar_lea.vmem %s16, %s1059
        %p1061 = scmp.lt.s32.totalorder %s50, 1
        %s1062 = scalar_select %p1061, %s50, 1
        %s1063 = scalar_lea.vmem %s17, %s1062
        %p1064 = scmp.lt.s32.totalorder %s50, 1
        %s1065 = scalar_select %p1064, %s50, 1
        %s1066 = scalar_lea.vmem %s18, %s1065
        %p1068 = scmp.eq.s32.totalorder %s50, 0
        // Predicated region
        $region137: #{classification_forward.1} parent=111 // pred_check
          %p1069 = pneg %p1068
        $region138: #{classification_forward.1} parent=111 // pred_check_branch
          %1071 = sbr.rel (%p1069) target = $region140
        $region139: #{classification_forward.1} parent=111 // pred_region
          %v1072 = vlaneseq
          %v1073 = vand.u32 %v1072, 127
          %v1074 = vadd.s32 %v1073, 128
          %v1075 = vadd.s32 %v1073, 256
          %v1076 = vld [vmem:[%s1029] sm:$0xff]
          %1077 = vset.pattern.permute.xlu0 0
          %1078 = vperm.xlu0 %1077, %v1076
          %v1079 = vpop.permute.xlu0 %1078
          %vm1080 = vcmp.eq.s32.totalorder %v1073, %v1079
          %vm1081 = vcmp.eq.s32.totalorder %v1074, %v1079
          %vm1082 = vcmp.eq.s32.totalorder %v1075, %v1079
          %v1083 = vsel %vm1080, 1, 0
          %v1084 = vsel %vm1081, 1, 0
          %v1085 = vsel %vm1082, 1, 0
          %v1086 = vcvt.s32.f32 %v1083
          %v1087 = vcvt.s32.f32 %v1084
          %v1088 = vcvt.s32.f32 %v1085
          %v1089 = vld [vmem:[%s1033] sm:$0xff]
          %1090 = vset.pattern.permute.xlu0 0
          %1091 = vperm.xlu0 %1090, %v1089
          %v1092 = vpop.permute.xlu0 %1091
          %vm1093 = vcmp.eq.s32.totalorder %v1073, %v1092
          %vm1094 = vcmp.eq.s32.totalorder %v1074, %v1092
          %vm1095 = vcmp.eq.s32.totalorder %v1075, %v1092
          %v1096 = vsel %vm1093, 1, 0
          %v1097 = vsel %vm1094, 1, 0
          %v1098 = vsel %vm1095, 1, 0
          %v1099 = vcvt.s32.f32 %v1096
          %v1100 = vcvt.s32.f32 %v1097
          %v1101 = vcvt.s32.f32 %v1098
          %v1102 = vadd.f32 %v1086, %v1099
          %v1103 = vadd.f32 %v1087, %v1100
          %v1104 = vadd.f32 %v1088, %v1101
          %v1105 = vld [vmem:[%s1037] sm:$0xff]
          %1106 = vset.pattern.permute.xlu0 0
          %1107 = vperm.xlu0 %1106, %v1105
          %v1108 = vpop.permute.xlu0 %1107
          %vm1109 = vcmp.eq.s32.totalorder %v1073, %v1108
          %vm1110 = vcmp.eq.s32.totalorder %v1074, %v1108
          %vm1111 = vcmp.eq.s32.totalorder %v1075, %v1108
          %v1112 = vsel %vm1109, 1, 0
          %v1113 = vsel %vm1110, 1, 0
          %v1114 = vsel %vm1111, 1, 0
          %v1115 = vcvt.s32.f32 %v1112
          %v1116 = vcvt.s32.f32 %v1113
          %v1117 = vcvt.s32.f32 %v1114
          %v1118 = vadd.f32 %v1102, %v1115
          %v1119 = vadd.f32 %v1103, %v1116
          %v1120 = vadd.f32 %v1104, %v1117
          %v1121 = vpack.c.bf16 %v1118, %v1118
          %v1122 = vpack.c.bf16 %v1119, %v1119
          %v1123 = vpack.c.bf16 %v1120, %v1120
          %v1124 = vld [vmem:[#allocation3] sm:$0xf]
          %v1125 = vld [vmem:[#allocation3 + $0x4] sm:$0xf]
          %v1126 = vld [vmem:[#allocation3 + $0x8] sm:$0xf]
          %v1127 = vld [vmem:[#allocation3 + $0xc] sm:$0xf]
          %v1128 = vld [vmem:[#allocation3 + $0x10] sm:$0xf]
          %v1129 = vld [vmem:[#allocation3 + $0x14] sm:$0xf]
          %v1130 = vld [vmem:[#allocation3 + $0x18] sm:$0xf]
          %v1131 = vld [vmem:[#allocation3 + $0x1c] sm:$0xf]
          %v1132 = vld [vmem:[#allocation3 + $0x20] sm:$0xf]
          %v1133 = vld [vmem:[#allocation3 + $0x24] sm:$0xf]
          %v1134 = vld [vmem:[#allocation3 + $0x28] sm:$0xf]
          %v1135 = vld [vmem:[#allocation3 + $0x2c] sm:$0xf]
          %v1136 = vld [vmem:[#allocation3 + $0x30] sm:$0xf]
          %v1137 = vld [vmem:[#allocation3 + $0x34] sm:$0xf]
          %v1138 = vld [vmem:[#allocation3 + $0x38] sm:$0xf]
          %v1139 = vld [vmem:[#allocation3 + $0x3c] sm:$0xf]
          %v1140 = vld [vmem:[#allocation3 + $0x40] sm:$0xf]
          %v1141 = vld [vmem:[#allocation3 + $0x44] sm:$0xf]
          %v1142 = vld [vmem:[#allocation3 + $0x48] sm:$0xf]
          %v1143 = vld [vmem:[#allocation3 + $0x4c] sm:$0xf]
          %v1144 = vld [vmem:[#allocation3 + $0x50] sm:$0xf]
          %v1145 = vld [vmem:[#allocation3 + $0x54] sm:$0xf]
          %v1146 = vld [vmem:[#allocation3 + $0x58] sm:$0xf]
          %v1147 = vld [vmem:[#allocation3 + $0x5c] sm:$0xf]
          %v1148 = vld [vmem:[#allocation3 + $0x60] sm:$0xf]
          %v1149 = vld [vmem:[#allocation3 + $0x64] sm:$0xf]
          %v1150 = vld [vmem:[#allocation3 + $0x68] sm:$0xf]
          %v1151 = vld [vmem:[#allocation3 + $0x6c] sm:$0xf]
          %v1152 = vld [vmem:[#allocation3 + $0x70] sm:$0xf]
          %v1153 = vld [vmem:[#allocation3 + $0x74] sm:$0xf]
          %v1154 = vld [vmem:[#allocation3 + $0x78] sm:$0xf]
          %v1155 = vld [vmem:[#allocation3 + $0x7c] sm:$0xf]
          %v1156 = vld [vmem:[#allocation3 + $0x80] sm:$0xf]
          %v1157 = vld [vmem:[#allocation3 + $0x84] sm:$0xf]
          %v1158 = vld [vmem:[#allocation3 + $0x88] sm:$0xf]
          %v1159 = vld [vmem:[#allocation3 + $0x8c] sm:$0xf]
          %v1160 = vld [vmem:[#allocation3 + $0x90] sm:$0xf]
          %v1161 = vld [vmem:[#allocation3 + $0x94] sm:$0xf]
          %v1162 = vld [vmem:[#allocation3 + $0x98] sm:$0xf]
          %v1163 = vld [vmem:[#allocation3 + $0x9c] sm:$0xf]
          %v1164 = vld [vmem:[#allocation3 + $0xa0] sm:$0xf]
          %v1165 = vld [vmem:[#allocation3 + $0xa4] sm:$0xf]
          %v1166 = vld [vmem:[#allocation3 + $0xa8] sm:$0xf]
          %v1167 = vld [vmem:[#allocation3 + $0xac] sm:$0xf]
          %v1168 = vld [vmem:[#allocation3 + $0xb0] sm:$0xf]
          %v1169 = vld [vmem:[#allocation3 + $0xb4] sm:$0xf]
          %v1170 = vld [vmem:[#allocation3 + $0xb8] sm:$0xf]
          %v1171 = vld [vmem:[#allocation3 + $0xbc] sm:$0xf]
          %v1220 = vunpack.c.l.b16 %v1124
          %v1221 = vunpack.c.l.b16 %v1125
          %v1222 = vunpack.c.l.b16 %v1126
          %v1223 = vunpack.c.l.b16 %v1127
          %v1224 = vunpack.c.l.b16 %v1128
          %v1225 = vunpack.c.l.b16 %v1129
          %v1226 = vunpack.c.l.b16 %v1130
          %v1227 = vunpack.c.l.b16 %v1131
          %v1228 = vunpack.c.l.b16 %v1132
          %v1229 = vunpack.c.l.b16 %v1133
          %v1230 = vunpack.c.l.b16 %v1134
          %v1231 = vunpack.c.l.b16 %v1135
          %v1232 = vunpack.c.l.b16 %v1136
          %v1233 = vunpack.c.l.b16 %v1137
          %v1234 = vunpack.c.l.b16 %v1138
          %v1235 = vunpack.c.l.b16 %v1139
          %v1236 = vunpack.c.l.b16 %v1140
          %v1237 = vunpack.c.l.b16 %v1141
          %v1238 = vunpack.c.l.b16 %v1142
          %v1239 = vunpack.c.l.b16 %v1143
          %v1240 = vunpack.c.l.b16 %v1144
          %v1241 = vunpack.c.l.b16 %v1145
          %v1242 = vunpack.c.l.b16 %v1146
          %v1243 = vunpack.c.l.b16 %v1147
          %v1244 = vunpack.c.l.b16 %v1148
          %v1245 = vunpack.c.l.b16 %v1149
          %v1246 = vunpack.c.l.b16 %v1150
          %v1247 = vunpack.c.l.b16 %v1151
          %v1248 = vunpack.c.l.b16 %v1152
          %v1249 = vunpack.c.l.b16 %v1153
          %v1250 = vunpack.c.l.b16 %v1154
          %v1251 = vunpack.c.l.b16 %v1155
          %v1252 = vunpack.c.l.b16 %v1156
          %v1253 = vunpack.c.l.b16 %v1157
          %v1254 = vunpack.c.l.b16 %v1158
          %v1255 = vunpack.c.l.b16 %v1159
          %v1256 = vunpack.c.l.b16 %v1160
          %v1257 = vunpack.c.l.b16 %v1161
          %v1258 = vunpack.c.l.b16 %v1162
          %v1259 = vunpack.c.l.b16 %v1163
          %v1260 = vunpack.c.l.b16 %v1164
          %v1261 = vunpack.c.l.b16 %v1165
          %v1262 = vunpack.c.l.b16 %v1166
          %v1263 = vunpack.c.l.b16 %v1167
          %v1264 = vunpack.c.l.b16 %v1168
          %v1265 = vunpack.c.l.b16 %v1169
          %v1266 = vunpack.c.l.b16 %v1170
          %v1267 = vunpack.c.l.b16 %v1171
          %v1268 = vpack.c.b16 %v1221, %v1220
          %v1269 = vpack.c.b16 %v1223, %v1222
          %v1270 = vpack.c.b16 %v1225, %v1224
          %v1271 = vpack.c.b16 %v1227, %v1226
          %v1272 = vpack.c.b16 %v1229, %v1228
          %v1273 = vpack.c.b16 %v1231, %v1230
          %v1274 = vpack.c.b16 %v1233, %v1232
          %v1275 = vpack.c.b16 %v1235, %v1234
          %v1276 = vpack.c.b16 %v1237, %v1236
          %v1277 = vpack.c.b16 %v1239, %v1238
          %v1278 = vpack.c.b16 %v1241, %v1240
          %v1279 = vpack.c.b16 %v1243, %v1242
          %v1280 = vpack.c.b16 %v1245, %v1244
          %v1281 = vpack.c.b16 %v1247, %v1246
          %v1282 = vpack.c.b16 %v1249, %v1248
          %v1283 = vpack.c.b16 %v1251, %v1250
          %v1284 = vpack.c.b16 %v1253, %v1252
          %v1285 = vpack.c.b16 %v1255, %v1254
          %v1286 = vpack.c.b16 %v1257, %v1256
          %v1287 = vpack.c.b16 %v1259, %v1258
          %v1288 = vpack.c.b16 %v1261, %v1260
          %v1289 = vpack.c.b16 %v1263, %v1262
          %v1290 = vpack.c.b16 %v1265, %v1264
          %v1291 = vpack.c.b16 %v1267, %v1266
          %1316 = vmatprep.subr.bf16.mxu0 0
          %1317 = vmatpush1.bf16.msra.mxu0 %v1268
          %1318 = vmatprep.subr.bf16.mxu0 0
          %1319 = vmatpush1.bf16.msra.mxu0 %v1269
          %1320 = vmatprep.subr.bf16.mxu0 0
          %1321 = vmatpush1.bf16.msra.mxu0 %v1270
          %1322 = vmatprep.subr.bf16.mxu0 0
          %1323 = vmatpush1.bf16.msra.mxu0 %v1271
          %1324 = vmatprep.subr.bf16.mxu0 0
          %1325 = vmatpush1.bf16.msra.mxu0 %v1272
          %1326 = vmatprep.subr.bf16.mxu0 0
          %1327 = vmatpush1.bf16.msra.mxu0 %v1273
          %1328 = vmatprep.subr.bf16.mxu0 0
          %1329 = vmatpush1.bf16.msra.mxu0 %v1274
          %1330 = vmatprep.subr.bf16.mxu0 0
          %1331 = vmatpush1.bf16.msra.mxu0 %v1275
          %1332 = vmatprep.subr.bf16.mxu0 0
          %1333 = vmatpush1.bf16.msra.mxu0 %v1276
          %1334 = vmatprep.subr.bf16.mxu0 0
          %1335 = vmatpush1.bf16.msra.mxu0 %v1277
          %1336 = vmatprep.subr.bf16.mxu0 0
          %1337 = vmatpush1.bf16.msra.mxu0 %v1278
          %1338 = vmatprep.subr.bf16.mxu0 0
          %1339 = vmatpush1.bf16.msra.mxu0 %v1279
          %1340 = vmatprep.subr.bf16.mxu0 0
          %1341 = vmatpush1.bf16.msra.mxu0 %v1280
          %1342 = vmatprep.subr.bf16.mxu0 0
          %1343 = vmatpush1.bf16.msra.mxu0 %v1281
          %1344 = vmatprep.subr.bf16.mxu0 0
          %1345 = vmatpush1.bf16.msra.mxu0 %v1282
          %1346 = vmatprep.subr.bf16.mxu0 0
          %1347 = vmatpush1.bf16.msra.mxu0 %v1283
          %1348 = vmatprep.mubr.bf16.mxu0 %v1122
          %1349 = vmatmul.mubr.bf16.gmra.mrb[0].mxu0 %v1121
          %v1350 = vpop.f32.mrb[0].mxu0
          %v1351 = vadd.f32 0.0, %v1350
          %v1352 = vpop.f32.mrb[0].mxu0
          %v1353 = vpop.f32.mrb[0].mxu0
          %v1354 = vpop.f32.mrb[0].mxu0
          %1355 = vdwg.mxu0
          %1356 = vmatprep.subr.bf16.mxu0 0
          %1357 = vmatpush1.bf16.msra.mxu0 %v1284
          %1358 = vmatprep.subr.bf16.mxu0 0
          %1359 = vmatpush1.bf16.msra.mxu0 %v1285
          %1360 = vmatprep.subr.bf16.mxu0 0
          %1361 = vmatpush1.bf16.msra.mxu0 %v1286
          %1362 = vmatprep.subr.bf16.mxu0 0
          %1363 = vmatpush1.bf16.msra.mxu0 %v1287
          %1364 = vmatprep.subr.bf16.mxu0 0
          %1365 = vmatpush1.bf16.msra.mxu0 %v1288
          %1366 = vmatprep.subr.bf16.mxu0 0
          %1367 = vmatpush1.bf16.msra.mxu0 %v1289
          %1368 = vmatprep.subr.bf16.mxu0 0
          %1369 = vmatpush1.bf16.msra.mxu0 %v1290
          %1370 = vmatprep.subr.bf16.mxu0 0
          %1371 = vmatpush1.bf16.msra.mxu0 %v1291
          %1372 = vmatprep.subr.bf16.mxu0 0
          %1373 = vmatpush1.bf16.msra.mxu0 0
          %1374 = vmatprep.subr.bf16.mxu0 0
          %1375 = vmatpush1.bf16.msra.mxu0 0
          %1376 = vmatprep.subr.bf16.mxu0 0
          %1377 = vmatpush1.bf16.msra.mxu0 0
          %1378 = vmatprep.subr.bf16.mxu0 0
          %1379 = vmatpush1.bf16.msra.mxu0 0
          %1380 = vmatprep.subr.bf16.mxu0 0
          %1381 = vmatpush1.bf16.msra.mxu0 0
          %1382 = vmatprep.subr.bf16.mxu0 0
          %1383 = vmatpush1.bf16.msra.mxu0 0
          %1384 = vmatprep.subr.bf16.mxu0 0
          %1385 = vmatpush1.bf16.msra.mxu0 0
          %1386 = vmatprep.subr.bf16.mxu0 0
          %1387 = vmatpush1.bf16.msra.mxu0 0
          %1388 = vmatprep.mubr.bf16.mxu0 0
          %1389 = vmatmul.mubr.bf16.gmra.mrb[0].mxu0 %v1123
          %v1390 = vpop.f32.mrb[0].mxu0
          %v1391 = vadd.f32 %v1351, %v1390
          %v1392 = vpop.f32.mrb[0].mxu0
          %v1393 = vpop.f32.mrb[0].mxu0
          %v1394 = vpop.f32.mrb[0].mxu0
          %1395 = vdwg.mxu0
          %v1396 = vld [vmem:[%s5] sm:$0x1]
          %v1397 = vld [vmem:[%s6] sm:$0x1]
          %1398 = vadd.xlane.f32.xlu0 %v1391
          %v1399 = vpop.xlane.xlu0 %1398
          %v1400 = vrcp.pop 128.0
          %v1401 = vmul.f32 %v1399, %v1400
          %v1402 = vsub.f32 %v1391, %v1401
          %v1403 = vmul.f32 %v1402, %v1402
          %1404 = vadd.xlane.f32.xlu0 %v1403
          %v1405 = vpop.xlane.xlu0 %1404
          %v1406 = vmul.f32 %v1405, %v1400
          %v1407 = vadd.f32 %v1406, 1e-12
          %v1408 = vrsqrt.pop %v1407
          %v1409 = vmul.f32 %v1402, %v1408
          %v1411 = vlaneseq
          %v1412 = vshrl.u32 %v1411, 7
          %v1413 = vsub.s32 0, %v1412
          %v1414 = vrot.slane %v1396, %v1413
          %v1416 = vmul.f32 %v1409, %v1414
          %v1418 = vlaneseq
          %v1419 = vshrl.u32 %v1418, 7
          %v1420 = vsub.s32 0, %v1419
          %v1421 = vrot.slane %v1397, %v1420
          %v1423 = vadd.f32 %v1416, %v1421
          %1424 = vst [vmem:[#allocation2] sm:$0xff] %v1423
        $region140: #{classification_forward.1} parent=111 // pred_fallthru
          _
        %v1425 = vld [vmem:[#allocation2] sm:$0xff]
        %v1426 = vpack.c.bf16 %v1425, %v1425
        %v1427 = vld [vmem:[%s877] sm:$0xff]
        %v1428 = vld [vmem:[%s877 + $0x8] sm:$0xf]
        %v1429 = vld [vmem:[%s877 + $0xc] sm:$0xff]
        %v1430 = vld [vmem:[%s877 + $0x14] sm:$0xf]
        %v1431 = vld [vmem:[%s877 + $0x18] sm:$0xff]
        %v1432 = vld [vmem:[%s877 + $0x20] sm:$0xf]
        %v1433 = vld [vmem:[%s877 + $0x24] sm:$0xff]
        %v1434 = vld [vmem:[%s877 + $0x2c] sm:$0xf]
        %v1435 = vld [vmem:[%s877 + $0x30] sm:$0xff]
        %v1436 = vld [vmem:[%s877 + $0x38] sm:$0xf]
        %v1437 = vld [vmem:[%s877 + $0x3c] sm:$0xff]
        %v1438 = vld [vmem:[%s877 + $0x44] sm:$0xf]
        %v1439 = vld [vmem:[%s877 + $0x48] sm:$0xff]
        %v1440 = vld [vmem:[%s877 + $0x50] sm:$0xf]
        %v1441 = vld [vmem:[%s877 + $0x54] sm:$0xff]
        %v1442 = vld [vmem:[%s877 + $0x5c] sm:$0xf]
        %v1443 = vld [vmem:[%s877 + $0x60] sm:$0xff]
        %v1444 = vld [vmem:[%s877 + $0x68] sm:$0xf]
        %v1445 = vld [vmem:[%s877 + $0x6c] sm:$0xff]
        %v1446 = vld [vmem:[%s877 + $0x74] sm:$0xf]
        %v1447 = vld [vmem:[%s877 + $0x78] sm:$0xff]
        %v1448 = vld [vmem:[%s877 + $0x80] sm:$0xf]
        %v1449 = vld [vmem:[%s877 + $0x84] sm:$0xff]
        %v1450 = vld [vmem:[%s877 + $0x8c] sm:$0xf]
        %v1451 = vld [vmem:[%s877 + $0x90] sm:$0xff]
        %v1452 = vld [vmem:[%s877 + $0x98] sm:$0xf]
        %v1453 = vld [vmem:[%s877 + $0x9c] sm:$0xff]
        %v1454 = vld [vmem:[%s877 + $0xa4] sm:$0xf]
        %v1455 = vld [vmem:[%s877 + $0xa8] sm:$0xff]
        %v1456 = vld [vmem:[%s877 + $0xb0] sm:$0xf]
        %v1457 = vld [vmem:[%s877 + $0xb4] sm:$0xff]
        %v1458 = vld [vmem:[%s877 + $0xbc] sm:$0xf]
        %v1459 = vld [vmem:[%s1044] sm:$0x7]
        %v1461 = vlaneseq
        %v1462 = vshrl.u32 %v1461, 7
        %v1463 = vsub.s32 0, %v1462
        %v1464 = vrot.slane %v1459, %v1463
        %v1465 = vlaneseq
        %v1466 = vshrl.u32 %v1465, 7
        %v1467 = vsub.s32 1, %v1466
        %v1468 = vrot.slane %v1459, %v1467
        %v1469 = vlaneseq
        %v1470 = vshrl.u32 %v1469, 7
        %v1471 = vsub.s32 2, %v1470
        %v1472 = vrot.slane %v1459, %v1471
        %v1508 = vunpack.c.l.b16 %v1427
        %v1509 = vunpack.c.h.b16 %v1427
        %v1510 = vunpack.c.l.b16 %v1428
        %v1511 = vunpack.c.l.b16 %v1429
        %v1512 = vunpack.c.h.b16 %v1429
        %v1513 = vunpack.c.l.b16 %v1430
        %v1514 = vunpack.c.l.b16 %v1431
        %v1515 = vunpack.c.h.b16 %v1431
        %v1516 = vunpack.c.l.b16 %v1432
        %v1517 = vunpack.c.l.b16 %v1433
        %v1518 = vunpack.c.h.b16 %v1433
        %v1519 = vunpack.c.l.b16 %v1434
        %v1520 = vunpack.c.l.b16 %v1435
        %v1521 = vunpack.c.h.b16 %v1435
        %v1522 = vunpack.c.l.b16 %v1436
        %v1523 = vunpack.c.l.b16 %v1437
        %v1524 = vunpack.c.h.b16 %v1437
        %v1525 = vunpack.c.l.b16 %v1438
        %v1526 = vunpack.c.l.b16 %v1439
        %v1527 = vunpack.c.h.b16 %v1439
        %v1528 = vunpack.c.l.b16 %v1440
        %v1529 = vunpack.c.l.b16 %v1441
        %v1530 = vunpack.c.h.b16 %v1441
        %v1531 = vunpack.c.l.b16 %v1442
        %v1532 = vunpack.c.l.b16 %v1443
        %v1533 = vunpack.c.h.b16 %v1443
        %v1534 = vunpack.c.l.b16 %v1444
        %v1535 = vunpack.c.l.b16 %v1445
        %v1536 = vunpack.c.h.b16 %v1445
        %v1537 = vunpack.c.l.b16 %v1446
        %v1538 = vunpack.c.l.b16 %v1447
        %v1539 = vunpack.c.h.b16 %v1447
        %v1540 = vunpack.c.l.b16 %v1448
        %v1541 = vunpack.c.l.b16 %v1449
        %v1542 = vunpack.c.h.b16 %v1449
        %v1543 = vunpack.c.l.b16 %v1450
        %v1544 = vunpack.c.l.b16 %v1451
        %v1545 = vunpack.c.h.b16 %v1451
        %v1546 = vunpack.c.l.b16 %v1452
        %v1547 = vunpack.c.l.b16 %v1453
        %v1548 = vunpack.c.h.b16 %v1453
        %v1549 = vunpack.c.l.b16 %v1454
        %v1550 = vunpack.c.l.b16 %v1455
        %v1551 = vunpack.c.h.b16 %v1455
        %v1552 = vunpack.c.l.b16 %v1456
        %v1553 = vunpack.c.l.b16 %v1457
        %v1554 = vunpack.c.h.b16 %v1457
        %v1555 = vunpack.c.l.b16 %v1458
        %v1556 = vpack.c.b16 %v1511, %v1508
        %v1557 = vpack.c.b16 %v1512, %v1509
        %v1558 = vpack.c.b16 %v1513, %v1510
        %v1559 = vpack.c.b16 %v1517, %v1514
        %v1560 = vpack.c.b16 %v1518, %v1515
        %v1561 = vpack.c.b16 %v1519, %v1516
        %v1562 = vpack.c.b16 %v1523, %v1520
        %v1563 = vpack.c.b16 %v1524, %v1521
        %v1564 = vpack.c.b16 %v1525, %v1522
        %v1565 = vpack.c.b16 %v1529, %v1526
        %v1566 = vpack.c.b16 %v1530, %v1527
        %v1567 = vpack.c.b16 %v1531, %v1528
        %v1568 = vpack.c.b16 %v1535, %v1532
        %v1569 = vpack.c.b16 %v1536, %v1533
        %v1570 = vpack.c.b16 %v1537, %v1534
        %v1571 = vpack.c.b16 %v1541, %v1538
        %v1572 = vpack.c.b16 %v1542, %v1539
        %v1573 = vpack.c.b16 %v1543, %v1540
        %v1574 = vpack.c.b16 %v1547, %v1544
        %v1575 = vpack.c.b16 %v1548, %v1545
        %v1576 = vpack.c.b16 %v1549, %v1546
        %v1577 = vpack.c.b16 %v1553, %v1550
        %v1578 = vpack.c.b16 %v1554, %v1551
        %v1579 = vpack.c.b16 %v1555, %v1552
        %1604 = vmatprep.subr.bf16.mxu0 %v1557
        %1605 = vmatpush1.bf16.msra.mxu0 %v1556
        %1606 = vmatprep.subr.bf16.mxu0 %v1560
        %1607 = vmatpush1.bf16.msra.mxu0 %v1559
        %1608 = vmatprep.subr.bf16.mxu0 %v1563
        %1609 = vmatpush1.bf16.msra.mxu0 %v1562
        %1610 = vmatprep.subr.bf16.mxu0 %v1566
        %1611 = vmatpush1.bf16.msra.mxu0 %v1565
        %1612 = vmatprep.subr.bf16.mxu0 %v1569
        %1613 = vmatpush1.bf16.msra.mxu0 %v1568
        %1614 = vmatprep.subr.bf16.mxu0 %v1572
        %1615 = vmatpush1.bf16.msra.mxu0 %v1571
        %1616 = vmatprep.subr.bf16.mxu0 %v1575
        %1617 = vmatpush1.bf16.msra.mxu0 %v1574
        %1618 = vmatprep.subr.bf16.mxu0 %v1578
        %1619 = vmatpush1.bf16.msra.mxu0 %v1577
        %1620 = vmatprep.subr.bf16.mxu0 0
        %1621 = vmatpush1.bf16.msra.mxu0 0
        %1622 = vmatprep.subr.bf16.mxu0 0
        %1623 = vmatpush1.bf16.msra.mxu0 0
        %1624 = vmatprep.subr.bf16.mxu0 0
        %1625 = vmatpush1.bf16.msra.mxu0 0
        %1626 = vmatprep.subr.bf16.mxu0 0
        %1627 = vmatpush1.bf16.msra.mxu0 0
        %1628 = vmatprep.subr.bf16.mxu0 0
        %1629 = vmatpush1.bf16.msra.mxu0 0
        %1630 = vmatprep.subr.bf16.mxu0 0
        %1631 = vmatpush1.bf16.msra.mxu0 0
        %1632 = vmatprep.subr.bf16.mxu0 0
        %1633 = vmatpush1.bf16.msra.mxu0 0
        %1634 = vmatprep.subr.bf16.mxu0 0
        %1635 = vmatpush1.bf16.msra.mxu0 0
        %1636 = vmatprep.mubr.bf16.mxu0 0
        %1637 = vmatmul.mubr.bf16.gmra.mrb[0].mxu0 %v1426
        %v1638 = vpop.f32.mrb[0].mxu0
        %v1639 = vadd.f32 %v1464, %v1638
        %v1640 = vpop.f32.mrb[0].mxu0
        %v1641 = vadd.f32 %v1468, %v1640
        %v1642 = vpop.f32.mrb[0].mxu0
        %v1643 = vpop.f32.mrb[0].mxu0
        %1644 = vdwg.mxu0
        %1645 = vmatprep.subr.bf16.mxu0 0
        %1646 = vmatpush1.bf16.msra.mxu0 %v1558
        %1647 = vmatprep.subr.bf16.mxu0 0
        %1648 = vmatpush1.bf16.msra.mxu0 %v1561
        %1649 = vmatprep.subr.bf16.mxu0 0
        %1650 = vmatpush1.bf16.msra.mxu0 %v1564
        %1651 = vmatprep.subr.bf16.mxu0 0
        %1652 = vmatpush1.bf16.msra.mxu0 %v1567
        %1653 = vmatprep.subr.bf16.mxu0 0
        %1654 = vmatpush1.bf16.msra.mxu0 %v1570
        %1655 = vmatprep.subr.bf16.mxu0 0
        %1656 = vmatpush1.bf16.msra.mxu0 %v1573
        %1657 = vmatprep.subr.bf16.mxu0 0
        %1658 = vmatpush1.bf16.msra.mxu0 %v1576
        %1659 = vmatprep.subr.bf16.mxu0 0
        %1660 = vmatpush1.bf16.msra.mxu0 %v1579
        %1661 = vmatprep.subr.bf16.mxu0 0
        %1662 = vmatpush1.bf16.msra.mxu0 0
        %1663 = vmatprep.subr.bf16.mxu0 0
        %1664 = vmatpush1.bf16.msra.mxu0 0
        %1665 = vmatprep.subr.bf16.mxu0 0
        %1666 = vmatpush1.bf16.msra.mxu0 0
        %1667 = vmatprep.subr.bf16.mxu0 0
        %1668 = vmatpush1.bf16.msra.mxu0 0
        %1669 = vmatprep.subr.bf16.mxu0 0
        %1670 = vmatpush1.bf16.msra.mxu0 0
        %1671 = vmatprep.subr.bf16.mxu0 0
        %1672 = vmatpush1.bf16.msra.mxu0 0
        %1673 = vmatprep.subr.bf16.mxu0 0
        %1674 = vmatpush1.bf16.msra.mxu0 0
        %1675 = vmatprep.subr.bf16.mxu0 0
        %1676 = vmatpush1.bf16.msra.mxu0 0
        %1677 = vmatprep.mubr.bf16.mxu0 0
        %1678 = vmatmul.mubr.bf16.gmra.mrb[0].mxu0 %v1426
        %v1679 = vpop.f32.mrb[0].mxu0
        %v1680 = vadd.f32 %v1472, %v1679
        %v1681 = vpop.f32.mrb[0].mxu0
        %v1682 = vpop.f32.mrb[0].mxu0
        %v1683 = vpop.f32.mrb[0].mxu0
        %1684 = vdwg.mxu0
        %v1685 = vlaneseq
        %v1686 = vand.u32 %v1685, 127
        %v1687 = vld [vmem:[%s1040] sm:$0x1]
        %vm1688 = vcmp.ge.s32.totalorder %v1686, 0
        %vm1689 = vcmp.lt.s32.totalorder %v1686, 64
        %vm1690 = vmand %vm1688, %vm1689
        %v1691 = vsel %vm1690, 1, 0
        %v1692 = vcvt.s32.f32 %v1691
        %v1693 = vmul.f32 %v1639, %v1692
        %v1694 = vmul.f32 %v1680, %v1692
        %vm1695 = vcmp.ge.s32.totalorder %v1686, 64
        %vm1696 = vcmp.lt.s32.totalorder %v1686, 128
        %vm1697 = vmand %vm1695, %vm1696
        %v1698 = vsel %vm1697, 1, 0
        %v1699 = vcvt.s32.f32 %v1698
        %v1700 = vmul.f32 %v1639, %v1699
        %v1701 = vmul.f32 %v1680, %v1699
        %v1702 = vpack.c.bf16 %v1693, %v1693
        %v1703 = vpack.c.bf16 %v1700, %v1700
        %v1704 = vpack.c.bf16 %v1641, %v1641
        %v1705 = vpack.c.bf16 %v1694, %v1694
        %v1706 = vpack.c.bf16 %v1701, %v1701
        %v1708 = vlaneseq
        %v1709 = vshrl.u32 %v1708, 7
        %v1710 = vsub.s32 0, %v1709
        %v1711 = vrot.slane %v1687, %v1710
        %vm1713 = vcmask 1040384
        %v1714 = vsel %vm1713, %v1687, %v1711
        %v1717 = vunpack.c.l.s4 1966171168
        %v1718 = vunpack.c.0.s8 %v1717
        %v1719 = vlaneseq
        %v1720 = vshrl.u32 %v1719, 7
        %v1721 = vsub.s32 %v1718, %v1720
        %v1722 = vrot.slane %v1714, %v1721
        %v1723 = vcombine.high %v1722, %v1722
        %v1725 = vunpack.c.l.s4 1966171168
        %v1726 = vunpack.c.0.s8 %v1725
        %v1727 = vlaneseq
        %v1728 = vshrl.u32 %v1727, 7
        %v1729 = vsub.s32 %v1726, %v1728
        %v1730 = vrot.slane %v1722, %v1729
        %v1732 = vunpack.c.l.s4 1966171168
        %v1733 = vunpack.c.0.s8 %v1732
        %v1734 = vlaneseq
        %v1735 = vshrl.u32 %v1734, 7
        %v1736 = vsub.s32 %v1733, %v1735
        %v1737 = vrot.slane %v1723, %v1736
        %v1738 = vlaneseq
        %v1739 = vshrl.u32 %v1738, 7
        %v1740 = vsub.s32 0, %v1739
        %v1741 = vrot.slane %v1730, %v1740
        %v1742 = vlaneseq
        %v1743 = vshrl.u32 %v1742, 7
        %v1744 = vsub.s32 0, %v1743
        %v1745 = vrot.slane %v1737, %v1744
        %1748 = vmatprep.subr.bf16.mxu0 0
        %1749 = vmatpush1.bf16.xpose.msra.mxu0 %v1704
        %1750 = vmatprep.subr.bf16.mxu0 0
        %1751 = vmatpush1.bf16.xpose.msra.mxu0 0
        %1752 = vmatprep.subr.bf16.mxu0 0
        %1753 = vmatpush1.bf16.xpose.msra.mxu0 0
        %1754 = vmatprep.subr.bf16.mxu0 0
        %1755 = vmatpush1.bf16.xpose.msra.mxu0 0
        %1756 = vmatprep.subr.bf16.mxu0 0
        %1757 = vmatpush1.bf16.xpose.msra.mxu0 0
        %1758 = vmatprep.subr.bf16.mxu0 0
        %1759 = vmatpush1.bf16.xpose.msra.mxu0 0
        %1760 = vmatprep.subr.bf16.mxu0 0
        %1761 = vmatpush1.bf16.xpose.msra.mxu0 0
        %1762 = vmatprep.subr.bf16.mxu0 0
        %1763 = vmatpush1.bf16.xpose.msra.mxu0 0
        %1764 = vmatprep.subr.bf16.mxu0 0
        %1765 = vmatpush1.bf16.xpose.msra.mxu0 0
        %1766 = vmatprep.subr.bf16.mxu0 0
        %1767 = vmatpush1.bf16.xpose.msra.mxu0 0
        %1768 = vmatprep.subr.bf16.mxu0 0
        %1769 = vmatpush1.bf16.xpose.msra.mxu0 0
        %1770 = vmatprep.subr.bf16.mxu0 0
        %1771 = vmatpush1.bf16.xpose.msra.mxu0 0
        %1772 = vmatprep.subr.bf16.mxu0 0
        %1773 = vmatpush1.bf16.xpose.msra.mxu0 0
        %1774 = vmatprep.subr.bf16.mxu0 0
        %1775 = vmatpush1.bf16.xpose.msra.mxu0 0
        %1776 = vmatprep.subr.bf16.mxu0 0
        %1777 = vmatpush1.bf16.xpose.msra.mxu0 0
        %1778 = vmatprep.subr.bf16.mxu0 0
        %1779 = vmatpush1.bf16.xpose.msra.mxu0 0
        %1780 = vmatprep.mubr.bf16.mxu0 0
        %1781 = vmatmul.mubr.bf16.gmra.mrb[0].mxu0 %v1702
        %v1782 = vpop.f32.mrb[0].mxu0
        %v1783 = vadd.f32 %v1741, %v1782
        %v1784 = vpop.f32.mrb[0].mxu0
        %v1785 = vpop.f32.mrb[0].mxu0
        %v1786 = vpop.f32.mrb[0].mxu0
        %1787 = vdwg.mxu0
        %1788 = vmatprep.subr.bf16.mxu0 0
        %1789 = vmatpush1.bf16.xpose.msra.mxu0 %v1704
        %1790 = vmatprep.subr.bf16.mxu0 0
        %1791 = vmatpush1.bf16.xpose.msra.mxu0 0
        %1792 = vmatprep.subr.bf16.mxu0 0
        %1793 = vmatpush1.bf16.xpose.msra.mxu0 0
        %1794 = vmatprep.subr.bf16.mxu0 0
        %1795 = vmatpush1.bf16.xpose.msra.mxu0 0
        %1796 = vmatprep.subr.bf16.mxu0 0
        %1797 = vmatpush1.bf16.xpose.msra.mxu0 0
        %1798 = vmatprep.subr.bf16.mxu0 0
        %1799 = vmatpush1.bf16.xpose.msra.mxu0 0
        %1800 = vmatprep.subr.bf16.mxu0 0
        %1801 = vmatpush1.bf16.xpose.msra.mxu0 0
        %1802 = vmatprep.subr.bf16.mxu0 0
        %1803 = vmatpush1.bf16.xpose.msra.mxu0 0
        %1804 = vmatprep.subr.bf16.mxu0 0
        %1805 = vmatpush1.bf16.xpose.msra.mxu0 0
        %1806 = vmatprep.subr.bf16.mxu0 0
        %1807 = vmatpush1.bf16.xpose.msra.mxu0 0
        %1808 = vmatprep.subr.bf16.mxu0 0
        %1809 = vmatpush1.bf16.xpose.msra.mxu0 0
        %1810 = vmatprep.subr.bf16.mxu0 0
        %1811 = vmatpush1.bf16.xpose.msra.mxu0 0
        %1812 = vmatprep.subr.bf16.mxu0 0
        %1813 = vmatpush1.bf16.xpose.msra.mxu0 0
        %1814 = vmatprep.subr.bf16.mxu0 0
        %1815 = vmatpush1.bf16.xpose.msra.mxu0 0
        %1816 = vmatprep.subr.bf16.mxu0 0
        %1817 = vmatpush1.bf16.xpose.msra.mxu0 0
        %1818 = vmatprep.subr.bf16.mxu0 0
        %1819 = vmatpush1.bf16.xpose.msra.mxu0 0
        %1820 = vmatprep.mubr.bf16.mxu0 0
        %1821 = vmatmul.mubr.bf16.gmra.mrb[0].mxu0 %v1703
        %v1822 = vpop.f32.mrb[0].mxu0
        %v1823 = vadd.f32 %v1745, %v1822
        %v1824 = vpop.f32.mrb[0].mxu0
        %v1825 = vpop.f32.mrb[0].mxu0
        %v1826 = vpop.f32.mrb[0].mxu0
        %1827 = vdwg.mxu0
        %vm1828 = vcmask 64512
        %v1829 = vsel %vm1828, %v1783, -inf
        %1830 = vmax.xlane.f32.xlu0 %v1829
        %v1831 = vpop.xlane.xlu0 %1830
        %v1832 = vsel %vm1828, %v1823, -inf
        %1833 = vmax.xlane.f32.xlu0 %v1832
        %v1834 = vpop.xlane.xlu0 %1833
        %v1835 = vsub.f32 %v1783, %v1831
        %v1836 = vsub.f32 %v1823, %v1834
        %v1837 = vmul.f32 %v1835, 1.442695
        %v1838 = vpow.pop %v1837
        %v1839 = vmul.f32 %v1836, 1.442695
        %v1840 = vpow.pop %v1839
        %v1841 = vsel %vm1828, %v1838, 0.0
        %1842 = vadd.xlane.f32.xlu0 %v1841
        %v1843 = vpop.xlane.xlu0 %1842
        %v1844 = vsel %vm1828, %v1840, 0.0
        %1845 = vadd.xlane.f32.xlu0 %v1844
        %v1846 = vpop.xlane.xlu0 %1845
        %v1847 = vrcp.pop %v1843
        %v1848 = vrcp.pop %v1846
        %v1849 = vmul.f32 %v1838, %v1847
        %v1850 = vmul.f32 %v1840, %v1848
        %v1851 = vpack.c.bf16 %v1849, %v1849
        %v1852 = vpack.c.bf16 %v1850, %v1850
        %v1854 = vsel %vm1828, %v1851, 0
        %vm1856 = vcmask 1043456
        %v1858 = vsel %vm1856, %v1705, 0
        %1860 = vmatprep.subr.bf16.mxu0 0
        %1861 = vmatpush1.bf16.msra.mxu0 %v1858
        %1862 = vmatprep.subr.bf16.mxu0 0
        %1863 = vmatpush1.bf16.msra.mxu0 0
        %1864 = vmatprep.subr.bf16.mxu0 0
        %1865 = vmatpush1.bf16.msra.mxu0 0
        %1866 = vmatprep.subr.bf16.mxu0 0
        %1867 = vmatpush1.bf16.msra.mxu0 0
        %1868 = vmatprep.subr.bf16.mxu0 0
        %1869 = vmatpush1.bf16.msra.mxu0 0
        %1870 = vmatprep.subr.bf16.mxu0 0
        %1871 = vmatpush1.bf16.msra.mxu0 0
        %1872 = vmatprep.subr.bf16.mxu0 0
        %1873 = vmatpush1.bf16.msra.mxu0 0
        %1874 = vmatprep.subr.bf16.mxu0 0
        %1875 = vmatpush1.bf16.msra.mxu0 0
        %1876 = vmatprep.subr.bf16.mxu0 0
        %1877 = vmatpush1.bf16.msra.mxu0 0
        %1878 = vmatprep.subr.bf16.mxu0 0
        %1879 = vmatpush1.bf16.msra.mxu0 0
        %1880 = vmatprep.subr.bf16.mxu0 0
        %1881 = vmatpush1.bf16.msra.mxu0 0
        %1882 = vmatprep.subr.bf16.mxu0 0
        %1883 = vmatpush1.bf16.msra.mxu0 0
        %1884 = vmatprep.subr.bf16.mxu0 0
        %1885 = vmatpush1.bf16.msra.mxu0 0
        %1886 = vmatprep.subr.bf16.mxu0 0
        %1887 = vmatpush1.bf16.msra.mxu0 0
        %1888 = vmatprep.subr.bf16.mxu0 0
        %1889 = vmatpush1.bf16.msra.mxu0 0
        %1890 = vmatprep.subr.bf16.mxu0 0
        %1891 = vmatpush1.bf16.msra.mxu0 0
        %1892 = vmatprep.mubr.bf16.mxu0 0
        %1893 = vmatmul.mubr.bf16.gmra.mrb[0].mxu0 %v1854
        %v1894 = vpop.f32.mrb[0].mxu0
        %v1895 = vadd.f32 0.0, %v1894
        %v1896 = vpop.f32.mrb[0].mxu0
        %v1897 = vpop.f32.mrb[0].mxu0
        %v1898 = vpop.f32.mrb[0].mxu0
        %1899 = vdwg.mxu0
        %v1901 = vsel %vm1828, %v1852, 0
        %v1904 = vsel %vm1856, %v1706, 0
        %1906 = vmatprep.subr.bf16.mxu0 0
        %1907 = vmatpush1.bf16.msra.mxu0 %v1904
        %1908 = vmatprep.subr.bf16.mxu0 0
        %1909 = vmatpush1.bf16.msra.mxu0 0
        %1910 = vmatprep.subr.bf16.mxu0 0
        %1911 = vmatpush1.bf16.msra.mxu0 0
        %1912 = vmatprep.subr.bf16.mxu0 0
        %1913 = vmatpush1.bf16.msra.mxu0 0
        %1914 = vmatprep.subr.bf16.mxu0 0
        %1915 = vmatpush1.bf16.msra.mxu0 0
        %1916 = vmatprep.subr.bf16.mxu0 0
        %1917 = vmatpush1.bf16.msra.mxu0 0
        %1918 = vmatprep.subr.bf16.mxu0 0
        %1919 = vmatpush1.bf16.msra.mxu0 0
        %1920 = vmatprep.subr.bf16.mxu0 0
        %1921 = vmatpush1.bf16.msra.mxu0 0
        %1922 = vmatprep.subr.bf16.mxu0 0
        %1923 = vmatpush1.bf16.msra.mxu0 0
        %1924 = vmatprep.subr.bf16.mxu0 0
        %1925 = vmatpush1.bf16.msra.mxu0 0
        %1926 = vmatprep.subr.bf16.mxu0 0
        %1927 = vmatpush1.bf16.msra.mxu0 0
        %1928 = vmatprep.subr.bf16.mxu0 0
        %1929 = vmatpush1.bf16.msra.mxu0 0
        %1930 = vmatprep.subr.bf16.mxu0 0
        %1931 = vmatpush1.bf16.msra.mxu0 0
        %1932 = vmatprep.subr.bf16.mxu0 0
        %1933 = vmatpush1.bf16.msra.mxu0 0
        %1934 = vmatprep.subr.bf16.mxu0 0
        %1935 = vmatpush1.bf16.msra.mxu0 0
        %1936 = vmatprep.subr.bf16.mxu0 0
        %1937 = vmatpush1.bf16.msra.mxu0 0
        %1938 = vmatprep.mubr.bf16.mxu0 0
        %1939 = vmatmul.mubr.bf16.gmra.mrb[0].mxu0 %v1901
        %v1940 = vpop.f32.mrb[0].mxu0
        %v1941 = vadd.f32 0.0, %v1940
        %v1942 = vpop.f32.mrb[0].mxu0
        %v1943 = vpop.f32.mrb[0].mxu0
        %v1944 = vpop.f32.mrb[0].mxu0
        %1945 = vdwg.mxu0
        %v1946 = vadd.f32 %v1895, %v1941
        %v1947 = vpack.c.bf16 %v1946, %v1946
        %v1948 = vld [vmem:[%s886] sm:$0xf]
        %v1949 = vld [vmem:[%s886 + $0x4] sm:$0xf]
        %v1950 = vld [vmem:[%s886 + $0x8] sm:$0xf]
        %v1951 = vld [vmem:[%s886 + $0xc] sm:$0xf]
        %v1952 = vld [vmem:[%s886 + $0x10] sm:$0xf]
        %v1953 = vld [vmem:[%s886 + $0x14] sm:$0xf]
        %v1954 = vld [vmem:[%s886 + $0x18] sm:$0xf]
        %v1955 = vld [vmem:[%s886 + $0x1c] sm:$0xf]
        %v1956 = vld [vmem:[%s886 + $0x20] sm:$0xf]
        %v1957 = vld [vmem:[%s886 + $0x24] sm:$0xf]
        %v1958 = vld [vmem:[%s886 + $0x28] sm:$0xf]
        %v1959 = vld [vmem:[%s886 + $0x2c] sm:$0xf]
        %v1960 = vld [vmem:[%s886 + $0x30] sm:$0xf]
        %v1961 = vld [vmem:[%s886 + $0x34] sm:$0xf]
        %v1962 = vld [vmem:[%s886 + $0x38] sm:$0xf]
        %v1963 = vld [vmem:[%s886 + $0x3c] sm:$0xf]
        %v1964 = vld [vmem:[%s1047] sm:$0x1]
        %v1966 = vlaneseq
        %v1967 = vshrl.u32 %v1966, 7
        %v1968 = vsub.s32 0, %v1967
        %v1969 = vrot.slane %v1964, %v1968
        %v1987 = vunpack.c.l.b16 %v1948
        %v1988 = vunpack.c.l.b16 %v1949
        %v1989 = vunpack.c.l.b16 %v1950
        %v1990 = vunpack.c.l.b16 %v1951
        %v1991 = vunpack.c.l.b16 %v1952
        %v1992 = vunpack.c.l.b16 %v1953
        %v1993 = vunpack.c.l.b16 %v1954
        %v1994 = vunpack.c.l.b16 %v1955
        %v1995 = vunpack.c.l.b16 %v1956
        %v1996 = vunpack.c.l.b16 %v1957
        %v1997 = vunpack.c.l.b16 %v1958
        %v1998 = vunpack.c.l.b16 %v1959
        %v1999 = vunpack.c.l.b16 %v1960
        %v2000 = vunpack.c.l.b16 %v1961
        %v2001 = vunpack.c.l.b16 %v1962
        %v2002 = vunpack.c.l.b16 %v1963
        %v2003 = vpack.c.b16 %v1988, %v1987
        %v2004 = vpack.c.b16 %v1990, %v1989
        %v2005 = vpack.c.b16 %v1992, %v1991
        %v2006 = vpack.c.b16 %v1994, %v1993
        %v2007 = vpack.c.b16 %v1996, %v1995
        %v2008 = vpack.c.b16 %v1998, %v1997
        %v2009 = vpack.c.b16 %v2000, %v1999
        %v2010 = vpack.c.b16 %v2002, %v2001
        %2019 = vmatprep.subr.bf16.mxu0 0
        %2020 = vmatpush1.bf16.msra.mxu0 %v2003
        %2021 = vmatprep.subr.bf16.mxu0 0
        %2022 = vmatpush1.bf16.msra.mxu0 %v2004
        %2023 = vmatprep.subr.bf16.mxu0 0
        %2024 = vmatpush1.bf16.msra.mxu0 %v2005
        %2025 = vmatprep.subr.bf16.mxu0 0
        %2026 = vmatpush1.bf16.msra.mxu0 %v2006
        %2027 = vmatprep.subr.bf16.mxu0 0
        %2028 = vmatpush1.bf16.msra.mxu0 %v2007
        %2029 = vmatprep.subr.bf16.mxu0 0
        %2030 = vmatpush1.bf16.msra.mxu0 %v2008
        %2031 = vmatprep.subr.bf16.mxu0 0
        %2032 = vmatpush1.bf16.msra.mxu0 %v2009
        %2033 = vmatprep.subr.bf16.mxu0 0
        %2034 = vmatpush1.bf16.msra.mxu0 %v2010
        %2035 = vmatprep.subr.bf16.mxu0 0
        %2036 = vmatpush1.bf16.msra.mxu0 0
        %2037 = vmatprep.subr.bf16.mxu0 0
        %2038 = vmatpush1.bf16.msra.mxu0 0
        %2039 = vmatprep.subr.bf16.mxu0 0
        %2040 = vmatpush1.bf16.msra.mxu0 0
        %2041 = vmatprep.subr.bf16.mxu0 0
        %2042 = vmatpush1.bf16.msra.mxu0 0
        %2043 = vmatprep.subr.bf16.mxu0 0
        %2044 = vmatpush1.bf16.msra.mxu0 0
        %2045 = vmatprep.subr.bf16.mxu0 0
        %2046 = vmatpush1.bf16.msra.mxu0 0
        %2047 = vmatprep.subr.bf16.mxu0 0
        %2048 = vmatpush1.bf16.msra.mxu0 0
        %2049 = vmatprep.subr.bf16.mxu0 0
        %2050 = vmatpush1.bf16.msra.mxu0 0
        %2051 = vmatprep.mubr.bf16.mxu0 0
        %2052 = vmatmul.mubr.bf16.gmra.mrb[0].mxu0 %v1947
        %v2053 = vpop.f32.mrb[0].mxu0
        %v2054 = vadd.f32 %v1969, %v2053
        %v2055 = vpop.f32.mrb[0].mxu0
        %v2056 = vpop.f32.mrb[0].mxu0
        %v2057 = vpop.f32.mrb[0].mxu0
        %2058 = vdwg.mxu0
        %v2059 = vadd.f32 %v2054, %v1425
        %v2060 = vld [vmem:[%s1050] sm:$0x1]
        %v2061 = vld [vmem:[%s1053] sm:$0x1]
        %2062 = vadd.xlane.f32.xlu0 %v2059
        %v2063 = vpop.xlane.xlu0 %2062
        %v2064 = vrcp.pop 128.0
        %v2065 = vmul.f32 %v2063, %v2064
        %v2066 = vsub.f32 %v2059, %v2065
        %v2067 = vmul.f32 %v2066, %v2066
        %2068 = vadd.xlane.f32.xlu0 %v2067
        %v2069 = vpop.xlane.xlu0 %2068
        %v2070 = vmul.f32 %v2069, %v2064
        %v2071 = vadd.f32 %v2070, 1e-12
        %v2072 = vrsqrt.pop %v2071
        %v2073 = vmul.f32 %v2066, %v2072
        %v2075 = vlaneseq
        %v2076 = vshrl.u32 %v2075, 7
        %v2077 = vsub.s32 0, %v2076
        %v2078 = vrot.slane %v2060, %v2077
        %v2080 = vmul.f32 %v2073, %v2078
        %v2082 = vlaneseq
        %v2083 = vshrl.u32 %v2082, 7
        %v2084 = vsub.s32 0, %v2083
        %v2085 = vrot.slane %v2061, %v2084
        %v2087 = vadd.f32 %v2080, %v2085
        %v2088 = vpack.c.bf16 %v2087, %v2087
        %v2089 = vld [vmem:[%s895] sm:$0xff]
        %v2090 = vld [vmem:[%s895 + $0x8] sm:$0xff]
        %v2091 = vld [vmem:[%s895 + $0x10] sm:$0xff]
        %v2092 = vld [vmem:[%s895 + $0x18] sm:$0xff]
        %v2093 = vld [vmem:[%s895 + $0x20] sm:$0xff]
        %v2094 = vld [vmem:[%s895 + $0x28] sm:$0xff]
        %v2095 = vld [vmem:[%s895 + $0x30] sm:$0xff]
        %v2096 = vld [vmem:[%s895 + $0x38] sm:$0xff]
        %v2097 = vld [vmem:[%s895 + $0x40] sm:$0xff]
        %v2098 = vld [vmem:[%s895 + $0x48] sm:$0xff]
        %v2099 = vld [vmem:[%s895 + $0x50] sm:$0xff]
        %v2100 = vld [vmem:[%s895 + $0x58] sm:$0xff]
        %v2101 = vld [vmem:[%s895 + $0x60] sm:$0xff]
        %v2102 = vld [vmem:[%s895 + $0x68] sm:$0xff]
        %v2103 = vld [vmem:[%s895 + $0x70] sm:$0xff]
        %v2104 = vld [vmem:[%s895 + $0x78] sm:$0xff]
        %v2105 = vld [vmem:[%s1057] sm:$0x3]
        %v2107 = vlaneseq
        %v2108 = vshrl.u32 %v2107, 7
        %v2109 = vsub.s32 0, %v2108
        %v2110 = vrot.slane %v2105, %v2109
        %v2111 = vlaneseq
        %v2112 = vshrl.u32 %v2111, 7
        %v2113 = vsub.s32 1, %v2112
        %v2114 = vrot.slane %v2105, %v2113
        %v2133 = vunpack.c.l.b16 %v2089
        %v2134 = vunpack.c.h.b16 %v2089
        %v2135 = vunpack.c.l.b16 %v2090
        %v2136 = vunpack.c.h.b16 %v2090
        %v2137 = vunpack.c.l.b16 %v2091
        %v2138 = vunpack.c.h.b16 %v2091
        %v2139 = vunpack.c.l.b16 %v2092
        %v2140 = vunpack.c.h.b16 %v2092
        %v2141 = vunpack.c.l.b16 %v2093
        %v2142 = vunpack.c.h.b16 %v2093
        %v2143 = vunpack.c.l.b16 %v2094
        %v2144 = vunpack.c.h.b16 %v2094
        %v2145 = vunpack.c.l.b16 %v2095
        %v2146 = vunpack.c.h.b16 %v2095
        %v2147 = vunpack.c.l.b16 %v2096
        %v2148 = vunpack.c.h.b16 %v2096
        %v2149 = vunpack.c.l.b16 %v2097
        %v2150 = vunpack.c.h.b16 %v2097
        %v2151 = vunpack.c.l.b16 %v2098
        %v2152 = vunpack.c.h.b16 %v2098
        %v2153 = vunpack.c.l.b16 %v2099
        %v2154 = vunpack.c.h.b16 %v2099
        %v2155 = vunpack.c.l.b16 %v2100
        %v2156 = vunpack.c.h.b16 %v2100
        %v2157 = vunpack.c.l.b16 %v2101
        %v2158 = vunpack.c.h.b16 %v2101
        %v2159 = vunpack.c.l.b16 %v2102
        %v2160 = vunpack.c.h.b16 %v2102
        %v2161 = vunpack.c.l.b16 %v2103
        %v2162 = vunpack.c.h.b16 %v2103
        %v2163 = vunpack.c.l.b16 %v2104
        %v2164 = vunpack.c.h.b16 %v2104
        %v2165 = vpack.c.b16 %v2135, %v2133
        %v2166 = vpack.c.b16 %v2136, %v2134
        %v2167 = vpack.c.b16 %v2139, %v2137
        %v2168 = vpack.c.b16 %v2140, %v2138
        %v2169 = vpack.c.b16 %v2143, %v2141
        %v2170 = vpack.c.b16 %v2144, %v2142
        %v2171 = vpack.c.b16 %v2147, %v2145
        %v2172 = vpack.c.b16 %v2148, %v2146
        %v2173 = vpack.c.b16 %v2151, %v2149
        %v2174 = vpack.c.b16 %v2152, %v2150
        %v2175 = vpack.c.b16 %v2155, %v2153
        %v2176 = vpack.c.b16 %v2156, %v2154
        %v2177 = vpack.c.b16 %v2159, %v2157
        %v2178 = vpack.c.b16 %v2160, %v2158
        %v2179 = vpack.c.b16 %v2163, %v2161
        %v2180 = vpack.c.b16 %v2164, %v2162
        %2197 = vmatprep.subr.bf16.mxu0 %v2166
        %2198 = vmatpush1.bf16.msra.mxu0 %v2165
        %2199 = vmatprep.subr.bf16.mxu0 %v2168
        %2200 = vmatpush1.bf16.msra.mxu0 %v2167
        %2201 = vmatprep.subr.bf16.mxu0 %v2170
        %2202 = vmatpush1.bf16.msra.mxu0 %v2169
        %2203 = vmatprep.subr.bf16.mxu0 %v2172
        %2204 = vmatpush1.bf16.msra.mxu0 %v2171
        %2205 = vmatprep.subr.bf16.mxu0 %v2174
        %2206 = vmatpush1.bf16.msra.mxu0 %v2173
        %2207 = vmatprep.subr.bf16.mxu0 %v2176
        %2208 = vmatpush1.bf16.msra.mxu0 %v2175
        %2209 = vmatprep.subr.bf16.mxu0 %v2178
        %2210 = vmatpush1.bf16.msra.mxu0 %v2177
        %2211 = vmatprep.subr.bf16.mxu0 %v2180
        %2212 = vmatpush1.bf16.msra.mxu0 %v2179
        %2213 = vmatprep.subr.bf16.mxu0 0
        %2214 = vmatpush1.bf16.msra.mxu0 0
        %2215 = vmatprep.subr.bf16.mxu0 0
        %2216 = vmatpush1.bf16.msra.mxu0 0
        %2217 = vmatprep.subr.bf16.mxu0 0
        %2218 = vmatpush1.bf16.msra.mxu0 0
        %2219 = vmatprep.subr.bf16.mxu0 0
        %2220 = vmatpush1.bf16.msra.mxu0 0
        %2221 = vmatprep.subr.bf16.mxu0 0
        %2222 = vmatpush1.bf16.msra.mxu0 0
        %2223 = vmatprep.subr.bf16.mxu0 0
        %2224 = vmatpush1.bf16.msra.mxu0 0
        %2225 = vmatprep.subr.bf16.mxu0 0
        %2226 = vmatpush1.bf16.msra.mxu0 0
        %2227 = vmatprep.subr.bf16.mxu0 0
        %2228 = vmatpush1.bf16.msra.mxu0 0
        %2229 = vmatprep.mubr.bf16.mxu0 0
        %2230 = vmatmul.mubr.bf16.gmra.mrb[0].mxu0 %v2088
        %v2231 = vpop.f32.mrb[0].mxu0
        %v2232 = vadd.f32 %v2110, %v2231
        %v2233 = vpop.f32.mrb[0].mxu0
        %v2234 = vadd.f32 %v2114, %v2233
        %v2235 = vpop.f32.mrb[0].mxu0
        %v2236 = vpop.f32.mrb[0].mxu0
        %2237 = vdwg.mxu0
        %v2238 = vmul.f32 %v2232, %v2232
        %v2239 = vmul.f32 %v2234, %v2234
        %v2240 = vmul.f32 %v2232, %v2238
        %v2241 = vmul.f32 %v2234, %v2239
        %v2242 = vmul.f32 %v2240, 0.044715
        %v2243 = vmul.f32 %v2241, 0.044715
        %v2244 = vadd.f32 %v2232, %v2242
        %v2245 = vadd.f32 %v2234, %v2243
        %v2246 = vmul.f32 %v2244, 0.7978846
        %v2247 = vmul.f32 %v2245, 0.7978846
        %v2248 = vtanh.pop %v2246
        %v2249 = vtanh.pop %v2247
        %v2250 = vadd.f32 %v2248, 1.0
        %v2251 = vadd.f32 %v2249, 1.0
        %v2252 = vmul.f32 %v2250, 0.5
        %v2253 = vmul.f32 %v2251, 0.5
        %v2254 = vmul.f32 %v2232, %v2252
        %v2255 = vmul.f32 %v2234, %v2253
        %v2256 = vpack.c.bf16 %v2254, %v2254
        %v2257 = vpack.c.bf16 %v2255, %v2255
        %v2258 = vld [vmem:[%s904] sm:$0xf]
        %v2259 = vld [vmem:[%s904 + $0x4] sm:$0xf]
        %v2260 = vld [vmem:[%s904 + $0x8] sm:$0xf]
        %v2261 = vld [vmem:[%s904 + $0xc] sm:$0xf]
        %v2262 = vld [vmem:[%s904 + $0x10] sm:$0xf]
        %v2263 = vld [vmem:[%s904 + $0x14] sm:$0xf]
        %v2264 = vld [vmem:[%s904 + $0x18] sm:$0xf]
        %v2265 = vld [vmem:[%s904 + $0x1c] sm:$0xf]
        %v2266 = vld [vmem:[%s904 + $0x20] sm:$0xf]
        %v2267 = vld [vmem:[%s904 + $0x24] sm:$0xf]
        %v2268 = vld [vmem:[%s904 + $0x28] sm:$0xf]
        %v2269 = vld [vmem:[%s904 + $0x2c] sm:$0xf]
        %v2270 = vld [vmem:[%s904 + $0x30] sm:$0xf]
        %v2271 = vld [vmem:[%s904 + $0x34] sm:$0xf]
        %v2272 = vld [vmem:[%s904 + $0x38] sm:$0xf]
        %v2273 = vld [vmem:[%s904 + $0x3c] sm:$0xf]
        %v2274 = vld [vmem:[%s904 + $0x40] sm:$0xf]
        %v2275 = vld [vmem:[%s904 + $0x44] sm:$0xf]
        %v2276 = vld [vmem:[%s904 + $0x48] sm:$0xf]
        %v2277 = vld [vmem:[%s904 + $0x4c] sm:$0xf]
        %v2278 = vld [vmem:[%s904 + $0x50] sm:$0xf]
        %v2279 = vld [vmem:[%s904 + $0x54] sm:$0xf]
        %v2280 = vld [vmem:[%s904 + $0x58] sm:$0xf]
        %v2281 = vld [vmem:[%s904 + $0x5c] sm:$0xf]
        %v2282 = vld [vmem:[%s904 + $0x60] sm:$0xf]
        %v2283 = vld [vmem:[%s904 + $0x64] sm:$0xf]
        %v2284 = vld [vmem:[%s904 + $0x68] sm:$0xf]
        %v2285 = vld [vmem:[%s904 + $0x6c] sm:$0xf]
        %v2286 = vld [vmem:[%s904 + $0x70] sm:$0xf]
        %v2287 = vld [vmem:[%s904 + $0x74] sm:$0xf]
        %v2288 = vld [vmem:[%s904 + $0x78] sm:$0xf]
        %v2289 = vld [vmem:[%s904 + $0x7c] sm:$0xf]
        %v2290 = vld [vmem:[%s1060] sm:$0x1]
        %v2292 = vlaneseq
        %v2293 = vshrl.u32 %v2292, 7
        %v2294 = vsub.s32 0, %v2293
        %v2295 = vrot.slane %v2290, %v2294
        %v2329 = vunpack.c.l.b16 %v2258
        %v2330 = vunpack.c.l.b16 %v2259
        %v2331 = vunpack.c.l.b16 %v2260
        %v2332 = vunpack.c.l.b16 %v2261
        %v2333 = vunpack.c.l.b16 %v2262
        %v2334 = vunpack.c.l.b16 %v2263
        %v2335 = vunpack.c.l.b16 %v2264
        %v2336 = vunpack.c.l.b16 %v2265
        %v2337 = vunpack.c.l.b16 %v2266
        %v2338 = vunpack.c.l.b16 %v2267
        %v2339 = vunpack.c.l.b16 %v2268
        %v2340 = vunpack.c.l.b16 %v2269
        %v2341 = vunpack.c.l.b16 %v2270
        %v2342 = vunpack.c.l.b16 %v2271
        %v2343 = vunpack.c.l.b16 %v2272
        %v2344 = vunpack.c.l.b16 %v2273
        %v2345 = vunpack.c.l.b16 %v2274
        %v2346 = vunpack.c.l.b16 %v2275
        %v2347 = vunpack.c.l.b16 %v2276
        %v2348 = vunpack.c.l.b16 %v2277
        %v2349 = vunpack.c.l.b16 %v2278
        %v2350 = vunpack.c.l.b16 %v2279
        %v2351 = vunpack.c.l.b16 %v2280
        %v2352 = vunpack.c.l.b16 %v2281
        %v2353 = vunpack.c.l.b16 %v2282
        %v2354 = vunpack.c.l.b16 %v2283
        %v2355 = vunpack.c.l.b16 %v2284
        %v2356 = vunpack.c.l.b16 %v2285
        %v2357 = vunpack.c.l.b16 %v2286
        %v2358 = vunpack.c.l.b16 %v2287
        %v2359 = vunpack.c.l.b16 %v2288
        %v2360 = vunpack.c.l.b16 %v2289
        %v2361 = vpack.c.b16 %v2330, %v2329
        %v2362 = vpack.c.b16 %v2332, %v2331
        %v2363 = vpack.c.b16 %v2334, %v2333
        %v2364 = vpack.c.b16 %v2336, %v2335
        %v2365 = vpack.c.b16 %v2338, %v2337
        %v2366 = vpack.c.b16 %v2340, %v2339
        %v2367 = vpack.c.b16 %v2342, %v2341
        %v2368 = vpack.c.b16 %v2344, %v2343
        %v2369 = vpack.c.b16 %v2346, %v2345
        %v2370 = vpack.c.b16 %v2348, %v2347
        %v2371 = vpack.c.b16 %v2350, %v2349
        %v2372 = vpack.c.b16 %v2352, %v2351
        %v2373 = vpack.c.b16 %v2354, %v2353
        %v2374 = vpack.c.b16 %v2356, %v2355
        %v2375 = vpack.c.b16 %v2358, %v2357
        %v2376 = vpack.c.b16 %v2360, %v2359
        %2393 = vmatprep.subr.bf16.mxu0 0
        %2394 = vmatpush1.bf16.msra.mxu0 %v2361
        %2395 = vmatprep.subr.bf16.mxu0 0
        %2396 = vmatpush1.bf16.msra.mxu0 %v2362
        %2397 = vmatprep.subr.bf16.mxu0 0
        %2398 = vmatpush1.bf16.msra.mxu0 %v2363
        %2399 = vmatprep.subr.bf16.mxu0 0
        %2400 = vmatpush1.bf16.msra.mxu0 %v2364
        %2401 = vmatprep.subr.bf16.mxu0 0
        %2402 = vmatpush1.bf16.msra.mxu0 %v2365
        %2403 = vmatprep.subr.bf16.mxu0 0
        %2404 = vmatpush1.bf16.msra.mxu0 %v2366
        %2405 = vmatprep.subr.bf16.mxu0 0
        %2406 = vmatpush1.bf16.msra.mxu0 %v2367
        %2407 = vmatprep.subr.bf16.mxu0 0
        %2408 = vmatpush1.bf16.msra.mxu0 %v2368
        %2409 = vmatprep.subr.bf16.mxu0 0
        %2410 = vmatpush1.bf16.msra.mxu0 %v2369
        %2411 = vmatprep.subr.bf16.mxu0 0
        %2412 = vmatpush1.bf16.msra.mxu0 %v2370
        %2413 = vmatprep.subr.bf16.mxu0 0
        %2414 = vmatpush1.bf16.msra.mxu0 %v2371
        %2415 = vmatprep.subr.bf16.mxu0 0
        %2416 = vmatpush1.bf16.msra.mxu0 %v2372
        %2417 = vmatprep.subr.bf16.mxu0 0
        %2418 = vmatpush1.bf16.msra.mxu0 %v2373
        %2419 = vmatprep.subr.bf16.mxu0 0
        %2420 = vmatpush1.bf16.msra.mxu0 %v2374
        %2421 = vmatprep.subr.bf16.mxu0 0
        %2422 = vmatpush1.bf16.msra.mxu0 %v2375
        %2423 = vmatprep.subr.bf16.mxu0 0
        %2424 = vmatpush1.bf16.msra.mxu0 %v2376
        %2425 = vmatprep.mubr.bf16.mxu0 %v2257
        %2426 = vmatmul.mubr.bf16.gmra.mrb[0].mxu0 %v2256
        %v2427 = vpop.f32.mrb[0].mxu0
        %v2428 = vadd.f32 %v2295, %v2427
        %v2429 = vpop.f32.mrb[0].mxu0
        %v2430 = vpop.f32.mrb[0].mxu0
        %v2431 = vpop.f32.mrb[0].mxu0
        %2432 = vdwg.mxu0
        %v2433 = vadd.f32 %v2428, %v2087
        %v2434 = vld [vmem:[%s1063] sm:$0x1]
        %v2435 = vld [vmem:[%s1066] sm:$0x1]
        %2436 = vadd.xlane.f32.xlu0 %v2433
        %v2437 = vpop.xlane.xlu0 %2436
        %v2438 = vmul.f32 %v2437, %v2064
        %v2439 = vsub.f32 %v2433, %v2438
        %v2440 = vmul.f32 %v2439, %v2439
        %2441 = vadd.xlane.f32.xlu0 %v2440
        %v2442 = vpop.xlane.xlu0 %2441
        %v2443 = vmul.f32 %v2442, %v2064
        %v2444 = vadd.f32 %v2443, 1e-12
        %v2445 = vrsqrt.pop %v2444
        %v2446 = vmul.f32 %v2439, %v2445
        %v2448 = vlaneseq
        %v2449 = vshrl.u32 %v2448, 7
        %v2450 = vsub.s32 0, %v2449
        %v2451 = vrot.slane %v2434, %v2450
        %v2453 = vmul.f32 %v2446, %v2451
        %v2455 = vlaneseq
        %v2456 = vshrl.u32 %v2455, 7
        %v2457 = vsub.s32 0, %v2456
        %v2458 = vrot.slane %v2435, %v2457
        %v2460 = vadd.f32 %v2453, %v2458
        %2461 = vst [vmem:[#allocation2] sm:$0xff] %v2460
        %p2462 = scmp.eq.s32.totalorder %s50, 1
        // Predicated region
        $region141: #{classification_forward.1} parent=111 // pred_check
          %p2463 = pneg %p2462
        $region142: #{classification_forward.1} parent=111 // pred_check_branch
          %2465 = sbr.rel (%p2463) target = $region144
        $region143: #{classification_forward.1} parent=111 // pred_region
          %v2466 = vpack.c.bf16 %v2460, %v2460
          %v2467 = vld [vmem:[%s19] sm:$0xf]
          %v2468 = vld [vmem:[%s19 + $0x4] sm:$0xf]
          %v2469 = vld [vmem:[%s19 + $0x8] sm:$0xf]
          %v2470 = vld [vmem:[%s19 + $0xc] sm:$0xf]
          %v2471 = vld [vmem:[%s19 + $0x10] sm:$0xf]
          %v2472 = vld [vmem:[%s19 + $0x14] sm:$0xf]
          %v2473 = vld [vmem:[%s19 + $0x18] sm:$0xf]
          %v2474 = vld [vmem:[%s19 + $0x1c] sm:$0xf]
          %v2475 = vld [vmem:[%s19 + $0x20] sm:$0xf]
          %v2476 = vld [vmem:[%s19 + $0x24] sm:$0xf]
          %v2477 = vld [vmem:[%s19 + $0x28] sm:$0xf]
          %v2478 = vld [vmem:[%s19 + $0x2c] sm:$0xf]
          %v2479 = vld [vmem:[%s19 + $0x30] sm:$0xf]
          %v2480 = vld [vmem:[%s19 + $0x34] sm:$0xf]
          %v2481 = vld [vmem:[%s19 + $0x38] sm:$0xf]
          %v2482 = vld [vmem:[%s19 + $0x3c] sm:$0xf]
          %v2483 = vld [vmem:[%s20] sm:$0x1]
          %v2500 = vunpack.c.l.b16 %v2467
          %v2501 = vunpack.c.l.b16 %v2468
          %v2502 = vunpack.c.l.b16 %v2469
          %v2503 = vunpack.c.l.b16 %v2470
          %v2504 = vunpack.c.l.b16 %v2471
          %v2505 = vunpack.c.l.b16 %v2472
          %v2506 = vunpack.c.l.b16 %v2473
          %v2507 = vunpack.c.l.b16 %v2474
          %v2508 = vunpack.c.l.b16 %v2475
          %v2509 = vunpack.c.l.b16 %v2476
          %v2510 = vunpack.c.l.b16 %v2477
          %v2511 = vunpack.c.l.b16 %v2478
          %v2512 = vunpack.c.l.b16 %v2479
          %v2513 = vunpack.c.l.b16 %v2480
          %v2514 = vunpack.c.l.b16 %v2481
          %v2515 = vunpack.c.l.b16 %v2482
          %v2516 = vpack.c.b16 %v2501, %v2500
          %v2517 = vpack.c.b16 %v2503, %v2502
          %v2518 = vpack.c.b16 %v2505, %v2504
          %v2519 = vpack.c.b16 %v2507, %v2506
          %v2520 = vpack.c.b16 %v2509, %v2508
          %v2521 = vpack.c.b16 %v2511, %v2510
          %v2522 = vpack.c.b16 %v2513, %v2512
          %v2523 = vpack.c.b16 %v2515, %v2514
          %2532 = vmatprep.subr.bf16.mxu0 0
          %2533 = vmatpush1.bf16.msra.mxu0 %v2516
          %2534 = vmatprep.subr.bf16.mxu0 0
          %2535 = vmatpush1.bf16.msra.mxu0 %v2517
          %2536 = vmatprep.subr.bf16.mxu0 0
          %2537 = vmatpush1.bf16.msra.mxu0 %v2518
          %2538 = vmatprep.subr.bf16.mxu0 0
          %2539 = vmatpush1.bf16.msra.mxu0 %v2519
          %2540 = vmatprep.subr.bf16.mxu0 0
          %2541 = vmatpush1.bf16.msra.mxu0 %v2520
          %2542 = vmatprep.subr.bf16.mxu0 0
          %2543 = vmatpush1.bf16.msra.mxu0 %v2521
          %2544 = vmatprep.subr.bf16.mxu0 0
          %2545 = vmatpush1.bf16.msra.mxu0 %v2522
          %2546 = vmatprep.subr.bf16.mxu0 0
          %2547 = vmatpush1.bf16.msra.mxu0 %v2523
          %2548 = vmatprep.subr.bf16.mxu0 0
          %2549 = vmatpush1.bf16.msra.mxu0 0
          %2550 = vmatprep.subr.bf16.mxu0 0
          %2551 = vmatpush1.bf16.msra.mxu0 0
          %2552 = vmatprep.subr.bf16.mxu0 0
          %2553 = vmatpush1.bf16.msra.mxu0 0
          %2554 = vmatprep.subr.bf16.mxu0 0
          %2555 = vmatpush1.bf16.msra.mxu0 0
          %2556 = vmatprep.subr.bf16.mxu0 0
          %2557 = vmatpush1.bf16.msra.mxu0 0
          %2558 = vmatprep.subr.bf16.mxu0 0
          %2559 = vmatpush1.bf16.msra.mxu0 0
          %2560 = vmatprep.subr.bf16.mxu0 0
          %2561 = vmatpush1.bf16.msra.mxu0 0
          %2562 = vmatprep.subr.bf16.mxu0 0
          %2563 = vmatpush1.bf16.msra.mxu0 0
          %2564 = vmatprep.mubr.bf16.mxu0 0
          %2565 = vmatmul.mubr.bf16.gmra.mrb[0].mxu0 %v2466
          %v2566 = vpop.f32.mrb[0].mxu0
          %v2567 = vadd.f32 %v2483, %v2566
          %v2568 = vpop.f32.mrb[0].mxu0
          %v2569 = vpop.f32.mrb[0].mxu0
          %v2570 = vpop.f32.mrb[0].mxu0
          %2571 = vdwg.mxu0
          %v2572 = vtanh.pop %v2567
          %v2573 = vpack.c.bf16 %v2572, %v2572
          %v2574 = vld [vmem:[#allocation12] sm:$0xf]
          %v2575 = vld [vmem:[#allocation12 + $0x4] sm:$0xf]
          %v2576 = vld [vmem:[#allocation12 + $0x8] sm:$0xf]
          %v2577 = vld [vmem:[#allocation12 + $0xc] sm:$0xf]
          %v2578 = vld [vmem:[#allocation12 + $0x10] sm:$0xf]
          %v2579 = vld [vmem:[#allocation12 + $0x14] sm:$0xf]
          %v2580 = vld [vmem:[#allocation12 + $0x18] sm:$0xf]
          %v2581 = vld [vmem:[#allocation12 + $0x1c] sm:$0xf]
          %v2582 = vld [vmem:[#allocation12 + $0x20] sm:$0xf]
          %v2583 = vld [vmem:[#allocation12 + $0x24] sm:$0xf]
          %v2584 = vld [vmem:[#allocation12 + $0x28] sm:$0xf]
          %v2585 = vld [vmem:[#allocation12 + $0x2c] sm:$0xf]
          %v2586 = vld [vmem:[#allocation12 + $0x30] sm:$0xf]
          %v2587 = vld [vmem:[#allocation12 + $0x34] sm:$0xf]
          %v2588 = vld [vmem:[#allocation12 + $0x38] sm:$0xf]
          %v2589 = vld [vmem:[#allocation12 + $0x3c] sm:$0xf]
          %v2590 = vld [vmem:[%s22] sm:$0x1]
          %v2607 = vunpack.c.l.b16 %v2574
          %v2608 = vunpack.c.l.b16 %v2575
          %v2609 = vunpack.c.l.b16 %v2576
          %v2610 = vunpack.c.l.b16 %v2577
          %v2611 = vunpack.c.l.b16 %v2578
          %v2612 = vunpack.c.l.b16 %v2579
          %v2613 = vunpack.c.l.b16 %v2580
          %v2614 = vunpack.c.l.b16 %v2581
          %v2615 = vunpack.c.l.b16 %v2582
          %v2616 = vunpack.c.l.b16 %v2583
          %v2617 = vunpack.c.l.b16 %v2584
          %v2618 = vunpack.c.l.b16 %v2585
          %v2619 = vunpack.c.l.b16 %v2586
          %v2620 = vunpack.c.l.b16 %v2587
          %v2621 = vunpack.c.l.b16 %v2588
          %v2622 = vunpack.c.l.b16 %v2589
          %v2623 = vpack.c.b16 %v2608, %v2607
          %v2624 = vpack.c.b16 %v2610, %v2609
          %v2625 = vpack.c.b16 %v2612, %v2611
          %v2626 = vpack.c.b16 %v2614, %v2613
          %v2627 = vpack.c.b16 %v2616, %v2615
          %v2628 = vpack.c.b16 %v2618, %v2617
          %v2629 = vpack.c.b16 %v2620, %v2619
          %v2630 = vpack.c.b16 %v2622, %v2621
          %2639 = vmatprep.subr.bf16.mxu0 0
          %2640 = vmatpush1.bf16.msra.mxu0 %v2623
          %2641 = vmatprep.subr.bf16.mxu0 0
          %2642 = vmatpush1.bf16.msra.mxu0 %v2624
          %2643 = vmatprep.subr.bf16.mxu0 0
          %2644 = vmatpush1.bf16.msra.mxu0 %v2625
          %2645 = vmatprep.subr.bf16.mxu0 0
          %2646 = vmatpush1.bf16.msra.mxu0 %v2626
          %2647 = vmatprep.subr.bf16.mxu0 0
          %2648 = vmatpush1.bf16.msra.mxu0 %v2627
          %2649 = vmatprep.subr.bf16.mxu0 0
          %2650 = vmatpush1.bf16.msra.mxu0 %v2628
          %2651 = vmatprep.subr.bf16.mxu0 0
          %2652 = vmatpush1.bf16.msra.mxu0 %v2629
          %2653 = vmatprep.subr.bf16.mxu0 0
          %2654 = vmatpush1.bf16.msra.mxu0 %v2630
          %2655 = vmatprep.subr.bf16.mxu0 0
          %2656 = vmatpush1.bf16.msra.mxu0 0
          %2657 = vmatprep.subr.bf16.mxu0 0
          %2658 = vmatpush1.bf16.msra.mxu0 0
          %2659 = vmatprep.subr.bf16.mxu0 0
          %2660 = vmatpush1.bf16.msra.mxu0 0
          %2661 = vmatprep.subr.bf16.mxu0 0
          %2662 = vmatpush1.bf16.msra.mxu0 0
          %2663 = vmatprep.subr.bf16.mxu0 0
          %2664 = vmatpush1.bf16.msra.mxu0 0
          %2665 = vmatprep.subr.bf16.mxu0 0
          %2666 = vmatpush1.bf16.msra.mxu0 0
          %2667 = vmatprep.subr.bf16.mxu0 0
          %2668 = vmatpush1.bf16.msra.mxu0 0
          %2669 = vmatprep.subr.bf16.mxu0 0
          %2670 = vmatpush1.bf16.msra.mxu0 0
          %2671 = vmatprep.mubr.bf16.mxu0 0
          %2672 = vmatmul.mubr.bf16.gmra.mrb[0].mxu0 %v2573
          %v2673 = vpop.f32.mrb[0].mxu0
          %v2674 = vadd.f32 %v2590, %v2673
          %v2675 = vpop.f32.mrb[0].mxu0
          %v2676 = vpop.f32.mrb[0].mxu0
          %v2677 = vpop.f32.mrb[0].mxu0
          %2678 = vdwg.mxu0
          %2679 = vst [vmem:[%s1025] sm:$0x1] %v2674
        $region144: #{classification_forward.1} parent=111 // pred_fallthru
          _
        %s2680 = sand.u32 %s628, 1
        %s2681 = scalar_lea.sflag [#allocation5], %s2680
        %s2682 = sand.u32 %s628, 1
        %s2683 = scalar_lea.vmem [#allocation14], %s2682
        // Predicated region
        $region145: #{classification_forward.1} parent=111 // pred_check
          %p2684 = pneg %p638
        $region146: #{classification_forward.1} parent=111 // pred_check_branch
          %2686 = sbr.rel (%p2684) target = $region148
        $region147: #{classification_forward.1} parent=111 // pred_region
          %s2688 = ssub.s32 16, 16
          %2689 = vsyncadd %s2681, %s2688
          %s2690 = smul.addr %s49, 16
          %s2691 = scalar_lea.hbm %s23, %s2690
          %s2693 = sshll.u32 %s2683, 4
          %s2694 = int_to_ptr.vmem [resolvable:$true] %s2693
          %2696 = dma.vmem_to_hbm [thread:$0]  %s2694, 16, %s2691, %s2681
        $region148: #{classification_forward.1} parent=111 // pred_fallthru
          _
      $region112: #{classification_forward.1} parent=5 // pred_fallthru
        _
      %p2697 = scmp.le.s32.totalorder 2, %s40
      // Predicated region
      $region149: #{classification_forward.1} parent=5 // pred_check
        %p2698 = pneg %p2697
      $region150: #{classification_forward.1} parent=5 // pred_check_branch
        %2700 = sbr.rel (%p2698) target = $region152
      $region151: #{classification_forward.1} parent=5 // pred_region
        %s2701 = ssub.s32 %s40, 2
        // Predicated region
        $region153: #{classification_forward.1} parent=151 // pred_check
          %p2702 = pneg %p644
        $region154: #{classification_forward.1} parent=151 // pred_check_branch
          %2704 = sbr.rel (%p2702) target = $region156
        $region155: #{classification_forward.1} parent=151 // pred_region
          %s2705 = sand.u32 %s629, 1
          %s2706 = scalar_lea.sflag [#allocation5], %s2705
          %s2707 = sand.u32 %s629, 1
          %s2708 = scalar_lea.vmem [#allocation14], %s2707
          %2709 = dma.done %s2706, 16
        $region156: #{classification_forward.1} parent=151 // pred_fallthru
          _
      $region152: #{classification_forward.1} parent=5 // pred_fallthru
        _
    $region6: #{classification_forward.1} parent=1 // loop_footer
      %s44 = sadd.s32 1, %s40
    $region7: #{classification_forward.1} parent=1 // loop_footer_branch
      %39 = sbr.rel target = $region3
    $region8: #{classification_forward.1} parent=1 // loop_exit
      _
    %2710 = vsyncpa [#allocation4], 1
    %s2711 = scalar_lea.sflag [#allocation4], 1
    %2712 = vsyncpa %s2711, 1
    %2713 = vsyncpa [#allocation7], 1
    %s2714 = scalar_lea.sflag [#allocation7], 1
    %2715 = vsyncpa %s2714, 1
    %2716 = vsyncpa [#allocation10], 1
    %s2717 = scalar_lea.sflag [#allocation10], 1
    %2718 = vsyncpa %s2717, 1
    %2719 = vsyncpa [#allocation13], 1
    %2720 = vsyncpa [#allocation5], 1
    %s2721 = scalar_lea.sflag [#allocation5], 1
    %2722 = vsyncpa %s2721, 1

</llo_original>
